<compile_context>
chip_gen: v7x
topology: tpu7x:2x2x1
jax: 0.10.0
libtpu: 0.0.40
codegen_flags: <defaults>
</compile_context>

<pallas_src>
import jax
import jax.numpy as jnp
import numpy as np
from jax.experimental import pallas as pl
from jax.experimental.pallas import tpu as pltpu


def mlp_kernel(x_ref, w1_ref, b1_ref, w2_ref, b2_ref, o_ref, h_ref):
    # fc1 + ReLU computed once per batch tile (vocab grid axis is the inner,
    # sequential axis) and cached in VMEM scratch as bf16.
    @pl.when(pl.program_id(1) == 0)
    def _():
        x = x_ref[...].astype(jnp.bfloat16)                     # MXU operand
        h = jnp.dot(x, w1_ref[...],
                    preferred_element_type=jnp.float32)         # f32 accumulate
        h = jnp.maximum(h + b1_ref[...], 0.0)                   # bias+ReLU, f32 VPU
        h_ref[...] = h.astype(jnp.bfloat16)                     # narrow MXU operand

    # fc2 on the current vocab tile.
    y = jnp.dot(h_ref[...], w2_ref[...], preferred_element_type=jnp.float32)
    o_ref[...] = (y + b2_ref[...]).astype(o_ref.dtype)


def _num_tensorcores():
    """Best-effort TensorCore count of device 0 (v7x: 2, v5e/v6e: 1)."""
    try:
        d = jax.devices()[0]
        if d.platform != "tpu":
            return 1
        kind = str(getattr(d, "device_kind", "")).lower()
        if "v7" in kind:
            return 2
    except Exception:
        pass
    return 1


def _pick_batch_tile(B, num_tc):
    if num_tc <= 1:
        # Single TensorCore: a single grid step along batch avoids ~0.35us/step
        # overhead; 256 also exactly fills the v6e 256-row MXU M-dim.
        if B <= 512:
            return B
        for cand in (512, 256, 128, 64, 32, 16, 8):
            if B % cand == 0:
                return cand
        return B
    # Multi-TC (v7x): want >= num_tc batch tiles so "parallel" can shard them.
    for cand in (256, 128, 64, 32, 16, 8):
        if B % cand == 0 and B // cand >= num_tc:
            return cand
    return B  # explicit fallback: one tile -> only one TC used


def _pick_vocab_tile(V):
    if V <= 2048:
        return V
    for cand in (2048, 1024, 512, 256, 128):
        if V % cand == 0:
            return cand
    return V


def small_model_forward(x, w1, b1, w2, b2, *, tb=None, tv=None,
                        out_dtype=jnp.float32):
    """Fused fc1 -> ReLU -> fc2 (== PyTorch SmallModel.forward).

    x : (B, IN)   activations (cast to bf16 in-kernel for the MXU)
    w1: (IN, H)   fc1 weight stored transposed vs. nn.Linear; pass bf16 (persistent)
    b1: (H,) or (1, H)
    w2: (H, V)    fc2 weight transposed; pass bf16 (persistent)
    b2: (V,) or (1, V)
    """
    B, IN = x.shape
    H = w1.shape[1]
    V = w2.shape[1]

    # Callers should pass persistent bf16 weights; guard-cast only as fallback.
    if w1.dtype != jnp.bfloat16:
        w1 = w1.astype(jnp.bfloat16)
    if w2.dtype != jnp.bfloat16:
        w2 = w2.astype(jnp.bfloat16)
    b1 = b1.astype(jnp.float32).reshape(1, H)
    b2 = b2.astype(jnp.float32).reshape(1, V)

    num_tc = _num_tensorcores()
    if tb is None:
        tb = _pick_batch_tile(B, num_tc)
    if tv is None:
        tv = _pick_vocab_tile(V)
    assert B % tb == 0 and V % tv == 0, (B, tb, V, tv)
    nb, nv = B // tb, V // tv

    out_itemsize = np.dtype(out_dtype).itemsize
    flops = 2 * B * IN * H + 2 * B * H * V
    bytes_accessed = (x.size * x.dtype.itemsize + w1.size * 2 + b1.size * 4
                      + w2.size * 2 + b2.size * 4 + B * V * out_itemsize)

    # Rough per-call VMEM footprint (double-buffered blocks + scratch).  Only
    # raise the scoped VMEM limit when the conservative default may not fit.
    vmem_est = (2 * tb * IN * x.dtype.itemsize       # x tile
                + 2 * IN * H * 2 + 2 * H * 4         # W1 + b1
                + 2 * H * tv * 2 + 2 * tv * 4        # W2 tile + b2 tile
                + 2 * tb * tv * out_itemsize         # out tile
                + tb * H * 2)                        # hidden scratch (bf16)
    vmem_limit = int(vmem_est * 1.5) if vmem_est > (12 << 20) else None

    return pl.pallas_call(
        mlp_kernel,
        out_shape=jax.ShapeDtypeStruct((B, V), out_dtype),
        grid_spec=pltpu.PrefetchScalarGridSpec(
            num_scalar_prefetch=0,
            grid=(nb, nv),
            in_specs=[
                pl.BlockSpec((tb, IN), lambda i, j: (i, 0)),   # x batch tile
                pl.BlockSpec((IN, H), lambda i, j: (0, 0)),    # W1 (constant block)
                pl.BlockSpec((1, H), lambda i, j: (0, 0)),     # b1
                pl.BlockSpec((H, tv), lambda i, j: (0, j)),    # W2 vocab tile
                pl.BlockSpec((1, tv), lambda i, j: (0, j)),    # b2 vocab tile
            ],
            out_specs=pl.BlockSpec((tb, tv), lambda i, j: (i, j)),
            scratch_shapes=[pltpu.VMEM((tb, H), jnp.bfloat16)],
        ),
        compiler_params=pltpu.CompilerParams(
            dimension_semantics=("parallel", "arbitrary"),
            vmem_limit_bytes=vmem_limit,
        ),
        cost_estimate=pl.CostEstimate(
            flops=flops, transcendentals=0, bytes_accessed=bytes_accessed),
    )(x, w1, b1, w2, b2)


if __name__ == "__main__":
    # Module-implied sizes: input_size=768, hidden_size=256.  output_size comes
    # from teacher_model.config.vocab_size; use a modest stand-in that still
    # exercises the vocab-axis tiling (tv=2048 -> 2 vocab tiles).
    INPUT_SIZE = 768
    HIDDEN_SIZE = 256
    OUTPUT_SIZE = 4096
    BATCH = 256

    key = jax.random.PRNGKey(0)
    kx, k1, k2, k3, k4 = jax.random.split(key, 5)

    x = jax.random.normal(kx, (BATCH, INPUT_SIZE), dtype=jnp.float32)

    # Deterministic parameter init (kaiming-uniform-ish scale, like nn.Linear).
    lim1 = 1.0 / jnp.sqrt(INPUT_SIZE)
    lim2 = 1.0 / jnp.sqrt(HIDDEN_SIZE)
    w1_f32 = jax.random.uniform(k1, (INPUT_SIZE, HIDDEN_SIZE), jnp.float32, -lim1, lim1)
    b1 = jax.random.uniform(k2, (1, HIDDEN_SIZE), jnp.float32, -lim1, lim1)
    w2_f32 = jax.random.uniform(k3, (HIDDEN_SIZE, OUTPUT_SIZE), jnp.float32, -lim2, lim2)
    b2 = jax.random.uniform(k4, (1, OUTPUT_SIZE), jnp.float32, -lim2, lim2)

    # Persistent bf16 weights: cast ONCE at init, outside the per-call hot path.
    w1 = jax.block_until_ready(w1_f32.astype(jnp.bfloat16))
    w2 = jax.block_until_ready(w2_f32.astype(jnp.bfloat16))

    out = small_model_forward(x, w1, b1, w2, b2)
    jax.block_until_ready(out)
    assert out.shape == (BATCH, OUTPUT_SIZE)

    # Reference with identical bf16-operand / f32-accumulate math.
    h_ref = jnp.dot(x.astype(jnp.bfloat16), w1,
                    preferred_element_type=jnp.float32) + b1
    h_ref = jnp.maximum(h_ref, 0.0).astype(jnp.bfloat16)
    ref = jnp.dot(h_ref, w2, preferred_element_type=jnp.float32) + b2
    assert jnp.allclose(out, ref, atol=2e-2, rtol=2e-2), (
        float(jnp.max(jnp.abs(out - ref))))

    # Loose check against the full-f32 forward (intentional bf16 operand loss).
    ref_f32 = jnp.maximum(x @ w1_f32 + b1, 0.0) @ w2_f32 + b2
    assert float(jnp.max(jnp.abs(out - ref_f32))) < 0.5

    print("KERNEL_OK")
</pallas_src>

<mosaic_0001>
module attributes {stable_mosaic.version = 11 : i64} {
  func.func @mlp_kernel(%arg0: i32, %arg1: i32, %arg2: memref<256x768xf32, #tpu.memory_space<vmem>>, %arg3: memref<768x256xbf16, #tpu.memory_space<vmem>>, %arg4: memref<1x256xf32, #tpu.memory_space<vmem>>, %arg5: memref<256x2048xbf16, #tpu.memory_space<vmem>>, %arg6: memref<1x2048xf32, #tpu.memory_space<vmem>>, %arg7: memref<256x2048xf32, #tpu.memory_space<vmem>>, %arg8: memref<256x256xbf16, #tpu.memory_space<vmem>>) attributes {dimension_semantics = [#tpu.dimension_semantics<parallel>, #tpu.dimension_semantics<arbitrary>], iteration_bounds = array<i64: 1, 2>, scalar_prefetch = 0 : i64, scratch_operands = 1 : i64, tpu.core_type = #tpu.core_type<tc>, window_params = [{transform_indices = @transform_0, window_bounds = array<i64: 256, 768>}, {pipeline_mode = #tpu.pipeline_mode<synchronous>, transform_indices = @transform_1, window_bounds = array<i64: 768, 256>}, {pipeline_mode = #tpu.pipeline_mode<synchronous>, transform_indices = @transform_2, window_bounds = array<i64: 1, 256>}, {transform_indices = @transform_3, window_bounds = array<i64: 256, 2048>}, {transform_indices = @transform_4, window_bounds = array<i64: 1, 2048>}, {transform_indices = @transform_5, window_bounds = array<i64: 256, 2048>}]} {
    %c0_i32 = arith.constant 0 : i32
    %0 = arith.cmpi eq, %arg1, %c0_i32 : i32
    %1 = arith.extui %0 : i1 to i32
    %c0_i32_0 = arith.constant 0 : i32
    %2 = arith.cmpi ne, %1, %c0_i32_0 : i32
    scf.if %2 {
      %c0_8 = arith.constant 0 : index
      %c0_9 = arith.constant 0 : index
      %10 = vector.load %arg2[%c0_8, %c0_9] : memref<256x768xf32, #tpu.memory_space<vmem>>, vector<256x768xf32>
      %11 = arith.truncf %10 : vector<256x768xf32> to vector<256x768xbf16>
      %c0_10 = arith.constant 0 : index
      %c0_11 = arith.constant 0 : index
      %12 = vector.load %arg3[%c0_10, %c0_11] : memref<768x256xbf16, #tpu.memory_space<vmem>>, vector<768x256xbf16>
      %cst_12 = arith.constant dense<0.000000e+00> : vector<256x256xf32>
      %13 = tpu.matmul %11, %12, %cst_12 {dimension_numbers = #tpu.dot_dimension_numbers<[1], [0], [0], [1], [0, 0, 1, 1], [], []>} : vector<256x768xbf16>, vector<768x256xbf16>, vector<256x256xf32> -> vector<256x256xf32>
      %c0_13 = arith.constant 0 : index
      %c0_14 = arith.constant 0 : index
      %14 = vector.load %arg4[%c0_13, %c0_14] : memref<1x256xf32, #tpu.memory_space<vmem>>, vector<1x256xf32>
      %15 = vector.broadcast %14 : vector<1x256xf32> to vector<256x256xf32>
      %16 = arith.addf %13, %15 : vector<256x256xf32>
      %cst_15 = arith.constant 0.000000e+00 : f32
      %17 = vector.broadcast %cst_15 : f32 to vector<256x256xf32>
      %18 = arith.maximumf %16, %17 : vector<256x256xf32>
      %19 = arith.truncf %18 : vector<256x256xf32> to vector<256x256xbf16>
      %c0_16 = arith.constant 0 : index
      %c0_17 = arith.constant 0 : index
      %20 = vector.load %arg8[%c0_16, %c0_17] : memref<256x256xbf16, #tpu.memory_space<vmem>>, vector<256x256xbf16>
      tpu.vector_store %arg8[%c0_16, %c0_17], %19 {strides = array<i32>} : memref<256x256xbf16, #tpu.memory_space<vmem>>, vector<256x256xbf16>,
    } else {
    }
    %c0 = arith.constant 0 : index
    %c0_1 = arith.constant 0 : index
    %3 = vector.load %arg8[%c0, %c0_1] : memref<256x256xbf16, #tpu.memory_space<vmem>>, vector<256x256xbf16>
    %c0_2 = arith.constant 0 : index
    %c0_3 = arith.constant 0 : index
    %4 = vector.load %arg5[%c0_2, %c0_3] : memref<256x2048xbf16, #tpu.memory_space<vmem>>, vector<256x2048xbf16>
    %cst = arith.constant dense<0.000000e+00> : vector<256x2048xf32>
    %5 = tpu.matmul %3, %4, %cst {dimension_numbers = #tpu.dot_dimension_numbers<[1], [0], [0], [1], [0, 0, 1, 1], [], []>} : vector<256x256xbf16>, vector<256x2048xbf16>, vector<256x2048xf32> -> vector<256x2048xf32>
    %c0_4 = arith.constant 0 : index
    %c0_5 = arith.constant 0 : index
    %6 = vector.load %arg6[%c0_4, %c0_5] : memref<1x2048xf32, #tpu.memory_space<vmem>>, vector<1x2048xf32>
    %7 = vector.broadcast %6 : vector<1x2048xf32> to vector<256x2048xf32>
    %8 = arith.addf %5, %7 : vector<256x2048xf32>
    %c0_6 = arith.constant 0 : index
    %c0_7 = arith.constant 0 : index
    %9 = vector.load %arg7[%c0_6, %c0_7] : memref<256x2048xf32, #tpu.memory_space<vmem>>, vector<256x2048xf32>
    tpu.vector_store %arg7[%c0_6, %c0_7], %8 {strides = array<i32>} : memref<256x2048xf32, #tpu.memory_space<vmem>>, vector<256x2048xf32>,
    return
  }
  func.func @transform_0(%arg0: i32, %arg1: i32) -> (i32, i32) {
    %c0_i32 = arith.constant 0 : i32
    %c0_i32_0 = arith.constant 0 : i32
    return %arg0, %c0_i32 : i32, i32
  }
  func.func @transform_1(%arg0: i32, %arg1: i32) -> (i32, i32) {
    %c0_i32 = arith.constant 0 : i32
    %c0_i32_0 = arith.constant 0 : i32
    %c0_i32_1 = arith.constant 0 : i32
    return %c0_i32, %c0_i32_0 : i32, i32
  }
  func.func @transform_2(%arg0: i32, %arg1: i32) -> (i32, i32) {
    %c0_i32 = arith.constant 0 : i32
    %c0_i32_0 = arith.constant 0 : i32
    %c0_i32_1 = arith.constant 0 : i32
    return %c0_i32, %c0_i32_0 : i32, i32
  }
  func.func @transform_3(%arg0: i32, %arg1: i32) -> (i32, i32) {
    %c0_i32 = arith.constant 0 : i32
    %c0_i32_0 = arith.constant 0 : i32
    return %c0_i32, %arg1 : i32, i32
  }
  func.func @transform_4(%arg0: i32, %arg1: i32) -> (i32, i32) {
    %c0_i32 = arith.constant 0 : i32
    %c0_i32_0 = arith.constant 0 : i32
    return %c0_i32, %arg1 : i32, i32
  }
  func.func @transform_5(%arg0: i32, %arg1: i32) -> (i32, i32) {
    %c0_i32 = arith.constant 0 : i32
    return %arg0, %arg1 : i32, i32
  }
}

</mosaic_0001>

<llo_original>
// kernel: tpu_custom_call.1
$region0: #{tpu_custom_call.1}
  #allocation0 [shape = 'u32[]', space=smem, size = 0x4, offset = 0x4, fixed_abs, tag = 'smem constant byte address 0x4 - core index']
  #allocation1 [shape = 'u32[144,128]{1,0:T(1,128)}', space=vmem, size = 0x12000, scoped, tag = 'internal scratch']
  #allocation2 [shape = 'bf16[256,256]{1,0:T(16,128)(2,1)}', space=vmem, size = 0x20000, scoped, tag = 'scratch operand']
  %s0 = inlined_call_operand.hbm [shape: f32[256,768], index: 0, kind: input, shape index: {}]
  %s1 = inlined_call_operand.hbm [shape: bf16[768,256], index: 1, kind: input, shape index: {}]
  %s2 = inlined_call_operand.hbm [shape: f32[1,256], index: 2, kind: input, shape index: {}]
  %s3 = inlined_call_operand.hbm [shape: bf16[256,4096], index: 3, kind: input, shape index: {}]
  %s4 = inlined_call_operand.hbm [shape: f32[1,4096], index: 4, kind: input, shape index: {}]
  %s5 = inlined_call_operand.hbm [shape: f32[256,4096], index: 5, kind: output, shape index: {}]
  %s6 = sld [smem:[#allocation0]]
  $region77: #{tpu_custom_call.1} parent=0
    _
  %s8 = ssub.s32 1, %s6
  %s9 = scalar_select 0, %s8, %s6
  $region1: #{tpu_custom_call.1} parent=0
    #allocation3 [shape = 'u8[786432]{0}', space=vmem, size = 0xc0000, scoped, tag = 'input window, operand 0, single buffered']
    #allocation4 [shape = 's32[2]{0}', space=sflag, size = 0x8, scoped, tag = 'scoped memory for tpu_custom_call.1']
    #allocation5 [shape = 's32[2]{0}', space=sflag, size = 0x8, scoped, tag = 'scoped memory for tpu_custom_call.1']
    #allocation6 [shape = 'u8[393216]{0}', space=vmem, size = 0x60000, scoped, tag = 'input window, operand 1, single buffered']
    #allocation7 [shape = 's32[1]{0}', space=sflag, size = 0x4, scoped, tag = 'scoped memory for tpu_custom_call.1']
    #allocation8 [shape = 'u8[1024]{0}', space=vmem, size = 0x400, scoped, tag = 'input window, operand 2, single buffered']
    #allocation9 [shape = 'u8[2097152]{0}', space=vmem, size = 0x200000, scoped, tag = 'input window, operand 3']
    #allocation10 [shape = 's32[2]{0}', space=sflag, size = 0x8, scoped, tag = 'scoped memory for tpu_custom_call.1']
    #allocation11 [shape = 'u8[16384]{0}', space=vmem, size = 0x4000, scoped, tag = 'input window, operand 4']
    #allocation12 [shape = 'u8[4194304]{0}', space=vmem, size = 0x400000, scoped, tag = 'output window, operand 0']
    %10 = vsyncpa [#allocation4], 0
    %11 = vsyncpa [#allocation7], 0
    %12 = vsyncpa [#allocation10], 0
    %s13 = scalar_lea.sflag [#allocation10], 1
    %14 = vsyncpa %s13, 0
    %15 = vsyncpa [#allocation5], 0
    %s16 = scalar_lea.sflag [#allocation5], 1
    %17 = vsyncpa %s16, 0
    loop: start=0, step=1, limit=4
    $region2: #{tpu_custom_call.1} parent=1 // loop_pre_header
      _
    $region3: #{tpu_custom_call.1} parent=1 // loop_header
      %s19 = sphi 0, %s23
      %p20 = scmp.ge.s32.totalorder %s19, 4
      %s26 = sphi 0, %s38
      %s27 = sphi 0, %s34
      %s28 = sphi 0, %s26
      %s29 = sphi 0, %s27
      %s30 = sphi 0, %s28
      %s31 = sphi 0, %s29
      %s41 = sphi 0, %s43
      %s44 = sphi 0, %s41
      %s45 = sphi 0, %s44
      %s61 = sphi 0, %s45
      %s65 = sphi 0, %s65
      %s67 = sphi 0, %s65
      %s68 = sphi 0, %s67
      %s82 = sphi 0, %s68
      %s86 = sphi 0, %s86
      %s88 = sphi 0, %s86
      %s89 = sphi 0, %s88
      %s103 = sphi 0, %s89
      %s109 = sphi 0, %s111
      %s112 = sphi 0, %s109
      %s113 = sphi 0, %s112
      %s129 = sphi 0, %s113
      %s135 = sphi 0, %s137
      %s138 = sphi 0, %s135
      %s139 = sphi 0, %s138
      %s155 = sphi 0, %s139
      %s163 = sphi 0, %s165
      %s166 = sphi 0, %s163
      %s167 = sphi 0, %s166
      %s183 = sphi 0, %s167
    $region4: #{tpu_custom_call.1} parent=1 // loop_header_branch
      %22 = sbr.rel (%p20) target = $region8
    $region5: #{tpu_custom_call.1} parent=1 // loop_body
      %s24 = ssub.s32 %s19, 1
      %s25 = ssub.s32 %s19, 2
      %s32 = sadd.s32 1, %s27
      %p33 = scmp.ge.s32.totalorder %s32, 2
      %s34 = scalar_select %p33, 0, %s32
      %s35 = sadd.s32 1, %s26
      %s36 = scalar_select %p33, %s35, %s26
      %p37 = scmp.ge.s32.totalorder %s36, 1
      %s38 = scalar_select %p37, 0, %s36
      %s39 = ssub.s32 %s26, %s38
      %p40 = scmp.eq.s32.totalorder %s39, 0
      %s42 = sadd.s32 %s41, 1
      %s43 = scalar_select %p40, %s41, %s42
      %p46 = pneg %p40
      %p47 = scmp.eq.s32.totalorder %s19, 1
      %p48 = por %p46, %p47
      %p49 = scmp.ne.s32.totalorder %s41, %s44
      %p50 = scmp.eq.s32.totalorder %s19, 0
      %p51 = por %p49, %p50
      %p52 = scmp.ne.s32.totalorder %s41, %s44
      %p53 = scmp.eq.s32.totalorder %s24, 1
      %p54 = por %p52, %p53
      %p55 = scmp.ne.s32.totalorder %s44, %s45
      %p56 = scmp.eq.s32.totalorder %s24, 0
      %p57 = por %p55, %p56
      %p58 = scmp.ne.s32.totalorder %s44, %s45
      %p59 = scmp.eq.s32.totalorder %s25, 1
      %p60 = por %p58, %p59
      %p62 = scmp.ne.s32.totalorder %s45, %s61
      %p63 = scmp.eq.s32.totalorder %s25, 0
      %p64 = por %p62, %p63
      %s66 = sadd.s32 %s65, 1
      %p69 = scmp.eq.s32.totalorder %s19, 1
      %p70 = scmp.ne.s32.totalorder %s65, %s67
      %p71 = scmp.eq.s32.totalorder %s19, 0
      %p72 = por %p70, %p71
      %p73 = scmp.ne.s32.totalorder %s65, %s67
      %p74 = scmp.eq.s32.totalorder %s24, 1
      %p75 = por %p73, %p74
      %p76 = scmp.ne.s32.totalorder %s67, %s68
      %p77 = scmp.eq.s32.totalorder %s24, 0
      %p78 = por %p76, %p77
      %p79 = scmp.ne.s32.totalorder %s67, %s68
      %p80 = scmp.eq.s32.totalorder %s25, 1
      %p81 = por %p79, %p80
      %p83 = scmp.ne.s32.totalorder %s68, %s82
      %p84 = scmp.eq.s32.totalorder %s25, 0
      %p85 = por %p83, %p84
      %s87 = sadd.s32 %s86, 1
      %p90 = scmp.eq.s32.totalorder %s19, 1
      %p91 = scmp.ne.s32.totalorder %s86, %s88
      %p92 = scmp.eq.s32.totalorder %s19, 0
      %p93 = por %p91, %p92
      %p94 = scmp.ne.s32.totalorder %s86, %s88
      %p95 = scmp.eq.s32.totalorder %s24, 1
      %p96 = por %p94, %p95
      %p97 = scmp.ne.s32.totalorder %s88, %s89
      %p98 = scmp.eq.s32.totalorder %s24, 0
      %p99 = por %p97, %p98
      %p100 = scmp.ne.s32.totalorder %s88, %s89
      %p101 = scmp.eq.s32.totalorder %s25, 1
      %p102 = por %p100, %p101
      %p104 = scmp.ne.s32.totalorder %s89, %s103
      %p105 = scmp.eq.s32.totalorder %s25, 0
      %p106 = por %p104, %p105
      %s107 = ssub.s32 %s27, %s34
      %p108 = scmp.eq.s32.totalorder %s107, 0
      %s110 = sadd.s32 %s109, 1
      %s111 = scalar_select %p108, %s109, %s110
      %p114 = pneg %p108
      %p115 = scmp.eq.s32.totalorder %s19, 1
      %p116 = por %p114, %p115
      %p117 = scmp.ne.s32.totalorder %s109, %s112
      %p118 = scmp.eq.s32.totalorder %s19, 0
      %p119 = por %p117, %p118
      %p120 = scmp.ne.s32.totalorder %s109, %s112
      %p121 = scmp.eq.s32.totalorder %s24, 1
      %p122 = por %p120, %p121
      %p123 = scmp.ne.s32.totalorder %s112, %s113
      %p124 = scmp.eq.s32.totalorder %s24, 0
      %p125 = por %p123, %p124
      %p126 = scmp.ne.s32.totalorder %s112, %s113
      %p127 = scmp.eq.s32.totalorder %s25, 1
      %p128 = por %p126, %p127
      %p130 = scmp.ne.s32.totalorder %s113, %s129
      %p131 = scmp.eq.s32.totalorder %s25, 0
      %p132 = por %p130, %p131
      %s133 = ssub.s32 %s27, %s34
      %p134 = scmp.eq.s32.totalorder %s133, 0
      %s136 = sadd.s32 %s135, 1
      %s137 = scalar_select %p134, %s135, %s136
      %p140 = pneg %p134
      %p141 = scmp.eq.s32.totalorder %s19, 1
      %p142 = por %p140, %p141
      %p143 = scmp.ne.s32.totalorder %s135, %s138
      %p144 = scmp.eq.s32.totalorder %s19, 0
      %p145 = por %p143, %p144
      %p146 = scmp.ne.s32.totalorder %s135, %s138
      %p147 = scmp.eq.s32.totalorder %s24, 1
      %p148 = por %p146, %p147
      %p149 = scmp.ne.s32.totalorder %s138, %s139
      %p150 = scmp.eq.s32.totalorder %s24, 0
      %p151 = por %p149, %p150
      %p152 = scmp.ne.s32.totalorder %s138, %s139
      %p153 = scmp.eq.s32.totalorder %s25, 1
      %p154 = por %p152, %p153
      %p156 = scmp.ne.s32.totalorder %s139, %s155
      %p157 = scmp.eq.s32.totalorder %s25, 0
      %p158 = por %p156, %p157
      %s159 = ssub.s32 %s26, %s38
      %s160 = ssub.s32 %s27, %s34
      %s161 = sor.u32 %s159, %s160
      %p162 = scmp.eq.s32.totalorder %s161, 0
      %s164 = sadd.s32 %s163, 1
      %s165 = scalar_select %p162, %s163, %s164
      %p168 = pneg %p162
      %p169 = scmp.eq.s32.totalorder %s19, 1
      %p170 = por %p168, %p169
      %p171 = scmp.ne.s32.totalorder %s163, %s166
      %p172 = scmp.eq.s32.totalorder %s19, 0
      %p173 = por %p171, %p172
      %p174 = scmp.ne.s32.totalorder %s163, %s166
      %p175 = scmp.eq.s32.totalorder %s24, 1
      %p176 = por %p174, %p175
      %p177 = scmp.ne.s32.totalorder %s166, %s167
      %p178 = scmp.eq.s32.totalorder %s24, 0
      %p179 = por %p177, %p178
      %p180 = scmp.ne.s32.totalorder %s166, %s167
      %p181 = scmp.eq.s32.totalorder %s25, 1
      %p182 = por %p180, %p181
      %p184 = scmp.ne.s32.totalorder %s167, %s183
      %p185 = scmp.eq.s32.totalorder %s25, 0
      %p186 = por %p184, %p185
      %p187 = scmp.le.s32.totalorder 1, %s19
      %p188 = scmp.lt.s32.totalorder %s19, 3
      %p189 = pnand %p187, %p188
      %p190 = pneg %p189
      // Predicated region
      $region9: #{tpu_custom_call.1} parent=5 // pred_check
        _
      $region10: #{tpu_custom_call.1} parent=5 // pred_check_branch
        %192 = sbr.rel (%p189) target = $region12
      $region11: #{tpu_custom_call.1} parent=5 // pred_region
        %s193 = ssub.s32 %s19, 1
        // Predicated region
        $region13: #{tpu_custom_call.1} parent=11 // pred_check
          %p194 = pneg %p57
        $region14: #{tpu_custom_call.1} parent=11 // pred_check_branch
          %196 = sbr.rel (%p194) target = $region16
        $region15: #{tpu_custom_call.1} parent=11 // pred_region
          %s197 = smul.u32 32, %s28
          %s199 = ssub.s32 24576, 24576
          %200 = vsyncadd [#allocation4], %s199
          %s201 = smul.addr %s197, 6
          %s202 = smul.addr %s201, 128
          %s203 = scalar_lea.hbm %s0, %s202
          %s204 = sshll.u32 [#allocation3], 4
          %s205 = int_to_ptr.vmem [resolvable:$true] %s204
          %210 = dma.hbm_to_vmem [thread:$0]  %s203, 24576, %s205, [#allocation4], 768, 768, 48
        $region16: #{tpu_custom_call.1} parent=11 // pred_fallthru
          _
        // Predicated region
        $region17: #{tpu_custom_call.1} parent=11 // pred_check
          %p211 = pneg %p78
        $region18: #{tpu_custom_call.1} parent=11 // pred_check_branch
          %213 = sbr.rel (%p211) target = $region20
        $region19: #{tpu_custom_call.1} parent=11 // pred_region
          %s215 = ssub.s32 12288, 12288
          %216 = vsyncadd [#allocation7], %s215
          %s217 = sshll.u32 [#allocation6], 4
          %s218 = int_to_ptr.vmem [resolvable:$true] %s217
          %223 = dma.hbm_to_vmem [thread:$0]  %s1, 12288, %s218, [#allocation7], 128, 128, 8
        $region20: #{tpu_custom_call.1} parent=11 // pred_fallthru
          _
        // Predicated region
        $region21: #{tpu_custom_call.1} parent=11 // pred_check
          %p224 = pneg %p99
        $region22: #{tpu_custom_call.1} parent=11 // pred_check_branch
          %226 = sbr.rel (%p224) target = $region24
        $region23: #{tpu_custom_call.1} parent=11 // pred_region
          %s228 = ssub.s32 32, 32
          %229 = vsyncadd [#allocation7], %s228
          %s231 = sshll.u32 [#allocation8], 4
          %s232 = int_to_ptr.vmem [resolvable:$true] %s231
          %234 = dma.hbm_to_vmem [thread:$0]  %s2, 32, %s232, [#allocation7]
        $region24: #{tpu_custom_call.1} parent=11 // pred_fallthru
          _
      $region12: #{tpu_custom_call.1} parent=5 // pred_fallthru
        _
      %p235 = scmp.lt.s32.totalorder %s19, 2
      // Predicated region
      $region25: #{tpu_custom_call.1} parent=5 // pred_check
        %p236 = pneg %p235
      $region26: #{tpu_custom_call.1} parent=5 // pred_check_branch
        %238 = sbr.rel (%p236) target = $region28
      $region27: #{tpu_custom_call.1} parent=5 // pred_region
        // Predicated region
        $region29: #{tpu_custom_call.1} parent=27 // pred_check
          %p239 = pneg %p119
        $region30: #{tpu_custom_call.1} parent=27 // pred_check_branch
          %241 = sbr.rel (%p239) target = $region32
        $region31: #{tpu_custom_call.1} parent=27 // pred_region
          %s242 = sand.u32 %s19, 1
          %s243 = scalar_lea.sflag [#allocation10], %s242
          %s244 = sand.u32 %s109, 1
          %s245 = smul.addr %s244, 2048
          %s246 = scalar_lea.vmem [#allocation9], %s245
          %s247 = smul.u32 16, %s27
          %s249 = ssub.s32 32768, 32768
          %250 = vsyncadd %s243, %s249
          %s251 = smul.addr %s247, 64
          %s252 = scalar_lea.hbm %s3, %s251
          %s253 = sshll.u32 %s246, 4
          %s254 = int_to_ptr.vmem [resolvable:$true] %s253
          %259 = dma.hbm_to_vmem [thread:$0]  %s252, 32768, %s254, %s243, 2048, 1024, 64
        $region32: #{tpu_custom_call.1} parent=27 // pred_fallthru
          _
        // Predicated region
        $region33: #{tpu_custom_call.1} parent=27 // pred_check
          %p260 = pneg %p145
        $region34: #{tpu_custom_call.1} parent=27 // pred_check_branch
          %262 = sbr.rel (%p260) target = $region36
        $region35: #{tpu_custom_call.1} parent=27 // pred_region
          %s263 = sand.u32 %s19, 1
          %s264 = scalar_lea.sflag [#allocation10], %s263
          %s265 = sand.u32 %s135, 1
          %s266 = smul.addr %s265, 16
          %s267 = scalar_lea.vmem [#allocation11], %s266
          %s268 = smul.u32 16, %s27
          %s270 = ssub.s32 256, 256
          %271 = vsyncadd %s264, %s270
          %s272 = smul.addr %s268, 16
          %s273 = scalar_lea.hbm %s4, %s272
          %s275 = sshll.u32 %s267, 4
          %s276 = int_to_ptr.vmem [resolvable:$true] %s275
          %278 = dma.hbm_to_vmem [thread:$0]  %s273, 256, %s276, %s264
        $region36: #{tpu_custom_call.1} parent=27 // pred_fallthru
          _
      $region28: #{tpu_custom_call.1} parent=5 // pred_fallthru
        _
      %p279 = scmp.le.s32.totalorder 1, %s19
      %p280 = scmp.lt.s32.totalorder %s19, 3
      %p281 = pnand %p279, %p280
      %p282 = pneg %p281
      // Predicated region
      $region37: #{tpu_custom_call.1} parent=5 // pred_check
        _
      $region38: #{tpu_custom_call.1} parent=5 // pred_check_branch
        %284 = sbr.rel (%p281) target = $region40
      $region39: #{tpu_custom_call.1} parent=5 // pred_region
        %s285 = ssub.s32 %s19, 1
        // Predicated region
        $region41: #{tpu_custom_call.1} parent=39 // pred_check
          %p286 = pneg %p57
        $region42: #{tpu_custom_call.1} parent=39 // pred_check_branch
          %288 = sbr.rel (%p286) target = $region44
        $region43: #{tpu_custom_call.1} parent=39 // pred_region
          %289 = dma.done [#allocation4], 24576
        $region44: #{tpu_custom_call.1} parent=39 // pred_fallthru
          _
        // Predicated region
        $region45: #{tpu_custom_call.1} parent=39 // pred_check
          %p290 = pneg %p78
        $region46: #{tpu_custom_call.1} parent=39 // pred_check_branch
          %292 = sbr.rel (%p290) target = $region48
        $region47: #{tpu_custom_call.1} parent=39 // pred_region
          %293 = dma.done [#allocation7], 12288
        $region48: #{tpu_custom_call.1} parent=39 // pred_fallthru
          _
        // Predicated region
        $region49: #{tpu_custom_call.1} parent=39 // pred_check
          %p294 = pneg %p99
        $region50: #{tpu_custom_call.1} parent=39 // pred_check_branch
          %296 = sbr.rel (%p294) target = $region52
        $region51: #{tpu_custom_call.1} parent=39 // pred_region
          %297 = dma.done [#allocation7], 32
        $region52: #{tpu_custom_call.1} parent=39 // pred_fallthru
          _
        %s298 = sand.u32 %s24, 1
        %s299 = scalar_lea.sflag [#allocation10], %s298
        %s300 = sand.u32 %s112, 1
        %s301 = smul.addr %s300, 2048
        %s302 = scalar_lea.vmem [#allocation9], %s301
        // Predicated region
        $region53: #{tpu_custom_call.1} parent=39 // pred_check
          %p303 = pneg %p125
        $region54: #{tpu_custom_call.1} parent=39 // pred_check_branch
          %305 = sbr.rel (%p303) target = $region56
        $region55: #{tpu_custom_call.1} parent=39 // pred_region
          %306 = dma.done %s299, 32768
        $region56: #{tpu_custom_call.1} parent=39 // pred_fallthru
          _
        %s307 = sand.u32 %s24, 1
        %s308 = scalar_lea.sflag [#allocation10], %s307
        %s309 = sand.u32 %s138, 1
        %s310 = smul.addr %s309, 16
        %s311 = scalar_lea.vmem [#allocation11], %s310
        // Predicated region
        $region57: #{tpu_custom_call.1} parent=39 // pred_check
          %p312 = pneg %p151
        $region58: #{tpu_custom_call.1} parent=39 // pred_check_branch
          %314 = sbr.rel (%p312) target = $region60
        $region59: #{tpu_custom_call.1} parent=39 // pred_region
          %315 = dma.done %s308, 256
        $region60: #{tpu_custom_call.1} parent=39 // pred_fallthru
          _
        %p316 = pneg %p57
        %p317 = pneg %p54
        %p318 = pneg %p78
        %p319 = pneg %p75
        %p320 = pneg %p99
        %p321 = pneg %p96
        %s322 = sand.u32 %s24, 1
        %s323 = scalar_lea.sflag [#allocation10], %s322
        %s324 = sand.u32 %s112, 1
        %s325 = smul.addr %s324, 2048
        %s326 = scalar_lea.vmem [#allocation9], %s325
        %p327 = pneg %p125
        %p328 = pneg %p122
        %s329 = sand.u32 %s24, 1
        %s330 = scalar_lea.sflag [#allocation10], %s329
        %s331 = sand.u32 %s138, 1
        %s332 = smul.addr %s331, 16
        %s333 = scalar_lea.vmem [#allocation11], %s332
        %p334 = pneg %p151
        %p335 = pneg %p148
        %p336 = pneg %p179
        %p337 = pneg %p176
        %s338 = sand.u32 %s166, 1
        %s339 = scalar_lea.sflag [#allocation5], %s338
        %s340 = sand.u32 %s166, 1
        %s341 = smul.addr %s340, 4096
        %s342 = scalar_lea.vmem [#allocation12], %s341
        %s343 = smul.u32 32, %s28
        %s344 = smul.u32 16, %s29
        %s345 = smul.u32 16, %s29
        %s346 = smul.u32 32, %s28
        %s347 = smul.u32 16, %s29
        %p348 = scmp.eq.s32.totalorder %s29, 0
        // Predicated region
        $region61: #{tpu_custom_call.1} parent=39 // pred_check
          %p349 = pneg %p348
        $region62: #{tpu_custom_call.1} parent=39 // pred_check_branch
          %351 = sbr.rel (%p349) target = $region64
        $region63: #{tpu_custom_call.1} parent=39 // pred_region
          %v352 = vld [vmem:[#allocation3] sm:$0xff]
          %v353 = vld [vmem:[#allocation3 + $0x8] sm:$0xff]
          %v354 = vld [vmem:[#allocation3 + $0x10] sm:$0xff]
          %v355 = vld [vmem:[#allocation3 + $0x18] sm:$0xff]
          %v356 = vld [vmem:[#allocation3 + $0x20] sm:$0xff]
          %v357 = vld [vmem:[#allocation3 + $0x28] sm:$0xff]
          %v358 = vld [vmem:[#allocation3 + $0x30] sm:$0xff]
          %v359 = vld [vmem:[#allocation3 + $0x38] sm:$0xff]
          %v360 = vld [vmem:[#allocation3 + $0x40] sm:$0xff]
          %v361 = vld [vmem:[#allocation3 + $0x48] sm:$0xff]
          %v362 = vld [vmem:[#allocation3 + $0x50] sm:$0xff]
          %v363 = vld [vmem:[#allocation3 + $0x58] sm:$0xff]
          %v364 = vld [vmem:[#allocation3 + $0x60] sm:$0xff]
          %v365 = vld [vmem:[#allocation3 + $0x68] sm:$0xff]
          %v366 = vld [vmem:[#allocation3 + $0x70] sm:$0xff]
          %v367 = vld [vmem:[#allocation3 + $0x78] sm:$0xff]
          %v368 = vld [vmem:[#allocation3 + $0x80] sm:$0xff]
          %v369 = vld [vmem:[#allocation3 + $0x88] sm:$0xff]
          %v370 = vld [vmem:[#allocation3 + $0x90] sm:$0xff]
          %v371 = vld [vmem:[#allocation3 + $0x98] sm:$0xff]
          %v372 = vld [vmem:[#allocation3 + $0xa0] sm:$0xff]
          %v373 = vld [vmem:[#allocation3 + $0xa8] sm:$0xff]
          %v374 = vld [vmem:[#allocation3 + $0xb0] sm:$0xff]
          %v375 = vld [vmem:[#allocation3 + $0xb8] sm:$0xff]
          %v376 = vld [vmem:[#allocation3 + $0xc0] sm:$0xff]
          %v377 = vld [vmem:[#allocation3 + $0xc8] sm:$0xff]
          %v378 = vld [vmem:[#allocation3 + $0xd0] sm:$0xff]
          %v379 = vld [vmem:[#allocation3 + $0xd8] sm:$0xff]
          %v380 = vld [vmem:[#allocation3 + $0xe0] sm:$0xff]
          %v381 = vld [vmem:[#allocation3 + $0xe8] sm:$0xff]
          %v382 = vld [vmem:[#allocation3 + $0xf0] sm:$0xff]
          %v383 = vld [vmem:[#allocation3 + $0xf8] sm:$0xff]
          %v384 = vld [vmem:[#allocation3 + $0x100] sm:$0xff]
          %v385 = vld [vmem:[#allocation3 + $0x108] sm:$0xff]
          %v386 = vld [vmem:[#allocation3 + $0x110] sm:$0xff]
          %v387 = vld [vmem:[#allocation3 + $0x118] sm:$0xff]
          %v388 = vld [vmem:[#allocation3 + $0x120] sm:$0xff]
          %v389 = vld [vmem:[#allocation3 + $0x128] sm:$0xff]
          %v390 = vld [vmem:[#allocation3 + $0x130] sm:$0xff]
          %v391 = vld [vmem:[#allocation3 + $0x138] sm:$0xff]
          %v392 = vld [vmem:[#allocation3 + $0x140] sm:$0xff]
          %v393 = vld [vmem:[#allocation3 + $0x148] sm:$0xff]
          %v394 = vld [vmem:[#allocation3 + $0x150] sm:$0xff]
          %v395 = vld [vmem:[#allocation3 + $0x158] sm:$0xff]
          %v396 = vld [vmem:[#allocation3 + $0x160] sm:$0xff]
          %v397 = vld [vmem:[#allocation3 + $0x168] sm:$0xff]
          %v398 = vld [vmem:[#allocation3 + $0x170] sm:$0xff]
          %v399 = vld [vmem:[#allocation3 + $0x178] sm:$0xff]
          %v400 = vld [vmem:[#allocation3 + $0x180] sm:$0xff]
          %v401 = vld [vmem:[#allocation3 + $0x188] sm:$0xff]
          %v402 = vld [vmem:[#allocation3 + $0x190] sm:$0xff]
          %v403 = vld [vmem:[#allocation3 + $0x198] sm:$0xff]
          %v404 = vld [vmem:[#allocation3 + $0x1a0] sm:$0xff]
          %v405 = vld [vmem:[#allocation3 + $0x1a8] sm:$0xff]
          %v406 = vld [vmem:[#allocation3 + $0x1b0] sm:$0xff]
          %v407 = vld [vmem:[#allocation3 + $0x1b8] sm:$0xff]
          %v408 = vld [vmem:[#allocation3 + $0x1c0] sm:$0xff]
          %v409 = vld [vmem:[#allocation3 + $0x1c8] sm:$0xff]
          %v410 = vld [vmem:[#allocation3 + $0x1d0] sm:$0xff]
          %v411 = vld [vmem:[#allocation3 + $0x1d8] sm:$0xff]
          %v412 = vld [vmem:[#allocation3 + $0x1e0] sm:$0xff]
          %v413 = vld [vmem:[#allocation3 + $0x1e8] sm:$0xff]
          %v414 = vld [vmem:[#allocation3 + $0x1f0] sm:$0xff]
          %v415 = vld [vmem:[#allocation3 + $0x1f8] sm:$0xff]
          %v416 = vld [vmem:[#allocation3 + $0x200] sm:$0xff]
          %v417 = vld [vmem:[#allocation3 + $0x208] sm:$0xff]
          %v418 = vld [vmem:[#allocation3 + $0x210] sm:$0xff]
          %v419 = vld [vmem:[#allocation3 + $0x218] sm:$0xff]
          %v420 = vld [vmem:[#allocation3 + $0x220] sm:$0xff]
          %v421 = vld [vmem:[#allocation3 + $0x228] sm:$0xff]
          %v422 = vld [vmem:[#allocation3 + $0x230] sm:$0xff]
          %v423 = vld [vmem:[#allocation3 + $0x238] sm:$0xff]
          %v424 = vld [vmem:[#allocation3 + $0x240] sm:$0xff]
          %v425 = vld [vmem:[#allocation3 + $0x248] sm:$0xff]
          %v426 = vld [vmem:[#allocation3 + $0x250] sm:$0xff]
          %v427 = vld [vmem:[#allocation3 + $0x258] sm:$0xff]
          %v428 = vld [vmem:[#allocation3 + $0x260] sm:$0xff]
          %v429 = vld [vmem:[#allocation3 + $0x268] sm:$0xff]
          %v430 = vld [vmem:[#allocation3 + $0x270] sm:$0xff]
          %v431 = vld [vmem:[#allocation3 + $0x278] sm:$0xff]
          %v432 = vld [vmem:[#allocation3 + $0x280] sm:$0xff]
          %v433 = vld [vmem:[#allocation3 + $0x288] sm:$0xff]
          %v434 = vld [vmem:[#allocation3 + $0x290] sm:$0xff]
          %v435 = vld [vmem:[#allocation3 + $0x298] sm:$0xff]
          %v436 = vld [vmem:[#allocation3 + $0x2a0] sm:$0xff]
          %v437 = vld [vmem:[#allocation3 + $0x2a8] sm:$0xff]
          %v438 = vld [vmem:[#allocation3 + $0x2b0] sm:$0xff]
          %v439 = vld [vmem:[#allocation3 + $0x2b8] sm:$0xff]
          %v440 = vld [vmem:[#allocation3 + $0x2c0] sm:$0xff]
          %v441 = vld [vmem:[#allocation3 + $0x2c8] sm:$0xff]
          %v442 = vld [vmem:[#allocation3 + $0x2d0] sm:$0xff]
          %v443 = vld [vmem:[#allocation3 + $0x2d8] sm:$0xff]
          %v444 = vld [vmem:[#allocation3 + $0x2e0] sm:$0xff]
          %v445 = vld [vmem:[#allocation3 + $0x2e8] sm:$0xff]
          %v446 = vld [vmem:[#allocation3 + $0x2f0] sm:$0xff]
          %v447 = vld [vmem:[#allocation3 + $0x2f8] sm:$0xff]
          %v448 = vld [vmem:[#allocation3 + $0x300] sm:$0xff]
          %v449 = vld [vmem:[#allocation3 + $0x308] sm:$0xff]
          %v450 = vld [vmem:[#allocation3 + $0x310] sm:$0xff]
          %v451 = vld [vmem:[#allocation3 + $0x318] sm:$0xff]
          %v452 = vld [vmem:[#allocation3 + $0x320] sm:$0xff]
          %v453 = vld [vmem:[#allocation3 + $0x328] sm:$0xff]
          %v454 = vld [vmem:[#allocation3 + $0x330] sm:$0xff]
          %v455 = vld [vmem:[#allocation3 + $0x338] sm:$0xff]
          %v456 = vld [vmem:[#allocation3 + $0x340] sm:$0xff]
          %v457 = vld [vmem:[#allocation3 + $0x348] sm:$0xff]
          %v458 = vld [vmem:[#allocation3 + $0x350] sm:$0xff]
          %v459 = vld [vmem:[#allocation3 + $0x358] sm:$0xff]
          %v460 = vld [vmem:[#allocation3 + $0x360] sm:$0xff]
          %v461 = vld [vmem:[#allocation3 + $0x368] sm:$0xff]
          %v462 = vld [vmem:[#allocation3 + $0x370] sm:$0xff]
          %v463 = vld [vmem:[#allocation3 + $0x378] sm:$0xff]
          %v464 = vld [vmem:[#allocation3 + $0x380] sm:$0xff]
          %v465 = vld [vmem:[#allocation3 + $0x388] sm:$0xff]
          %v466 = vld [vmem:[#allocation3 + $0x390] sm:$0xff]
          %v467 = vld [vmem:[#allocation3 + $0x398] sm:$0xff]
          %v468 = vld [vmem:[#allocation3 + $0x3a0] sm:$0xff]
          %v469 = vld [vmem:[#allocation3 + $0x3a8] sm:$0xff]
          %v470 = vld [vmem:[#allocation3 + $0x3b0] sm:$0xff]
          %v471 = vld [vmem:[#allocation3 + $0x3b8] sm:$0xff]
          %v472 = vld [vmem:[#allocation3 + $0x3c0] sm:$0xff]
          %v473 = vld [vmem:[#allocation3 + $0x3c8] sm:$0xff]
          %v474 = vld [vmem:[#allocation3 + $0x3d0] sm:$0xff]
          %v475 = vld [vmem:[#allocation3 + $0x3d8] sm:$0xff]
          %v476 = vld [vmem:[#allocation3 + $0x3e0] sm:$0xff]
          %v477 = vld [vmem:[#allocation3 + $0x3e8] sm:$0xff]
          %v478 = vld [vmem:[#allocation3 + $0x3f0] sm:$0xff]
          %v479 = vld [vmem:[#allocation3 + $0x3f8] sm:$0xff]
          %v480 = vld [vmem:[#allocation3 + $0x400] sm:$0xff]
          %v481 = vld [vmem:[#allocation3 + $0x408] sm:$0xff]
          %v482 = vld [vmem:[#allocation3 + $0x410] sm:$0xff]
          %v483 = vld [vmem:[#allocation3 + $0x418] sm:$0xff]
          %v484 = vld [vmem:[#allocation3 + $0x420] sm:$0xff]
          %v485 = vld [vmem:[#allocation3 + $0x428] sm:$0xff]
          %v486 = vld [vmem:[#allocation3 + $0x430] sm:$0xff]
          %v487 = vld [vmem:[#allocation3 + $0x438] sm:$0xff]
          %v488 = vld [vmem:[#allocation3 + $0x440] sm:$0xff]
          %v489 = vld [vmem:[#allocation3 + $0x448] sm:$0xff]
          %v490 = vld [vmem:[#allocation3 + $0x450] sm:$0xff]
          %v491 = vld [vmem:[#allocation3 + $0x458] sm:$0xff]
          %v492 = vld [vmem:[#allocation3 + $0x460] sm:$0xff]
          %v493 = vld [vmem:[#allocation3 + $0x468] sm:$0xff]
          %v494 = vld [vmem:[#allocation3 + $0x470] sm:$0xff]
          %v495 = vld [vmem:[#allocation3 + $0x478] sm:$0xff]
          %v496 = vld [vmem:[#allocation3 + $0x480] sm:$0xff]
          %v497 = vld [vmem:[#allocation3 + $0x488] sm:$0xff]
          %v498 = vld [vmem:[#allocation3 + $0x490] sm:$0xff]
          %v499 = vld [vmem:[#allocation3 + $0x498] sm:$0xff]
          %v500 = vld [vmem:[#allocation3 + $0x4a0] sm:$0xff]
          %v501 = vld [vmem:[#allocation3 + $0x4a8] sm:$0xff]
          %v502 = vld [vmem:[#allocation3 + $0x4b0] sm:$0xff]
          %v503 = vld [vmem:[#allocation3 + $0x4b8] sm:$0xff]
          %v504 = vld [vmem:[#allocation3 + $0x4c0] sm:$0xff]
          %v505 = vld [vmem:[#allocation3 + $0x4c8] sm:$0xff]
          %v506 = vld [vmem:[#allocation3 + $0x4d0] sm:$0xff]
          %v507 = vld [vmem:[#allocation3 + $0x4d8] sm:$0xff]
          %v508 = vld [vmem:[#allocation3 + $0x4e0] sm:$0xff]
          %v509 = vld [vmem:[#allocation3 + $0x4e8] sm:$0xff]
          %v510 = vld [vmem:[#allocation3 + $0x4f0] sm:$0xff]
          %v511 = vld [vmem:[#allocation3 + $0x4f8] sm:$0xff]
          %v512 = vld [vmem:[#allocation3 + $0x500] sm:$0xff]
          %v513 = vld [vmem:[#allocation3 + $0x508] sm:$0xff]
          %v514 = vld [vmem:[#allocation3 + $0x510] sm:$0xff]
          %v515 = vld [vmem:[#allocation3 + $0x518] sm:$0xff]
          %v516 = vld [vmem:[#allocation3 + $0x520] sm:$0xff]
          %v517 = vld [vmem:[#allocation3 + $0x528] sm:$0xff]
          %v518 = vld [vmem:[#allocation3 + $0x530] sm:$0xff]
          %v519 = vld [vmem:[#allocation3 + $0x538] sm:$0xff]
          %v520 = vld [vmem:[#allocation3 + $0x540] sm:$0xff]
          %v521 = vld [vmem:[#allocation3 + $0x548] sm:$0xff]
          %v522 = vld [vmem:[#allocation3 + $0x550] sm:$0xff]
          %v523 = vld [vmem:[#allocation3 + $0x558] sm:$0xff]
          %v524 = vld [vmem:[#allocation3 + $0x560] sm:$0xff]
          %v525 = vld [vmem:[#allocation3 + $0x568] sm:$0xff]
          %v526 = vld [vmem:[#allocation3 + $0x570] sm:$0xff]
          %v527 = vld [vmem:[#allocation3 + $0x578] sm:$0xff]
          %v528 = vld [vmem:[#allocation3 + $0x580] sm:$0xff]
          %v529 = vld [vmem:[#allocation3 + $0x588] sm:$0xff]
          %v530 = vld [vmem:[#allocation3 + $0x590] sm:$0xff]
          %v531 = vld [vmem:[#allocation3 + $0x598] sm:$0xff]
          %v532 = vld [vmem:[#allocation3 + $0x5a0] sm:$0xff]
          %v533 = vld [vmem:[#allocation3 + $0x5a8] sm:$0xff]
          %v534 = vld [vmem:[#allocation3 + $0x5b0] sm:$0xff]
          %v535 = vld [vmem:[#allocation3 + $0x5b8] sm:$0xff]
          %v536 = vld [vmem:[#allocation3 + $0x5c0] sm:$0xff]
          %v537 = vld [vmem:[#allocation3 + $0x5c8] sm:$0xff]
          %v538 = vld [vmem:[#allocation3 + $0x5d0] sm:$0xff]
          %v539 = vld [vmem:[#allocation3 + $0x5d8] sm:$0xff]
          %v540 = vld [vmem:[#allocation3 + $0x5e0] sm:$0xff]
          %v541 = vld [vmem:[#allocation3 + $0x5e8] sm:$0xff]
          %v542 = vld [vmem:[#allocation3 + $0x5f0] sm:$0xff]
          %v543 = vld [vmem:[#allocation3 + $0x5f8] sm:$0xff]
          %v544 = vpack.c.bf16 %v358, %v352
          %v545 = vpack.c.bf16 %v359, %v353
          %v546 = vpack.c.bf16 %v360, %v354
          %v547 = vpack.c.bf16 %v361, %v355
          %v548 = vpack.c.bf16 %v362, %v356
          %v549 = vpack.c.bf16 %v363, %v357
          %v550 = vpack.c.bf16 %v370, %v364
          %v551 = vpack.c.bf16 %v371, %v365
          %v552 = vpack.c.bf16 %v372, %v366
          %v553 = vpack.c.bf16 %v373, %v367
          %v554 = vpack.c.bf16 %v374, %v368
          %v555 = vpack.c.bf16 %v375, %v369
          %v556 = vpack.c.bf16 %v382, %v376
          %v557 = vpack.c.bf16 %v383, %v377
          %v558 = vpack.c.bf16 %v384, %v378
          %v559 = vpack.c.bf16 %v385, %v379
          %v560 = vpack.c.bf16 %v386, %v380
          %v561 = vpack.c.bf16 %v387, %v381
          %v562 = vpack.c.bf16 %v394, %v388
          %v563 = vpack.c.bf16 %v395, %v389
          %v564 = vpack.c.bf16 %v396, %v390
          %v565 = vpack.c.bf16 %v397, %v391
          %v566 = vpack.c.bf16 %v398, %v392
          %v567 = vpack.c.bf16 %v399, %v393
          %v568 = vpack.c.bf16 %v406, %v400
          %v569 = vpack.c.bf16 %v407, %v401
          %v570 = vpack.c.bf16 %v408, %v402
          %v571 = vpack.c.bf16 %v409, %v403
          %v572 = vpack.c.bf16 %v410, %v404
          %v573 = vpack.c.bf16 %v411, %v405
          %v574 = vpack.c.bf16 %v418, %v412
          %v575 = vpack.c.bf16 %v419, %v413
          %v576 = vpack.c.bf16 %v420, %v414
          %v577 = vpack.c.bf16 %v421, %v415
          %v578 = vpack.c.bf16 %v422, %v416
          %v579 = vpack.c.bf16 %v423, %v417
          %v580 = vpack.c.bf16 %v430, %v424
          %v581 = vpack.c.bf16 %v431, %v425
          %v582 = vpack.c.bf16 %v432, %v426
          %v583 = vpack.c.bf16 %v433, %v427
          %v584 = vpack.c.bf16 %v434, %v428
          %v585 = vpack.c.bf16 %v435, %v429
          %v586 = vpack.c.bf16 %v442, %v436
          %v587 = vpack.c.bf16 %v443, %v437
          %v588 = vpack.c.bf16 %v444, %v438
          %v589 = vpack.c.bf16 %v445, %v439
          %v590 = vpack.c.bf16 %v446, %v440
          %v591 = vpack.c.bf16 %v447, %v441
          %v592 = vpack.c.bf16 %v454, %v448
          %v593 = vpack.c.bf16 %v455, %v449
          %v594 = vpack.c.bf16 %v456, %v450
          %v595 = vpack.c.bf16 %v457, %v451
          %v596 = vpack.c.bf16 %v458, %v452
          %v597 = vpack.c.bf16 %v459, %v453
          %v598 = vpack.c.bf16 %v466, %v460
          %v599 = vpack.c.bf16 %v467, %v461
          %v600 = vpack.c.bf16 %v468, %v462
          %v601 = vpack.c.bf16 %v469, %v463
          %v602 = vpack.c.bf16 %v470, %v464
          %v603 = vpack.c.bf16 %v471, %v465
          %v604 = vpack.c.bf16 %v478, %v472
          %v605 = vpack.c.bf16 %v479, %v473
          %v606 = vpack.c.bf16 %v480, %v474
          %v607 = vpack.c.bf16 %v481, %v475
          %v608 = vpack.c.bf16 %v482, %v476
          %v609 = vpack.c.bf16 %v483, %v477
          %v610 = vpack.c.bf16 %v490, %v484
          %v611 = vpack.c.bf16 %v491, %v485
          %v612 = vpack.c.bf16 %v492, %v486
          %v613 = vpack.c.bf16 %v493, %v487
          %v614 = vpack.c.bf16 %v494, %v488
          %v615 = vpack.c.bf16 %v495, %v489
          %v616 = vpack.c.bf16 %v502, %v496
          %v617 = vpack.c.bf16 %v503, %v497
          %v618 = vpack.c.bf16 %v504, %v498
          %v619 = vpack.c.bf16 %v505, %v499
          %v620 = vpack.c.bf16 %v506, %v500
          %v621 = vpack.c.bf16 %v507, %v501
          %v622 = vpack.c.bf16 %v514, %v508
          %v623 = vpack.c.bf16 %v515, %v509
          %v624 = vpack.c.bf16 %v516, %v510
          %v625 = vpack.c.bf16 %v517, %v511
          %v626 = vpack.c.bf16 %v518, %v512
          %v627 = vpack.c.bf16 %v519, %v513
          %v628 = vpack.c.bf16 %v526, %v520
          %v629 = vpack.c.bf16 %v527, %v521
          %v630 = vpack.c.bf16 %v528, %v522
          %v631 = vpack.c.bf16 %v529, %v523
          %v632 = vpack.c.bf16 %v530, %v524
          %v633 = vpack.c.bf16 %v531, %v525
          %v634 = vpack.c.bf16 %v538, %v532
          %v635 = vpack.c.bf16 %v539, %v533
          %v636 = vpack.c.bf16 %v540, %v534
          %v637 = vpack.c.bf16 %v541, %v535
          %v638 = vpack.c.bf16 %v542, %v536
          %v639 = vpack.c.bf16 %v543, %v537
          %v640 = vld [vmem:[#allocation6] sm:$0xff]
          %v641 = vld [vmem:[#allocation6 + $0x8] sm:$0xff]
          %v642 = vld [vmem:[#allocation6 + $0x10] sm:$0xff]
          %v643 = vld [vmem:[#allocation6 + $0x18] sm:$0xff]
          %v644 = vld [vmem:[#allocation6 + $0x20] sm:$0xff]
          %v645 = vld [vmem:[#allocation6 + $0x28] sm:$0xff]
          %v646 = vld [vmem:[#allocation6 + $0x30] sm:$0xff]
          %v647 = vld [vmem:[#allocation6 + $0x38] sm:$0xff]
          %v648 = vld [vmem:[#allocation6 + $0x40] sm:$0xff]
          %v649 = vld [vmem:[#allocation6 + $0x48] sm:$0xff]
          %v650 = vld [vmem:[#allocation6 + $0x50] sm:$0xff]
          %v651 = vld [vmem:[#allocation6 + $0x58] sm:$0xff]
          %v652 = vld [vmem:[#allocation6 + $0x60] sm:$0xff]
          %v653 = vld [vmem:[#allocation6 + $0x68] sm:$0xff]
          %v654 = vld [vmem:[#allocation6 + $0x70] sm:$0xff]
          %v655 = vld [vmem:[#allocation6 + $0x78] sm:$0xff]
          %v656 = vld [vmem:[#allocation6 + $0x80] sm:$0xff]
          %v657 = vld [vmem:[#allocation6 + $0x88] sm:$0xff]
          %v658 = vld [vmem:[#allocation6 + $0x90] sm:$0xff]
          %v659 = vld [vmem:[#allocation6 + $0x98] sm:$0xff]
          %v660 = vld [vmem:[#allocation6 + $0xa0] sm:$0xff]
          %v661 = vld [vmem:[#allocation6 + $0xa8] sm:$0xff]
          %v662 = vld [vmem:[#allocation6 + $0xb0] sm:$0xff]
          %v663 = vld [vmem:[#allocation6 + $0xb8] sm:$0xff]
          %v664 = vld [vmem:[#allocation6 + $0xc0] sm:$0xff]
          %v665 = vld [vmem:[#allocation6 + $0xc8] sm:$0xff]
          %v666 = vld [vmem:[#allocation6 + $0xd0] sm:$0xff]
          %v667 = vld [vmem:[#allocation6 + $0xd8] sm:$0xff]
          %v668 = vld [vmem:[#allocation6 + $0xe0] sm:$0xff]
          %v669 = vld [vmem:[#allocation6 + $0xe8] sm:$0xff]
          %v670 = vld [vmem:[#allocation6 + $0xf0] sm:$0xff]
          %v671 = vld [vmem:[#allocation6 + $0xf8] sm:$0xff]
          %v672 = vld [vmem:[#allocation6 + $0x100] sm:$0xff]
          %v673 = vld [vmem:[#allocation6 + $0x108] sm:$0xff]
          %v674 = vld [vmem:[#allocation6 + $0x110] sm:$0xff]
          %v675 = vld [vmem:[#allocation6 + $0x118] sm:$0xff]
          %v676 = vld [vmem:[#allocation6 + $0x120] sm:$0xff]
          %v677 = vld [vmem:[#allocation6 + $0x128] sm:$0xff]
          %v678 = vld [vmem:[#allocation6 + $0x130] sm:$0xff]
          %v679 = vld [vmem:[#allocation6 + $0x138] sm:$0xff]
          %v680 = vld [vmem:[#allocation6 + $0x140] sm:$0xff]
          %v681 = vld [vmem:[#allocation6 + $0x148] sm:$0xff]
          %v682 = vld [vmem:[#allocation6 + $0x150] sm:$0xff]
          %v683 = vld [vmem:[#allocation6 + $0x158] sm:$0xff]
          %v684 = vld [vmem:[#allocation6 + $0x160] sm:$0xff]
          %v685 = vld [vmem:[#allocation6 + $0x168] sm:$0xff]
          %v686 = vld [vmem:[#allocation6 + $0x170] sm:$0xff]
          %v687 = vld [vmem:[#allocation6 + $0x178] sm:$0xff]
          %v688 = vld [vmem:[#allocation6 + $0x180] sm:$0xff]
          %v689 = vld [vmem:[#allocation6 + $0x188] sm:$0xff]
          %v690 = vld [vmem:[#allocation6 + $0x190] sm:$0xff]
          %v691 = vld [vmem:[#allocation6 + $0x198] sm:$0xff]
          %v692 = vld [vmem:[#allocation6 + $0x1a0] sm:$0xff]
          %v693 = vld [vmem:[#allocation6 + $0x1a8] sm:$0xff]
          %v694 = vld [vmem:[#allocation6 + $0x1b0] sm:$0xff]
          %v695 = vld [vmem:[#allocation6 + $0x1b8] sm:$0xff]
          %v696 = vld [vmem:[#allocation6 + $0x1c0] sm:$0xff]
          %v697 = vld [vmem:[#allocation6 + $0x1c8] sm:$0xff]
          %v698 = vld [vmem:[#allocation6 + $0x1d0] sm:$0xff]
          %v699 = vld [vmem:[#allocation6 + $0x1d8] sm:$0xff]
          %v700 = vld [vmem:[#allocation6 + $0x1e0] sm:$0xff]
          %v701 = vld [vmem:[#allocation6 + $0x1e8] sm:$0xff]
          %v702 = vld [vmem:[#allocation6 + $0x1f0] sm:$0xff]
          %v703 = vld [vmem:[#allocation6 + $0x1f8] sm:$0xff]
          %v704 = vld [vmem:[#allocation6 + $0x200] sm:$0xff]
          %v705 = vld [vmem:[#allocation6 + $0x208] sm:$0xff]
          %v706 = vld [vmem:[#allocation6 + $0x210] sm:$0xff]
          %v707 = vld [vmem:[#allocation6 + $0x218] sm:$0xff]
          %v708 = vld [vmem:[#allocation6 + $0x220] sm:$0xff]
          %v709 = vld [vmem:[#allocation6 + $0x228] sm:$0xff]
          %v710 = vld [vmem:[#allocation6 + $0x230] sm:$0xff]
          %v711 = vld [vmem:[#allocation6 + $0x238] sm:$0xff]
          %v712 = vld [vmem:[#allocation6 + $0x240] sm:$0xff]
          %v713 = vld [vmem:[#allocation6 + $0x248] sm:$0xff]
          %v714 = vld [vmem:[#allocation6 + $0x250] sm:$0xff]
          %v715 = vld [vmem:[#allocation6 + $0x258] sm:$0xff]
          %v716 = vld [vmem:[#allocation6 + $0x260] sm:$0xff]
          %v717 = vld [vmem:[#allocation6 + $0x268] sm:$0xff]
          %v718 = vld [vmem:[#allocation6 + $0x270] sm:$0xff]
          %v719 = vld [vmem:[#allocation6 + $0x278] sm:$0xff]
          %v720 = vld [vmem:[#allocation6 + $0x280] sm:$0xff]
          %v721 = vld [vmem:[#allocation6 + $0x288] sm:$0xff]
          %v722 = vld [vmem:[#allocation6 + $0x290] sm:$0xff]
          %v723 = vld [vmem:[#allocation6 + $0x298] sm:$0xff]
          %v724 = vld [vmem:[#allocation6 + $0x2a0] sm:$0xff]
          %v725 = vld [vmem:[#allocation6 + $0x2a8] sm:$0xff]
          %v726 = vld [vmem:[#allocation6 + $0x2b0] sm:$0xff]
          %v727 = vld [vmem:[#allocation6 + $0x2b8] sm:$0xff]
          %v728 = vld [vmem:[#allocation6 + $0x2c0] sm:$0xff]
          %v729 = vld [vmem:[#allocation6 + $0x2c8] sm:$0xff]
          %v730 = vld [vmem:[#allocation6 + $0x2d0] sm:$0xff]
          %v731 = vld [vmem:[#allocation6 + $0x2d8] sm:$0xff]
          %v732 = vld [vmem:[#allocation6 + $0x2e0] sm:$0xff]
          %v733 = vld [vmem:[#allocation6 + $0x2e8] sm:$0xff]
          %v734 = vld [vmem:[#allocation6 + $0x2f0] sm:$0xff]
          %v735 = vld [vmem:[#allocation6 + $0x2f8] sm:$0xff]
          %v736 = vld [vmem:[#allocation8] sm:$0x3]
          %v738 = vlaneseq
          %v739 = vshrl.u32 %v738, 7
          %v740 = vsub.s32 0, %v739
          %v741 = vrot.slane %v736, %v740
          %v742 = vlaneseq
          %v743 = vshrl.u32 %v742, 7
          %v744 = vsub.s32 1, %v743
          %v745 = vrot.slane %v736, %v744
          %v844 = vunpack.c.l.b16 %v640
          %v845 = vunpack.c.h.b16 %v640
          %v846 = vunpack.c.l.b16 %v641
          %v847 = vunpack.c.h.b16 %v641
          %v848 = vunpack.c.l.b16 %v642
          %v849 = vunpack.c.h.b16 %v642
          %v850 = vunpack.c.l.b16 %v643
          %v851 = vunpack.c.h.b16 %v643
          %v852 = vunpack.c.l.b16 %v644
          %v853 = vunpack.c.h.b16 %v644
          %v854 = vunpack.c.l.b16 %v645
          %v855 = vunpack.c.h.b16 %v645
          %v856 = vunpack.c.l.b16 %v646
          %v857 = vunpack.c.h.b16 %v646
          %v858 = vunpack.c.l.b16 %v647
          %v859 = vunpack.c.h.b16 %v647
          %v860 = vunpack.c.l.b16 %v648
          %v861 = vunpack.c.h.b16 %v648
          %v862 = vunpack.c.l.b16 %v649
          %v863 = vunpack.c.h.b16 %v649
          %v864 = vunpack.c.l.b16 %v650
          %v865 = vunpack.c.h.b16 %v650
          %v866 = vunpack.c.l.b16 %v651
          %v867 = vunpack.c.h.b16 %v651
          %v868 = vunpack.c.l.b16 %v652
          %v869 = vunpack.c.h.b16 %v652
          %v870 = vunpack.c.l.b16 %v653
          %v871 = vunpack.c.h.b16 %v653
          %v872 = vunpack.c.l.b16 %v654
          %v873 = vunpack.c.h.b16 %v654
          %v874 = vunpack.c.l.b16 %v655
          %v875 = vunpack.c.h.b16 %v655
          %v876 = vunpack.c.l.b16 %v656
          %v877 = vunpack.c.h.b16 %v656
          %v878 = vunpack.c.l.b16 %v657
          %v879 = vunpack.c.h.b16 %v657
          %v880 = vunpack.c.l.b16 %v658
          %v881 = vunpack.c.h.b16 %v658
          %v882 = vunpack.c.l.b16 %v659
          %v883 = vunpack.c.h.b16 %v659
          %v884 = vunpack.c.l.b16 %v660
          %v885 = vunpack.c.h.b16 %v660
          %v886 = vunpack.c.l.b16 %v661
          %v887 = vunpack.c.h.b16 %v661
          %v888 = vunpack.c.l.b16 %v662
          %v889 = vunpack.c.h.b16 %v662
          %v890 = vunpack.c.l.b16 %v663
          %v891 = vunpack.c.h.b16 %v663
          %v892 = vunpack.c.l.b16 %v664
          %v893 = vunpack.c.h.b16 %v664
          %v894 = vunpack.c.l.b16 %v665
          %v895 = vunpack.c.h.b16 %v665
          %v896 = vunpack.c.l.b16 %v666
          %v897 = vunpack.c.h.b16 %v666
          %v898 = vunpack.c.l.b16 %v667
          %v899 = vunpack.c.h.b16 %v667
          %v900 = vunpack.c.l.b16 %v668
          %v901 = vunpack.c.h.b16 %v668
          %v902 = vunpack.c.l.b16 %v669
          %v903 = vunpack.c.h.b16 %v669
          %v904 = vunpack.c.l.b16 %v670
          %v905 = vunpack.c.h.b16 %v670
          %v906 = vunpack.c.l.b16 %v671
          %v907 = vunpack.c.h.b16 %v671
          %v908 = vunpack.c.l.b16 %v672
          %v909 = vunpack.c.h.b16 %v672
          %v910 = vunpack.c.l.b16 %v673
          %v911 = vunpack.c.h.b16 %v673
          %v912 = vunpack.c.l.b16 %v674
          %v913 = vunpack.c.h.b16 %v674
          %v914 = vunpack.c.l.b16 %v675
          %v915 = vunpack.c.h.b16 %v675
          %v916 = vunpack.c.l.b16 %v676
          %v917 = vunpack.c.h.b16 %v676
          %v918 = vunpack.c.l.b16 %v677
          %v919 = vunpack.c.h.b16 %v677
          %v920 = vunpack.c.l.b16 %v678
          %v921 = vunpack.c.h.b16 %v678
          %v922 = vunpack.c.l.b16 %v679
          %v923 = vunpack.c.h.b16 %v679
          %v924 = vunpack.c.l.b16 %v680
          %v925 = vunpack.c.h.b16 %v680
          %v926 = vunpack.c.l.b16 %v681
          %v927 = vunpack.c.h.b16 %v681
          %v928 = vunpack.c.l.b16 %v682
          %v929 = vunpack.c.h.b16 %v682
          %v930 = vunpack.c.l.b16 %v683
          %v931 = vunpack.c.h.b16 %v683
          %v932 = vunpack.c.l.b16 %v684
          %v933 = vunpack.c.h.b16 %v684
          %v934 = vunpack.c.l.b16 %v685
          %v935 = vunpack.c.h.b16 %v685
          %v936 = vunpack.c.l.b16 %v686
          %v937 = vunpack.c.h.b16 %v686
          %v938 = vunpack.c.l.b16 %v687
          %v939 = vunpack.c.h.b16 %v687
          %v940 = vunpack.c.l.b16 %v688
          %v941 = vunpack.c.h.b16 %v688
          %v942 = vunpack.c.l.b16 %v689
          %v943 = vunpack.c.h.b16 %v689
          %v944 = vunpack.c.l.b16 %v690
          %v945 = vunpack.c.h.b16 %v690
          %v946 = vunpack.c.l.b16 %v691
          %v947 = vunpack.c.h.b16 %v691
          %v948 = vunpack.c.l.b16 %v692
          %v949 = vunpack.c.h.b16 %v692
          %v950 = vunpack.c.l.b16 %v693
          %v951 = vunpack.c.h.b16 %v693
          %v952 = vunpack.c.l.b16 %v694
          %v953 = vunpack.c.h.b16 %v694
          %v954 = vunpack.c.l.b16 %v695
          %v955 = vunpack.c.h.b16 %v695
          %v956 = vunpack.c.l.b16 %v696
          %v957 = vunpack.c.h.b16 %v696
          %v958 = vunpack.c.l.b16 %v697
          %v959 = vunpack.c.h.b16 %v697
          %v960 = vunpack.c.l.b16 %v698
          %v961 = vunpack.c.h.b16 %v698
          %v962 = vunpack.c.l.b16 %v699
          %v963 = vunpack.c.h.b16 %v699
          %v964 = vunpack.c.l.b16 %v700
          %v965 = vunpack.c.h.b16 %v700
          %v966 = vunpack.c.l.b16 %v701
          %v967 = vunpack.c.h.b16 %v701
          %v968 = vunpack.c.l.b16 %v702
          %v969 = vunpack.c.h.b16 %v702
          %v970 = vunpack.c.l.b16 %v703
          %v971 = vunpack.c.h.b16 %v703
          %v972 = vunpack.c.l.b16 %v704
          %v973 = vunpack.c.h.b16 %v704
          %v974 = vunpack.c.l.b16 %v705
          %v975 = vunpack.c.h.b16 %v705
          %v976 = vunpack.c.l.b16 %v706
          %v977 = vunpack.c.h.b16 %v706
          %v978 = vunpack.c.l.b16 %v707
          %v979 = vunpack.c.h.b16 %v707
          %v980 = vunpack.c.l.b16 %v708
          %v981 = vunpack.c.h.b16 %v708
          %v982 = vunpack.c.l.b16 %v709
          %v983 = vunpack.c.h.b16 %v709
          %v984 = vunpack.c.l.b16 %v710
          %v985 = vunpack.c.h.b16 %v710
          %v986 = vunpack.c.l.b16 %v711
          %v987 = vunpack.c.h.b16 %v711
          %v988 = vunpack.c.l.b16 %v712
          %v989 = vunpack.c.h.b16 %v712
          %v990 = vunpack.c.l.b16 %v713
          %v991 = vunpack.c.h.b16 %v713
          %v992 = vunpack.c.l.b16 %v714
          %v993 = vunpack.c.h.b16 %v714
          %v994 = vunpack.c.l.b16 %v715
          %v995 = vunpack.c.h.b16 %v715
          %v996 = vunpack.c.l.b16 %v716
          %v997 = vunpack.c.h.b16 %v716
          %v998 = vunpack.c.l.b16 %v717
          %v999 = vunpack.c.h.b16 %v717
          %v1000 = vunpack.c.l.b16 %v718
          %v1001 = vunpack.c.h.b16 %v718
          %v1002 = vunpack.c.l.b16 %v719
          %v1003 = vunpack.c.h.b16 %v719
          %v1004 = vunpack.c.l.b16 %v720
          %v1005 = vunpack.c.h.b16 %v720
          %v1006 = vunpack.c.l.b16 %v721
          %v1007 = vunpack.c.h.b16 %v721
          %v1008 = vunpack.c.l.b16 %v722
          %v1009 = vunpack.c.h.b16 %v722
          %v1010 = vunpack.c.l.b16 %v723
          %v1011 = vunpack.c.h.b16 %v723
          %v1012 = vunpack.c.l.b16 %v724
          %v1013 = vunpack.c.h.b16 %v724
          %v1014 = vunpack.c.l.b16 %v725
          %v1015 = vunpack.c.h.b16 %v725
          %v1016 = vunpack.c.l.b16 %v726
          %v1017 = vunpack.c.h.b16 %v726
          %v1018 = vunpack.c.l.b16 %v727
          %v1019 = vunpack.c.h.b16 %v727
          %v1020 = vunpack.c.l.b16 %v728
          %v1021 = vunpack.c.h.b16 %v728
          %v1022 = vunpack.c.l.b16 %v729
          %v1023 = vunpack.c.h.b16 %v729
          %v1024 = vunpack.c.l.b16 %v730
          %v1025 = vunpack.c.h.b16 %v730
          %v1026 = vunpack.c.l.b16 %v731
          %v1027 = vunpack.c.h.b16 %v731
          %v1028 = vunpack.c.l.b16 %v732
          %v1029 = vunpack.c.h.b16 %v732
          %v1030 = vunpack.c.l.b16 %v733
          %v1031 = vunpack.c.h.b16 %v733
          %v1032 = vunpack.c.l.b16 %v734
          %v1033 = vunpack.c.h.b16 %v734
          %v1034 = vunpack.c.l.b16 %v735
          %v1035 = vunpack.c.h.b16 %v735
          %v1036 = vpack.c.b16 %v846, %v844
          %v1037 = vpack.c.b16 %v847, %v845
          %v1038 = vpack.c.b16 %v850, %v848
          %v1039 = vpack.c.b16 %v851, %v849
          %v1040 = vpack.c.b16 %v854, %v852
          %v1041 = vpack.c.b16 %v855, %v853
          %v1042 = vpack.c.b16 %v858, %v856
          %v1043 = vpack.c.b16 %v859, %v857
          %v1044 = vpack.c.b16 %v862, %v860
          %v1045 = vpack.c.b16 %v863, %v861
          %v1046 = vpack.c.b16 %v866, %v864
          %v1047 = vpack.c.b16 %v867, %v865
          %v1048 = vpack.c.b16 %v870, %v868
          %v1049 = vpack.c.b16 %v871, %v869
          %v1050 = vpack.c.b16 %v874, %v872
          %v1051 = vpack.c.b16 %v875, %v873
          %v1052 = vpack.c.b16 %v878, %v876
          %v1053 = vpack.c.b16 %v879, %v877
          %v1054 = vpack.c.b16 %v882, %v880
          %v1055 = vpack.c.b16 %v883, %v881
          %v1056 = vpack.c.b16 %v886, %v884
          %v1057 = vpack.c.b16 %v887, %v885
          %v1058 = vpack.c.b16 %v890, %v888
          %v1059 = vpack.c.b16 %v891, %v889
          %v1060 = vpack.c.b16 %v894, %v892
          %v1061 = vpack.c.b16 %v895, %v893
          %v1062 = vpack.c.b16 %v898, %v896
          %v1063 = vpack.c.b16 %v899, %v897
          %v1064 = vpack.c.b16 %v902, %v900
          %v1065 = vpack.c.b16 %v903, %v901
          %v1066 = vpack.c.b16 %v906, %v904
          %v1067 = vpack.c.b16 %v907, %v905
          %v1068 = vpack.c.b16 %v910, %v908
          %v1069 = vpack.c.b16 %v911, %v909
          %v1070 = vpack.c.b16 %v914, %v912
          %v1071 = vpack.c.b16 %v915, %v913
          %v1072 = vpack.c.b16 %v918, %v916
          %v1073 = vpack.c.b16 %v919, %v917
          %v1074 = vpack.c.b16 %v922, %v920
          %v1075 = vpack.c.b16 %v923, %v921
          %v1076 = vpack.c.b16 %v926, %v924
          %v1077 = vpack.c.b16 %v927, %v925
          %v1078 = vpack.c.b16 %v930, %v928
          %v1079 = vpack.c.b16 %v931, %v929
          %v1080 = vpack.c.b16 %v934, %v932
          %v1081 = vpack.c.b16 %v935, %v933
          %v1082 = vpack.c.b16 %v938, %v936
          %v1083 = vpack.c.b16 %v939, %v937
          %v1084 = vpack.c.b16 %v942, %v940
          %v1085 = vpack.c.b16 %v943, %v941
          %v1086 = vpack.c.b16 %v946, %v944
          %v1087 = vpack.c.b16 %v947, %v945
          %v1088 = vpack.c.b16 %v950, %v948
          %v1089 = vpack.c.b16 %v951, %v949
          %v1090 = vpack.c.b16 %v954, %v952
          %v1091 = vpack.c.b16 %v955, %v953
          %v1092 = vpack.c.b16 %v958, %v956
          %v1093 = vpack.c.b16 %v959, %v957
          %v1094 = vpack.c.b16 %v962, %v960
          %v1095 = vpack.c.b16 %v963, %v961
          %v1096 = vpack.c.b16 %v966, %v964
          %v1097 = vpack.c.b16 %v967, %v965
          %v1098 = vpack.c.b16 %v970, %v968
          %v1099 = vpack.c.b16 %v971, %v969
          %v1100 = vpack.c.b16 %v974, %v972
          %v1101 = vpack.c.b16 %v975, %v973
          %v1102 = vpack.c.b16 %v978, %v976
          %v1103 = vpack.c.b16 %v979, %v977
          %v1104 = vpack.c.b16 %v982, %v980
          %v1105 = vpack.c.b16 %v983, %v981
          %v1106 = vpack.c.b16 %v986, %v984
          %v1107 = vpack.c.b16 %v987, %v985
          %v1108 = vpack.c.b16 %v990, %v988
          %v1109 = vpack.c.b16 %v991, %v989
          %v1110 = vpack.c.b16 %v994, %v992
          %v1111 = vpack.c.b16 %v995, %v993
          %v1112 = vpack.c.b16 %v998, %v996
          %v1113 = vpack.c.b16 %v999, %v997
          %v1114 = vpack.c.b16 %v1002, %v1000
          %v1115 = vpack.c.b16 %v1003, %v1001
          %v1116 = vpack.c.b16 %v1006, %v1004
          %v1117 = vpack.c.b16 %v1007, %v1005
          %v1118 = vpack.c.b16 %v1010, %v1008
          %v1119 = vpack.c.b16 %v1011, %v1009
          %v1120 = vpack.c.b16 %v1014, %v1012
          %v1121 = vpack.c.b16 %v1015, %v1013
          %v1122 = vpack.c.b16 %v1018, %v1016
          %v1123 = vpack.c.b16 %v1019, %v1017
          %v1124 = vpack.c.b16 %v1022, %v1020
          %v1125 = vpack.c.b16 %v1023, %v1021
          %v1126 = vpack.c.b16 %v1026, %v1024
          %v1127 = vpack.c.b16 %v1027, %v1025
          %v1128 = vpack.c.b16 %v1030, %v1028
          %v1129 = vpack.c.b16 %v1031, %v1029
          %v1130 = vpack.c.b16 %v1034, %v1032
          %v1131 = vpack.c.b16 %v1035, %v1033
          %1228 = vmatprep.subr.bf16.mxu0 %v1037
          %1229 = vmatpush1.bf16.msra.mxu0 %v1036
          %1230 = vmatprep.subr.bf16.mxu0 %v1039
          %1231 = vmatpush1.bf16.msra.mxu0 %v1038
          %1232 = vmatprep.subr.bf16.mxu0 %v1041
          %1233 = vmatpush1.bf16.msra.mxu0 %v1040
          %1234 = vmatprep.subr.bf16.mxu0 %v1043
          %1235 = vmatpush1.bf16.msra.mxu0 %v1042
          %1236 = vmatprep.subr.bf16.mxu0 %v1045
          %1237 = vmatpush1.bf16.msra.mxu0 %v1044
          %1238 = vmatprep.subr.bf16.mxu0 %v1047
          %1239 = vmatpush1.bf16.msra.mxu0 %v1046
          %1240 = vmatprep.subr.bf16.mxu0 %v1049
          %1241 = vmatpush1.bf16.msra.mxu0 %v1048
          %1242 = vmatprep.subr.bf16.mxu0 %v1051
          %1243 = vmatpush1.bf16.msra.mxu0 %v1050
          %1244 = vmatprep.subr.bf16.mxu0 %v1053
          %1245 = vmatpush1.bf16.msra.mxu0 %v1052
          %1246 = vmatprep.subr.bf16.mxu0 %v1055
          %1247 = vmatpush1.bf16.msra.mxu0 %v1054
          %1248 = vmatprep.subr.bf16.mxu0 %v1057
          %1249 = vmatpush1.bf16.msra.mxu0 %v1056
          %1250 = vmatprep.subr.bf16.mxu0 %v1059
          %1251 = vmatpush1.bf16.msra.mxu0 %v1058
          %1252 = vmatprep.subr.bf16.mxu0 %v1061
          %1253 = vmatpush1.bf16.msra.mxu0 %v1060
          %1254 = vmatprep.subr.bf16.mxu0 %v1063
          %1255 = vmatpush1.bf16.msra.mxu0 %v1062
          %1256 = vmatprep.subr.bf16.mxu0 %v1065
          %1257 = vmatpush1.bf16.msra.mxu0 %v1064
          %1258 = vmatprep.subr.bf16.mxu0 %v1067
          %1259 = vmatpush1.bf16.msra.mxu0 %v1066
          %1260 = vmatprep.mubr.bf16.mxu0 %v545
          %1261 = vmatmul.mubr.bf16.gmra.mrb[0].mxu0 %v544
          %v1262 = vpop.f32.mrb[0].mxu0
          %v1263 = vadd.f32 %v741, %v1262
          %v1264 = vpop.f32.mrb[0].mxu0
          %v1265 = vadd.f32 %v745, %v1264
          %v1266 = vpop.f32.mrb[0].mxu0
          %v1267 = vadd.f32 %v741, %v1266
          %v1268 = vpop.f32.mrb[0].mxu0
          %v1269 = vadd.f32 %v745, %v1268
          %1270 = vmatprep.mubr.bf16.mxu0 %v551
          %1271 = vmatmul.mubr.bf16.gmra.mrb[0].mxu0 %v550
          %v1272 = vpop.f32.mrb[0].mxu0
          %v1273 = vadd.f32 %v741, %v1272
          %v1274 = vpop.f32.mrb[0].mxu0
          %v1275 = vadd.f32 %v745, %v1274
          %v1276 = vpop.f32.mrb[0].mxu0
          %v1277 = vadd.f32 %v741, %v1276
          %v1278 = vpop.f32.mrb[0].mxu0
          %v1279 = vadd.f32 %v745, %v1278
          %1280 = vmatprep.mubr.bf16.mxu0 %v557
          %1281 = vmatmul.mubr.bf16.gmra.mrb[0].mxu0 %v556
          %v1282 = vpop.f32.mrb[0].mxu0
          %v1283 = vadd.f32 %v741, %v1282
          %v1284 = vpop.f32.mrb[0].mxu0
          %v1285 = vadd.f32 %v745, %v1284
          %v1286 = vpop.f32.mrb[0].mxu0
          %v1287 = vadd.f32 %v741, %v1286
          %v1288 = vpop.f32.mrb[0].mxu0
          %v1289 = vadd.f32 %v745, %v1288
          %1290 = vmatprep.mubr.bf16.mxu0 %v563
          %1291 = vmatmul.mubr.bf16.gmra.mrb[0].mxu0 %v562
          %v1292 = vpop.f32.mrb[0].mxu0
          %v1293 = vadd.f32 %v741, %v1292
          %v1294 = vpop.f32.mrb[0].mxu0
          %v1295 = vadd.f32 %v745, %v1294
          %v1296 = vpop.f32.mrb[0].mxu0
          %v1297 = vadd.f32 %v741, %v1296
          %v1298 = vpop.f32.mrb[0].mxu0
          %v1299 = vadd.f32 %v745, %v1298
          %1300 = vmatprep.mubr.bf16.mxu0 %v569
          %1301 = vmatmul.mubr.bf16.gmra.mrb[0].mxu0 %v568
          %v1302 = vpop.f32.mrb[0].mxu0
          %v1303 = vadd.f32 %v741, %v1302
          %v1304 = vpop.f32.mrb[0].mxu0
          %v1305 = vadd.f32 %v745, %v1304
          %v1306 = vpop.f32.mrb[0].mxu0
          %v1307 = vadd.f32 %v741, %v1306
          %v1308 = vpop.f32.mrb[0].mxu0
          %v1309 = vadd.f32 %v745, %v1308
          %1310 = vmatprep.mubr.bf16.mxu0 %v575
          %1311 = vmatmul.mubr.bf16.gmra.mrb[0].mxu0 %v574
          %v1312 = vpop.f32.mrb[0].mxu0
          %v1313 = vadd.f32 %v741, %v1312
          %v1314 = vpop.f32.mrb[0].mxu0
          %v1315 = vadd.f32 %v745, %v1314
          %v1316 = vpop.f32.mrb[0].mxu0
          %v1317 = vadd.f32 %v741, %v1316
          %v1318 = vpop.f32.mrb[0].mxu0
          %v1319 = vadd.f32 %v745, %v1318
          %1320 = vmatprep.mubr.bf16.mxu0 %v581
          %1321 = vmatmul.mubr.bf16.gmra.mrb[0].mxu0 %v580
          %v1322 = vpop.f32.mrb[0].mxu0
          %v1323 = vadd.f32 %v741, %v1322
          %v1324 = vpop.f32.mrb[0].mxu0
          %v1325 = vadd.f32 %v745, %v1324
          %v1326 = vpop.f32.mrb[0].mxu0
          %v1327 = vadd.f32 %v741, %v1326
          %v1328 = vpop.f32.mrb[0].mxu0
          %v1329 = vadd.f32 %v745, %v1328
          %1330 = vmatprep.mubr.bf16.mxu0 %v587
          %1331 = vmatmul.mubr.bf16.gmra.mrb[0].mxu0 %v586
          %v1332 = vpop.f32.mrb[0].mxu0
          %v1333 = vadd.f32 %v741, %v1332
          %v1334 = vpop.f32.mrb[0].mxu0
          %v1335 = vadd.f32 %v745, %v1334
          %v1336 = vpop.f32.mrb[0].mxu0
          %v1337 = vadd.f32 %v741, %v1336
          %v1338 = vpop.f32.mrb[0].mxu0
          %v1339 = vadd.f32 %v745, %v1338
          %1340 = vmatprep.mubr.bf16.mxu0 %v593
          %1341 = vmatmul.mubr.bf16.gmra.mrb[0].mxu0 %v592
          %v1342 = vpop.f32.mrb[0].mxu0
          %v1343 = vadd.f32 %v741, %v1342
          %v1344 = vpop.f32.mrb[0].mxu0
          %v1345 = vadd.f32 %v745, %v1344
          %v1346 = vpop.f32.mrb[0].mxu0
          %v1347 = vadd.f32 %v741, %v1346
          %v1348 = vpop.f32.mrb[0].mxu0
          %v1349 = vadd.f32 %v745, %v1348
          %1350 = vmatprep.mubr.bf16.mxu0 %v599
          %1351 = vmatmul.mubr.bf16.gmra.mrb[0].mxu0 %v598
          %v1352 = vpop.f32.mrb[0].mxu0
          %v1353 = vadd.f32 %v741, %v1352
          %v1354 = vpop.f32.mrb[0].mxu0
          %v1355 = vadd.f32 %v745, %v1354
          %v1356 = vpop.f32.mrb[0].mxu0
          %v1357 = vadd.f32 %v741, %v1356
          %v1358 = vpop.f32.mrb[0].mxu0
          %v1359 = vadd.f32 %v745, %v1358
          %1360 = vmatprep.mubr.bf16.mxu0 %v605
          %1361 = vmatmul.mubr.bf16.gmra.mrb[0].mxu0 %v604
          %v1362 = vpop.f32.mrb[0].mxu0
          %v1363 = vadd.f32 %v741, %v1362
          %v1364 = vpop.f32.mrb[0].mxu0
          %v1365 = vadd.f32 %v745, %v1364
          %v1366 = vpop.f32.mrb[0].mxu0
          %v1367 = vadd.f32 %v741, %v1366
          %v1368 = vpop.f32.mrb[0].mxu0
          %v1369 = vadd.f32 %v745, %v1368
          %1370 = vmatprep.mubr.bf16.mxu0 %v611
          %1371 = vmatmul.mubr.bf16.gmra.mrb[0].mxu0 %v610
          %v1372 = vpop.f32.mrb[0].mxu0
          %v1373 = vadd.f32 %v741, %v1372
          %v1374 = vpop.f32.mrb[0].mxu0
          %v1375 = vadd.f32 %v745, %v1374
          %v1376 = vpop.f32.mrb[0].mxu0
          %v1377 = vadd.f32 %v741, %v1376
          %v1378 = vpop.f32.mrb[0].mxu0
          %v1379 = vadd.f32 %v745, %v1378
          %1380 = vmatprep.mubr.bf16.mxu0 %v617
          %1381 = vmatmul.mubr.bf16.gmra.mrb[0].mxu0 %v616
          %v1382 = vpop.f32.mrb[0].mxu0
          %v1383 = vadd.f32 %v741, %v1382
          %v1384 = vpop.f32.mrb[0].mxu0
          %v1385 = vadd.f32 %v745, %v1384
          %v1386 = vpop.f32.mrb[0].mxu0
          %v1387 = vadd.f32 %v741, %v1386
          %v1388 = vpop.f32.mrb[0].mxu0
          %v1389 = vadd.f32 %v745, %v1388
          %1390 = vmatprep.mubr.bf16.mxu0 %v623
          %1391 = vmatmul.mubr.bf16.gmra.mrb[0].mxu0 %v622
          %v1392 = vpop.f32.mrb[0].mxu0
          %v1393 = vadd.f32 %v741, %v1392
          %v1394 = vpop.f32.mrb[0].mxu0
          %v1395 = vadd.f32 %v745, %v1394
          %v1396 = vpop.f32.mrb[0].mxu0
          %v1397 = vadd.f32 %v741, %v1396
          %v1398 = vpop.f32.mrb[0].mxu0
          %v1399 = vadd.f32 %v745, %v1398
          %1400 = vmatprep.mubr.bf16.mxu0 %v629
          %1401 = vmatmul.mubr.bf16.gmra.mrb[0].mxu0 %v628
          %v1402 = vpop.f32.mrb[0].mxu0
          %v1403 = vadd.f32 %v741, %v1402
          %v1404 = vpop.f32.mrb[0].mxu0
          %v1405 = vadd.f32 %v745, %v1404
          %v1406 = vpop.f32.mrb[0].mxu0
          %v1407 = vadd.f32 %v741, %v1406
          %v1408 = vpop.f32.mrb[0].mxu0
          %v1409 = vadd.f32 %v745, %v1408
          %1410 = vmatprep.mubr.bf16.mxu0 %v635
          %1411 = vmatmul.mubr.bf16.gmra.mrb[0].mxu0 %v634
          %v1412 = vpop.f32.mrb[0].mxu0
          %v1413 = vadd.f32 %v741, %v1412
          %v1414 = vpop.f32.mrb[0].mxu0
          %v1415 = vadd.f32 %v745, %v1414
          %v1416 = vpop.f32.mrb[0].mxu0
          %v1417 = vadd.f32 %v741, %v1416
          %v1418 = vpop.f32.mrb[0].mxu0
          %v1419 = vadd.f32 %v745, %v1418
          %1420 = vdwg.mxu0
          %1421 = vmatprep.subr.bf16.mxu0 %v1069
          %1422 = vmatpush1.bf16.msra.mxu0 %v1068
          %1423 = vmatprep.subr.bf16.mxu0 %v1071
          %1424 = vmatpush1.bf16.msra.mxu0 %v1070
          %1425 = vmatprep.subr.bf16.mxu0 %v1073
          %1426 = vmatpush1.bf16.msra.mxu0 %v1072
          %1427 = vmatprep.subr.bf16.mxu0 %v1075
          %1428 = vmatpush1.bf16.msra.mxu0 %v1074
          %1429 = vmatprep.subr.bf16.mxu0 %v1077
          %1430 = vmatpush1.bf16.msra.mxu0 %v1076
          %1431 = vmatprep.subr.bf16.mxu0 %v1079
          %1432 = vmatpush1.bf16.msra.mxu0 %v1078
          %1433 = vmatprep.subr.bf16.mxu0 %v1081
          %1434 = vmatpush1.bf16.msra.mxu0 %v1080
          %1435 = vmatprep.subr.bf16.mxu0 %v1083
          %1436 = vmatpush1.bf16.msra.mxu0 %v1082
          %1437 = vmatprep.subr.bf16.mxu0 %v1085
          %1438 = vmatpush1.bf16.msra.mxu0 %v1084
          %1439 = vmatprep.subr.bf16.mxu0 %v1087
          %1440 = vmatpush1.bf16.msra.mxu0 %v1086
          %1441 = vmatprep.subr.bf16.mxu0 %v1089
          %1442 = vmatpush1.bf16.msra.mxu0 %v1088
          %1443 = vmatprep.subr.bf16.mxu0 %v1091
          %1444 = vmatpush1.bf16.msra.mxu0 %v1090
          %1445 = vmatprep.subr.bf16.mxu0 %v1093
          %1446 = vmatpush1.bf16.msra.mxu0 %v1092
          %1447 = vmatprep.subr.bf16.mxu0 %v1095
          %1448 = vmatpush1.bf16.msra.mxu0 %v1094
          %1449 = vmatprep.subr.bf16.mxu0 %v1097
          %1450 = vmatpush1.bf16.msra.mxu0 %v1096
          %1451 = vmatprep.subr.bf16.mxu0 %v1099
          %1452 = vmatpush1.bf16.msra.mxu0 %v1098
          %1453 = vmatprep.mubr.bf16.mxu0 %v547
          %1454 = vmatmul.mubr.bf16.gmra.mrb[0].mxu0 %v546
          %v1455 = vpop.f32.mrb[0].mxu0
          %v1456 = vadd.f32 %v1263, %v1455
          %v1457 = vpop.f32.mrb[0].mxu0
          %v1458 = vadd.f32 %v1265, %v1457
          %v1459 = vpop.f32.mrb[0].mxu0
          %v1460 = vadd.f32 %v1267, %v1459
          %v1461 = vpop.f32.mrb[0].mxu0
          %v1462 = vadd.f32 %v1269, %v1461
          %1463 = vmatprep.mubr.bf16.mxu0 %v553
          %1464 = vmatmul.mubr.bf16.gmra.mrb[0].mxu0 %v552
          %v1465 = vpop.f32.mrb[0].mxu0
          %v1466 = vadd.f32 %v1273, %v1465
          %v1467 = vpop.f32.mrb[0].mxu0
          %v1468 = vadd.f32 %v1275, %v1467
          %v1469 = vpop.f32.mrb[0].mxu0
          %v1470 = vadd.f32 %v1277, %v1469
          %v1471 = vpop.f32.mrb[0].mxu0
          %v1472 = vadd.f32 %v1279, %v1471
          %1473 = vmatprep.mubr.bf16.mxu0 %v559
          %1474 = vmatmul.mubr.bf16.gmra.mrb[0].mxu0 %v558
          %v1475 = vpop.f32.mrb[0].mxu0
          %v1476 = vadd.f32 %v1283, %v1475
          %v1477 = vpop.f32.mrb[0].mxu0
          %v1478 = vadd.f32 %v1285, %v1477
          %v1479 = vpop.f32.mrb[0].mxu0
          %v1480 = vadd.f32 %v1287, %v1479
          %v1481 = vpop.f32.mrb[0].mxu0
          %v1482 = vadd.f32 %v1289, %v1481
          %1483 = vmatprep.mubr.bf16.mxu0 %v565
          %1484 = vmatmul.mubr.bf16.gmra.mrb[0].mxu0 %v564
          %v1485 = vpop.f32.mrb[0].mxu0
          %v1486 = vadd.f32 %v1293, %v1485
          %v1487 = vpop.f32.mrb[0].mxu0
          %v1488 = vadd.f32 %v1295, %v1487
          %v1489 = vpop.f32.mrb[0].mxu0
          %v1490 = vadd.f32 %v1297, %v1489
          %v1491 = vpop.f32.mrb[0].mxu0
          %v1492 = vadd.f32 %v1299, %v1491
          %1493 = vmatprep.mubr.bf16.mxu0 %v571
          %1494 = vmatmul.mubr.bf16.gmra.mrb[0].mxu0 %v570
          %v1495 = vpop.f32.mrb[0].mxu0
          %v1496 = vadd.f32 %v1303, %v1495
          %v1497 = vpop.f32.mrb[0].mxu0
          %v1498 = vadd.f32 %v1305, %v1497
          %v1499 = vpop.f32.mrb[0].mxu0
          %v1500 = vadd.f32 %v1307, %v1499
          %v1501 = vpop.f32.mrb[0].mxu0
          %v1502 = vadd.f32 %v1309, %v1501
          %1503 = vmatprep.mubr.bf16.mxu0 %v577
          %1504 = vmatmul.mubr.bf16.gmra.mrb[0].mxu0 %v576
          %v1505 = vpop.f32.mrb[0].mxu0
          %v1506 = vadd.f32 %v1313, %v1505
          %v1507 = vpop.f32.mrb[0].mxu0
          %v1508 = vadd.f32 %v1315, %v1507
          %v1509 = vpop.f32.mrb[0].mxu0
          %v1510 = vadd.f32 %v1317, %v1509
          %v1511 = vpop.f32.mrb[0].mxu0
          %v1512 = vadd.f32 %v1319, %v1511
          %1513 = vmatprep.mubr.bf16.mxu0 %v583
          %1514 = vmatmul.mubr.bf16.gmra.mrb[0].mxu0 %v582
          %v1515 = vpop.f32.mrb[0].mxu0
          %v1516 = vadd.f32 %v1323, %v1515
          %v1517 = vpop.f32.mrb[0].mxu0
          %v1518 = vadd.f32 %v1325, %v1517
          %v1519 = vpop.f32.mrb[0].mxu0
          %v1520 = vadd.f32 %v1327, %v1519
          %v1521 = vpop.f32.mrb[0].mxu0
          %v1522 = vadd.f32 %v1329, %v1521
          %1523 = vmatprep.mubr.bf16.mxu0 %v589
          %1524 = vmatmul.mubr.bf16.gmra.mrb[0].mxu0 %v588
          %v1525 = vpop.f32.mrb[0].mxu0
          %v1526 = vadd.f32 %v1333, %v1525
          %v1527 = vpop.f32.mrb[0].mxu0
          %v1528 = vadd.f32 %v1335, %v1527
          %v1529 = vpop.f32.mrb[0].mxu0
          %v1530 = vadd.f32 %v1337, %v1529
          %v1531 = vpop.f32.mrb[0].mxu0
          %v1532 = vadd.f32 %v1339, %v1531
          %1533 = vmatprep.mubr.bf16.mxu0 %v595
          %1534 = vmatmul.mubr.bf16.gmra.mrb[0].mxu0 %v594
          %v1535 = vpop.f32.mrb[0].mxu0
          %v1536 = vadd.f32 %v1343, %v1535
          %v1537 = vpop.f32.mrb[0].mxu0
          %v1538 = vadd.f32 %v1345, %v1537
          %v1539 = vpop.f32.mrb[0].mxu0
          %v1540 = vadd.f32 %v1347, %v1539
          %v1541 = vpop.f32.mrb[0].mxu0
          %v1542 = vadd.f32 %v1349, %v1541
          %1543 = vmatprep.mubr.bf16.mxu0 %v601
          %1544 = vmatmul.mubr.bf16.gmra.mrb[0].mxu0 %v600
          %v1545 = vpop.f32.mrb[0].mxu0
          %v1546 = vadd.f32 %v1353, %v1545
          %v1547 = vpop.f32.mrb[0].mxu0
          %v1548 = vadd.f32 %v1355, %v1547
          %v1549 = vpop.f32.mrb[0].mxu0
          %v1550 = vadd.f32 %v1357, %v1549
          %v1551 = vpop.f32.mrb[0].mxu0
          %v1552 = vadd.f32 %v1359, %v1551
          %1553 = vmatprep.mubr.bf16.mxu0 %v607
          %1554 = vmatmul.mubr.bf16.gmra.mrb[0].mxu0 %v606
          %v1555 = vpop.f32.mrb[0].mxu0
          %v1556 = vadd.f32 %v1363, %v1555
          %v1557 = vpop.f32.mrb[0].mxu0
          %v1558 = vadd.f32 %v1365, %v1557
          %v1559 = vpop.f32.mrb[0].mxu0
          %v1560 = vadd.f32 %v1367, %v1559
          %v1561 = vpop.f32.mrb[0].mxu0
          %v1562 = vadd.f32 %v1369, %v1561
          %1563 = vmatprep.mubr.bf16.mxu0 %v613
          %1564 = vmatmul.mubr.bf16.gmra.mrb[0].mxu0 %v612
          %v1565 = vpop.f32.mrb[0].mxu0
          %v1566 = vadd.f32 %v1373, %v1565
          %v1567 = vpop.f32.mrb[0].mxu0
          %v1568 = vadd.f32 %v1375, %v1567
          %v1569 = vpop.f32.mrb[0].mxu0
          %v1570 = vadd.f32 %v1377, %v1569
          %v1571 = vpop.f32.mrb[0].mxu0
          %v1572 = vadd.f32 %v1379, %v1571
          %1573 = vmatprep.mubr.bf16.mxu0 %v619
          %1574 = vmatmul.mubr.bf16.gmra.mrb[0].mxu0 %v618
          %v1575 = vpop.f32.mrb[0].mxu0
          %v1576 = vadd.f32 %v1383, %v1575
          %v1577 = vpop.f32.mrb[0].mxu0
          %v1578 = vadd.f32 %v1385, %v1577
          %v1579 = vpop.f32.mrb[0].mxu0
          %v1580 = vadd.f32 %v1387, %v1579
          %v1581 = vpop.f32.mrb[0].mxu0
          %v1582 = vadd.f32 %v1389, %v1581
          %1583 = vmatprep.mubr.bf16.mxu0 %v625
          %1584 = vmatmul.mubr.bf16.gmra.mrb[0].mxu0 %v624
          %v1585 = vpop.f32.mrb[0].mxu0
          %v1586 = vadd.f32 %v1393, %v1585
          %v1587 = vpop.f32.mrb[0].mxu0
          %v1588 = vadd.f32 %v1395, %v1587
          %v1589 = vpop.f32.mrb[0].mxu0
          %v1590 = vadd.f32 %v1397, %v1589
          %v1591 = vpop.f32.mrb[0].mxu0
          %v1592 = vadd.f32 %v1399, %v1591
          %1593 = vmatprep.mubr.bf16.mxu0 %v631
          %1594 = vmatmul.mubr.bf16.gmra.mrb[0].mxu0 %v630
          %v1595 = vpop.f32.mrb[0].mxu0
          %v1596 = vadd.f32 %v1403, %v1595
          %v1597 = vpop.f32.mrb[0].mxu0
          %v1598 = vadd.f32 %v1405, %v1597
          %v1599 = vpop.f32.mrb[0].mxu0
          %v1600 = vadd.f32 %v1407, %v1599
          %v1601 = vpop.f32.mrb[0].mxu0
          %v1602 = vadd.f32 %v1409, %v1601
          %1603 = vmatprep.mubr.bf16.mxu0 %v637
          %1604 = vmatmul.mubr.bf16.gmra.mrb[0].mxu0 %v636
          %v1605 = vpop.f32.mrb[0].mxu0
          %v1606 = vadd.f32 %v1413, %v1605
          %v1607 = vpop.f32.mrb[0].mxu0
          %v1608 = vadd.f32 %v1415, %v1607
          %v1609 = vpop.f32.mrb[0].mxu0
          %v1610 = vadd.f32 %v1417, %v1609
          %v1611 = vpop.f32.mrb[0].mxu0
          %v1612 = vadd.f32 %v1419, %v1611
          %1613 = vdwg.mxu0
          %1614 = vmatprep.subr.bf16.mxu0 %v1101
          %1615 = vmatpush1.bf16.msra.mxu0 %v1100
          %1616 = vmatprep.subr.bf16.mxu0 %v1103
          %1617 = vmatpush1.bf16.msra.mxu0 %v1102
          %1618 = vmatprep.subr.bf16.mxu0 %v1105
          %1619 = vmatpush1.bf16.msra.mxu0 %v1104
          %1620 = vmatprep.subr.bf16.mxu0 %v1107
          %1621 = vmatpush1.bf16.msra.mxu0 %v1106
          %1622 = vmatprep.subr.bf16.mxu0 %v1109
          %1623 = vmatpush1.bf16.msra.mxu0 %v1108
          %1624 = vmatprep.subr.bf16.mxu0 %v1111
          %1625 = vmatpush1.bf16.msra.mxu0 %v1110
          %1626 = vmatprep.subr.bf16.mxu0 %v1113
          %1627 = vmatpush1.bf16.msra.mxu0 %v1112
          %1628 = vmatprep.subr.bf16.mxu0 %v1115
          %1629 = vmatpush1.bf16.msra.mxu0 %v1114
          %1630 = vmatprep.subr.bf16.mxu0 %v1117
          %1631 = vmatpush1.bf16.msra.mxu0 %v1116
          %1632 = vmatprep.subr.bf16.mxu0 %v1119
          %1633 = vmatpush1.bf16.msra.mxu0 %v1118
          %1634 = vmatprep.subr.bf16.mxu0 %v1121
          %1635 = vmatpush1.bf16.msra.mxu0 %v1120
          %1636 = vmatprep.subr.bf16.mxu0 %v1123
          %1637 = vmatpush1.bf16.msra.mxu0 %v1122
          %1638 = vmatprep.subr.bf16.mxu0 %v1125
          %1639 = vmatpush1.bf16.msra.mxu0 %v1124
          %1640 = vmatprep.subr.bf16.mxu0 %v1127
          %1641 = vmatpush1.bf16.msra.mxu0 %v1126
          %1642 = vmatprep.subr.bf16.mxu0 %v1129
          %1643 = vmatpush1.bf16.msra.mxu0 %v1128
          %1644 = vmatprep.subr.bf16.mxu0 %v1131
          %1645 = vmatpush1.bf16.msra.mxu0 %v1130
          %1646 = vmatprep.mubr.bf16.mxu0 %v549
          %1647 = vmatmul.mubr.bf16.gmra.mrb[0].mxu0 %v548
          %v1648 = vpop.f32.mrb[0].mxu0
          %v1649 = vadd.f32 %v1456, %v1648
          %v1650 = vpop.f32.mrb[0].mxu0
          %v1651 = vadd.f32 %v1458, %v1650
          %v1652 = vpop.f32.mrb[0].mxu0
          %v1653 = vadd.f32 %v1460, %v1652
          %v1654 = vpop.f32.mrb[0].mxu0
          %v1655 = vadd.f32 %v1462, %v1654
          %1656 = vmatprep.mubr.bf16.mxu0 %v555
          %1657 = vmatmul.mubr.bf16.gmra.mrb[0].mxu0 %v554
          %v1658 = vpop.f32.mrb[0].mxu0
          %v1659 = vadd.f32 %v1466, %v1658
          %v1660 = vpop.f32.mrb[0].mxu0
          %v1661 = vadd.f32 %v1468, %v1660
          %v1662 = vpop.f32.mrb[0].mxu0
          %v1663 = vadd.f32 %v1470, %v1662
          %v1664 = vpop.f32.mrb[0].mxu0
          %v1665 = vadd.f32 %v1472, %v1664
          %1666 = vmatprep.mubr.bf16.mxu0 %v561
          %1667 = vmatmul.mubr.bf16.gmra.mrb[0].mxu0 %v560
          %v1668 = vpop.f32.mrb[0].mxu0
          %v1669 = vadd.f32 %v1476, %v1668
          %v1670 = vpop.f32.mrb[0].mxu0
          %v1671 = vadd.f32 %v1478, %v1670
          %v1672 = vpop.f32.mrb[0].mxu0
          %v1673 = vadd.f32 %v1480, %v1672
          %v1674 = vpop.f32.mrb[0].mxu0
          %v1675 = vadd.f32 %v1482, %v1674
          %1676 = vmatprep.mubr.bf16.mxu0 %v567
          %1677 = vmatmul.mubr.bf16.gmra.mrb[0].mxu0 %v566
          %v1678 = vpop.f32.mrb[0].mxu0
          %v1679 = vadd.f32 %v1486, %v1678
          %v1680 = vpop.f32.mrb[0].mxu0
          %v1681 = vadd.f32 %v1488, %v1680
          %v1682 = vpop.f32.mrb[0].mxu0
          %v1683 = vadd.f32 %v1490, %v1682
          %v1684 = vpop.f32.mrb[0].mxu0
          %v1685 = vadd.f32 %v1492, %v1684
          %1686 = vmatprep.mubr.bf16.mxu0 %v573
          %1687 = vmatmul.mubr.bf16.gmra.mrb[0].mxu0 %v572
          %v1688 = vpop.f32.mrb[0].mxu0
          %v1689 = vadd.f32 %v1496, %v1688
          %v1690 = vpop.f32.mrb[0].mxu0
          %v1691 = vadd.f32 %v1498, %v1690
          %v1692 = vpop.f32.mrb[0].mxu0
          %v1693 = vadd.f32 %v1500, %v1692
          %v1694 = vpop.f32.mrb[0].mxu0
          %v1695 = vadd.f32 %v1502, %v1694
          %1696 = vmatprep.mubr.bf16.mxu0 %v579
          %1697 = vmatmul.mubr.bf16.gmra.mrb[0].mxu0 %v578
          %v1698 = vpop.f32.mrb[0].mxu0
          %v1699 = vadd.f32 %v1506, %v1698
          %v1700 = vpop.f32.mrb[0].mxu0
          %v1701 = vadd.f32 %v1508, %v1700
          %v1702 = vpop.f32.mrb[0].mxu0
          %v1703 = vadd.f32 %v1510, %v1702
          %v1704 = vpop.f32.mrb[0].mxu0
          %v1705 = vadd.f32 %v1512, %v1704
          %1706 = vmatprep.mubr.bf16.mxu0 %v585
          %1707 = vmatmul.mubr.bf16.gmra.mrb[0].mxu0 %v584
          %v1708 = vpop.f32.mrb[0].mxu0
          %v1709 = vadd.f32 %v1516, %v1708
          %v1710 = vpop.f32.mrb[0].mxu0
          %v1711 = vadd.f32 %v1518, %v1710
          %v1712 = vpop.f32.mrb[0].mxu0
          %v1713 = vadd.f32 %v1520, %v1712
          %v1714 = vpop.f32.mrb[0].mxu0
          %v1715 = vadd.f32 %v1522, %v1714
          %1716 = vmatprep.mubr.bf16.mxu0 %v591
          %1717 = vmatmul.mubr.bf16.gmra.mrb[0].mxu0 %v590
          %v1718 = vpop.f32.mrb[0].mxu0
          %v1719 = vadd.f32 %v1526, %v1718
          %v1720 = vpop.f32.mrb[0].mxu0
          %v1721 = vadd.f32 %v1528, %v1720
          %v1722 = vpop.f32.mrb[0].mxu0
          %v1723 = vadd.f32 %v1530, %v1722
          %v1724 = vpop.f32.mrb[0].mxu0
          %v1725 = vadd.f32 %v1532, %v1724
          %1726 = vmatprep.mubr.bf16.mxu0 %v597
          %1727 = vmatmul.mubr.bf16.gmra.mrb[0].mxu0 %v596
          %v1728 = vpop.f32.mrb[0].mxu0
          %v1729 = vadd.f32 %v1536, %v1728
          %v1730 = vpop.f32.mrb[0].mxu0
          %v1731 = vadd.f32 %v1538, %v1730
          %v1732 = vpop.f32.mrb[0].mxu0
          %v1733 = vadd.f32 %v1540, %v1732
          %v1734 = vpop.f32.mrb[0].mxu0
          %v1735 = vadd.f32 %v1542, %v1734
          %1736 = vmatprep.mubr.bf16.mxu0 %v603
          %1737 = vmatmul.mubr.bf16.gmra.mrb[0].mxu0 %v602
          %v1738 = vpop.f32.mrb[0].mxu0
          %v1739 = vadd.f32 %v1546, %v1738
          %v1740 = vpop.f32.mrb[0].mxu0
          %v1741 = vadd.f32 %v1548, %v1740
          %v1742 = vpop.f32.mrb[0].mxu0
          %v1743 = vadd.f32 %v1550, %v1742
          %v1744 = vpop.f32.mrb[0].mxu0
          %v1745 = vadd.f32 %v1552, %v1744
          %1746 = vmatprep.mubr.bf16.mxu0 %v609
          %1747 = vmatmul.mubr.bf16.gmra.mrb[0].mxu0 %v608
          %v1748 = vpop.f32.mrb[0].mxu0
          %v1749 = vadd.f32 %v1556, %v1748
          %v1750 = vpop.f32.mrb[0].mxu0
          %v1751 = vadd.f32 %v1558, %v1750
          %v1752 = vpop.f32.mrb[0].mxu0
          %v1753 = vadd.f32 %v1560, %v1752
          %v1754 = vpop.f32.mrb[0].mxu0
          %v1755 = vadd.f32 %v1562, %v1754
          %1756 = vmatprep.mubr.bf16.mxu0 %v615
          %1757 = vmatmul.mubr.bf16.gmra.mrb[0].mxu0 %v614
          %v1758 = vpop.f32.mrb[0].mxu0
          %v1759 = vadd.f32 %v1566, %v1758
          %v1760 = vpop.f32.mrb[0].mxu0
          %v1761 = vadd.f32 %v1568, %v1760
          %v1762 = vpop.f32.mrb[0].mxu0
          %v1763 = vadd.f32 %v1570, %v1762
          %v1764 = vpop.f32.mrb[0].mxu0
          %v1765 = vadd.f32 %v1572, %v1764
          %1766 = vmatprep.mubr.bf16.mxu0 %v621
          %1767 = vmatmul.mubr.bf16.gmra.mrb[0].mxu0 %v620
          %v1768 = vpop.f32.mrb[0].mxu0
          %v1769 = vadd.f32 %v1576, %v1768
          %v1770 = vpop.f32.mrb[0].mxu0
          %v1771 = vadd.f32 %v1578, %v1770
          %v1772 = vpop.f32.mrb[0].mxu0
          %v1773 = vadd.f32 %v1580, %v1772
          %v1774 = vpop.f32.mrb[0].mxu0
          %v1775 = vadd.f32 %v1582, %v1774
          %1776 = vmatprep.mubr.bf16.mxu0 %v627
          %1777 = vmatmul.mubr.bf16.gmra.mrb[0].mxu0 %v626
          %v1778 = vpop.f32.mrb[0].mxu0
          %v1779 = vadd.f32 %v1586, %v1778
          %v1780 = vpop.f32.mrb[0].mxu0
          %v1781 = vadd.f32 %v1588, %v1780
          %v1782 = vpop.f32.mrb[0].mxu0
          %v1783 = vadd.f32 %v1590, %v1782
          %v1784 = vpop.f32.mrb[0].mxu0
          %v1785 = vadd.f32 %v1592, %v1784
          %1786 = vmatprep.mubr.bf16.mxu0 %v633
          %1787 = vmatmul.mubr.bf16.gmra.mrb[0].mxu0 %v632
          %v1788 = vpop.f32.mrb[0].mxu0
          %v1789 = vadd.f32 %v1596, %v1788
          %v1790 = vpop.f32.mrb[0].mxu0
          %v1791 = vadd.f32 %v1598, %v1790
          %v1792 = vpop.f32.mrb[0].mxu0
          %v1793 = vadd.f32 %v1600, %v1792
          %v1794 = vpop.f32.mrb[0].mxu0
          %v1795 = vadd.f32 %v1602, %v1794
          %1796 = vmatprep.mubr.bf16.mxu0 %v639
          %1797 = vmatmul.mubr.bf16.gmra.mrb[0].mxu0 %v638
          %v1798 = vpop.f32.mrb[0].mxu0
          %v1799 = vadd.f32 %v1606, %v1798
          %v1800 = vpop.f32.mrb[0].mxu0
          %v1801 = vadd.f32 %v1608, %v1800
          %v1802 = vpop.f32.mrb[0].mxu0
          %v1803 = vadd.f32 %v1610, %v1802
          %v1804 = vpop.f32.mrb[0].mxu0
          %v1805 = vadd.f32 %v1612, %v1804
          %1806 = vdwg.mxu0
          %v1807 = vmax.f32 %v1649, 0.0
          %v1808 = vmax.f32 %v1651, 0.0
          %v1809 = vmax.f32 %v1653, 0.0
          %v1810 = vmax.f32 %v1655, 0.0
          %v1811 = vmax.f32 %v1659, 0.0
          %v1812 = vmax.f32 %v1661, 0.0
          %v1813 = vmax.f32 %v1663, 0.0
          %v1814 = vmax.f32 %v1665, 0.0
          %v1815 = vmax.f32 %v1669, 0.0
          %v1816 = vmax.f32 %v1671, 0.0
          %v1817 = vmax.f32 %v1673, 0.0
          %v1818 = vmax.f32 %v1675, 0.0
          %v1819 = vmax.f32 %v1679, 0.0
          %v1820 = vmax.f32 %v1681, 0.0
          %v1821 = vmax.f32 %v1683, 0.0
          %v1822 = vmax.f32 %v1685, 0.0
          %v1823 = vmax.f32 %v1689, 0.0
          %v1824 = vmax.f32 %v1691, 0.0
          %v1825 = vmax.f32 %v1693, 0.0
          %v1826 = vmax.f32 %v1695, 0.0
          %v1827 = vmax.f32 %v1699, 0.0
          %v1828 = vmax.f32 %v1701, 0.0
          %v1829 = vmax.f32 %v1703, 0.0
          %v1830 = vmax.f32 %v1705, 0.0
          %v1831 = vmax.f32 %v1709, 0.0
          %v1832 = vmax.f32 %v1711, 0.0
          %v1833 = vmax.f32 %v1713, 0.0
          %v1834 = vmax.f32 %v1715, 0.0
          %v1835 = vmax.f32 %v1719, 0.0
          %v1836 = vmax.f32 %v1721, 0.0
          %v1837 = vmax.f32 %v1723, 0.0
          %v1838 = vmax.f32 %v1725, 0.0
          %v1839 = vmax.f32 %v1729, 0.0
          %v1840 = vmax.f32 %v1731, 0.0
          %v1841 = vmax.f32 %v1733, 0.0
          %v1842 = vmax.f32 %v1735, 0.0
          %v1843 = vmax.f32 %v1739, 0.0
          %v1844 = vmax.f32 %v1741, 0.0
          %v1845 = vmax.f32 %v1743, 0.0
          %v1846 = vmax.f32 %v1745, 0.0
          %v1847 = vmax.f32 %v1749, 0.0
          %v1848 = vmax.f32 %v1751, 0.0
          %v1849 = vmax.f32 %v1753, 0.0
          %v1850 = vmax.f32 %v1755, 0.0
          %v1851 = vmax.f32 %v1759, 0.0
          %v1852 = vmax.f32 %v1761, 0.0
          %v1853 = vmax.f32 %v1763, 0.0
          %v1854 = vmax.f32 %v1765, 0.0
          %v1855 = vmax.f32 %v1769, 0.0
          %v1856 = vmax.f32 %v1771, 0.0
          %v1857 = vmax.f32 %v1773, 0.0
          %v1858 = vmax.f32 %v1775, 0.0
          %v1859 = vmax.f32 %v1779, 0.0
          %v1860 = vmax.f32 %v1781, 0.0
          %v1861 = vmax.f32 %v1783, 0.0
          %v1862 = vmax.f32 %v1785, 0.0
          %v1863 = vmax.f32 %v1789, 0.0
          %v1864 = vmax.f32 %v1791, 0.0
          %v1865 = vmax.f32 %v1793, 0.0
          %v1866 = vmax.f32 %v1795, 0.0
          %v1867 = vmax.f32 %v1799, 0.0
          %v1868 = vmax.f32 %v1801, 0.0
          %v1869 = vmax.f32 %v1803, 0.0
          %v1870 = vmax.f32 %v1805, 0.0
          %v1871 = vpack.c.bf16 %v1809, %v1807
          %v1872 = vpack.c.bf16 %v1810, %v1808
          %v1873 = vpack.c.bf16 %v1813, %v1811
          %v1874 = vpack.c.bf16 %v1814, %v1812
          %v1875 = vpack.c.bf16 %v1817, %v1815
          %v1876 = vpack.c.bf16 %v1818, %v1816
          %v1877 = vpack.c.bf16 %v1821, %v1819
          %v1878 = vpack.c.bf16 %v1822, %v1820
          %v1879 = vpack.c.bf16 %v1825, %v1823
          %v1880 = vpack.c.bf16 %v1826, %v1824
          %v1881 = vpack.c.bf16 %v1829, %v1827
          %v1882 = vpack.c.bf16 %v1830, %v1828
          %v1883 = vpack.c.bf16 %v1833, %v1831
          %v1884 = vpack.c.bf16 %v1834, %v1832
          %v1885 = vpack.c.bf16 %v1837, %v1835
          %v1886 = vpack.c.bf16 %v1838, %v1836
          %v1887 = vpack.c.bf16 %v1841, %v1839
          %v1888 = vpack.c.bf16 %v1842, %v1840
          %v1889 = vpack.c.bf16 %v1845, %v1843
          %v1890 = vpack.c.bf16 %v1846, %v1844
          %v1891 = vpack.c.bf16 %v1849, %v1847
          %v1892 = vpack.c.bf16 %v1850, %v1848
          %v1893 = vpack.c.bf16 %v1853, %v1851
          %v1894 = vpack.c.bf16 %v1854, %v1852
          %v1895 = vpack.c.bf16 %v1857, %v1855
          %v1896 = vpack.c.bf16 %v1858, %v1856
          %v1897 = vpack.c.bf16 %v1861, %v1859
          %v1898 = vpack.c.bf16 %v1862, %v1860
          %v1899 = vpack.c.bf16 %v1865, %v1863
          %v1900 = vpack.c.bf16 %v1866, %v1864
          %v1901 = vpack.c.bf16 %v1869, %v1867
          %v1902 = vpack.c.bf16 %v1870, %v1868
          %1903 = vst [vmem:[#allocation2] sm:$0xff] %v1871
          %1904 = vst [vmem:[#allocation2 + $0x8] sm:$0xff] %v1872
          %1905 = vst [vmem:[#allocation2 + $0x10] sm:$0xff] %v1873
          %1906 = vst [vmem:[#allocation2 + $0x18] sm:$0xff] %v1874
          %1907 = vst [vmem:[#allocation2 + $0x20] sm:$0xff] %v1875
          %1908 = vst [vmem:[#allocation2 + $0x28] sm:$0xff] %v1876
          %1909 = vst [vmem:[#allocation2 + $0x30] sm:$0xff] %v1877
          %1910 = vst [vmem:[#allocation2 + $0x38] sm:$0xff] %v1878
          %1911 = vst [vmem:[#allocation2 + $0x40] sm:$0xff] %v1879
          %1912 = vst [vmem:[#allocation2 + $0x48] sm:$0xff] %v1880
          %1913 = vst [vmem:[#allocation2 + $0x50] sm:$0xff] %v1881
          %1914 = vst [vmem:[#allocation2 + $0x58] sm:$0xff] %v1882
          %1915 = vst [vmem:[#allocation2 + $0x60] sm:$0xff] %v1883
          %1916 = vst [vmem:[#allocation2 + $0x68] sm:$0xff] %v1884
          %1917 = vst [vmem:[#allocation2 + $0x70] sm:$0xff] %v1885
          %1918 = vst [vmem:[#allocation2 + $0x78] sm:$0xff] %v1886
          %1919 = vst [vmem:[#allocation2 + $0x80] sm:$0xff] %v1887
          %1920 = vst [vmem:[#allocation2 + $0x88] sm:$0xff] %v1888
          %1921 = vst [vmem:[#allocation2 + $0x90] sm:$0xff] %v1889
          %1922 = vst [vmem:[#allocation2 + $0x98] sm:$0xff] %v1890
          %1923 = vst [vmem:[#allocation2 + $0xa0] sm:$0xff] %v1891
          %1924 = vst [vmem:[#allocation2 + $0xa8] sm:$0xff] %v1892
          %1925 = vst [vmem:[#allocation2 + $0xb0] sm:$0xff] %v1893
          %1926 = vst [vmem:[#allocation2 + $0xb8] sm:$0xff] %v1894
          %1927 = vst [vmem:[#allocation2 + $0xc0] sm:$0xff] %v1895
          %1928 = vst [vmem:[#allocation2 + $0xc8] sm:$0xff] %v1896
          %1929 = vst [vmem:[#allocation2 + $0xd0] sm:$0xff] %v1897
          %1930 = vst [vmem:[#allocation2 + $0xd8] sm:$0xff] %v1898
          %1931 = vst [vmem:[#allocation2 + $0xe0] sm:$0xff] %v1899
          %1932 = vst [vmem:[#allocation2 + $0xe8] sm:$0xff] %v1900
          %1933 = vst [vmem:[#allocation2 + $0xf0] sm:$0xff] %v1901
          %1934 = vst [vmem:[#allocation2 + $0xf8] sm:$0xff] %v1902
        $region64: #{tpu_custom_call.1} parent=39 // pred_fallthru
          _
        %v1935 = vld [vmem:[#allocation2] sm:$0xff]
        %v1936 = vld [vmem:[#allocation2 + $0x8] sm:$0xff]
        %v1937 = vld [vmem:[#allocation2 + $0x10] sm:$0xff]
        %v1938 = vld [vmem:[#allocation2 + $0x18] sm:$0xff]
        %v1939 = vld [vmem:[#allocation2 + $0x20] sm:$0xff]
        %v1940 = vld [vmem:[#allocation2 + $0x28] sm:$0xff]
        %v1941 = vld [vmem:[#allocation2 + $0x30] sm:$0xff]
        %v1942 = vld [vmem:[#allocation2 + $0x38] sm:$0xff]
        %v1943 = vld [vmem:[#allocation2 + $0x40] sm:$0xff]
        %v1944 = vld [vmem:[#allocation2 + $0x48] sm:$0xff]
        %v1945 = vld [vmem:[#allocation2 + $0x50] sm:$0xff]
        %v1946 = vld [vmem:[#allocation2 + $0x58] sm:$0xff]
        %v1947 = vld [vmem:[#allocation2 + $0x60] sm:$0xff]
        %v1948 = vld [vmem:[#allocation2 + $0x68] sm:$0xff]
        %v1949 = vld [vmem:[#allocation2 + $0x70] sm:$0xff]
        %v1950 = vld [vmem:[#allocation2 + $0x78] sm:$0xff]
        %v1951 = vld [vmem:[#allocation2 + $0x80] sm:$0xff]
        %v1952 = vld [vmem:[#allocation2 + $0x88] sm:$0xff]
        %v1953 = vld [vmem:[#allocation2 + $0x90] sm:$0xff]
        %v1954 = vld [vmem:[#allocation2 + $0x98] sm:$0xff]
        %v1955 = vld [vmem:[#allocation2 + $0xa0] sm:$0xff]
        %v1956 = vld [vmem:[#allocation2 + $0xa8] sm:$0xff]
        %v1957 = vld [vmem:[#allocation2 + $0xb0] sm:$0xff]
        %v1958 = vld [vmem:[#allocation2 + $0xb8] sm:$0xff]
        %v1959 = vld [vmem:[#allocation2 + $0xc0] sm:$0xff]
        %v1960 = vld [vmem:[#allocation2 + $0xc8] sm:$0xff]
        %v1961 = vld [vmem:[#allocation2 + $0xd0] sm:$0xff]
        %v1962 = vld [vmem:[#allocation2 + $0xd8] sm:$0xff]
        %v1963 = vld [vmem:[#allocation2 + $0xe0] sm:$0xff]
        %v1964 = vld [vmem:[#allocation2 + $0xe8] sm:$0xff]
        %v1965 = vld [vmem:[#allocation2 + $0xf0] sm:$0xff]
        %v1966 = vld [vmem:[#allocation2 + $0xf8] sm:$0xff]
        %v1967 = vld [vmem:[%s302] sm:$0xff]
        %v1968 = vld [vmem:[%s302 + $0x8] sm:$0xff]
        %v1969 = vld [vmem:[%s302 + $0x10] sm:$0xff]
        %v1970 = vld [vmem:[%s302 + $0x18] sm:$0xff]
        %v1971 = vld [vmem:[%s302 + $0x20] sm:$0xff]
        %v1972 = vld [vmem:[%s302 + $0x28] sm:$0xff]
        %v1973 = vld [vmem:[%s302 + $0x30] sm:$0xff]
        %v1974 = vld [vmem:[%s302 + $0x38] sm:$0xff]
        %v1975 = vld [vmem:[%s302 + $0x40] sm:$0xff]
        %v1976 = vld [vmem:[%s302 + $0x48] sm:$0xff]
        %v1977 = vld [vmem:[%s302 + $0x50] sm:$0xff]
        %v1978 = vld [vmem:[%s302 + $0x58] sm:$0xff]
        %v1979 = vld [vmem:[%s302 + $0x60] sm:$0xff]
        %v1980 = vld [vmem:[%s302 + $0x68] sm:$0xff]
        %v1981 = vld [vmem:[%s302 + $0x70] sm:$0xff]
        %v1982 = vld [vmem:[%s302 + $0x78] sm:$0xff]
        %v1983 = vld [vmem:[%s302 + $0x80] sm:$0xff]
        %v1984 = vld [vmem:[%s302 + $0x88] sm:$0xff]
        %v1985 = vld [vmem:[%s302 + $0x90] sm:$0xff]
        %v1986 = vld [vmem:[%s302 + $0x98] sm:$0xff]
        %v1987 = vld [vmem:[%s302 + $0xa0] sm:$0xff]
        %v1988 = vld [vmem:[%s302 + $0xa8] sm:$0xff]
        %v1989 = vld [vmem:[%s302 + $0xb0] sm:$0xff]
        %v1990 = vld [vmem:[%s302 + $0xb8] sm:$0xff]
        %v1991 = vld [vmem:[%s302 + $0xc0] sm:$0xff]
        %v1992 = vld [vmem:[%s302 + $0xc8] sm:$0xff]
        %v1993 = vld [vmem:[%s302 + $0xd0] sm:$0xff]
        %v1994 = vld [vmem:[%s302 + $0xd8] sm:$0xff]
        %v1995 = vld [vmem:[%s302 + $0xe0] sm:$0xff]
        %v1996 = vld [vmem:[%s302 + $0xe8] sm:$0xff]
        %v1997 = vld [vmem:[%s302 + $0xf0] sm:$0xff]
        %v1998 = vld [vmem:[%s302 + $0xf8] sm:$0xff]
        %v1999 = vld [vmem:[%s302 + $0x100] sm:$0xff]
        %v2000 = vld [vmem:[%s302 + $0x108] sm:$0xff]
        %v2001 = vld [vmem:[%s302 + $0x110] sm:$0xff]
        %v2002 = vld [vmem:[%s302 + $0x118] sm:$0xff]
        %v2003 = vld [vmem:[%s302 + $0x120] sm:$0xff]
        %v2004 = vld [vmem:[%s302 + $0x128] sm:$0xff]
        %v2005 = vld [vmem:[%s302 + $0x130] sm:$0xff]
        %v2006 = vld [vmem:[%s302 + $0x138] sm:$0xff]
        %v2007 = vld [vmem:[%s302 + $0x140] sm:$0xff]
        %v2008 = vld [vmem:[%s302 + $0x148] sm:$0xff]
        %v2009 = vld [vmem:[%s302 + $0x150] sm:$0xff]
        %v2010 = vld [vmem:[%s302 + $0x158] sm:$0xff]
        %v2011 = vld [vmem:[%s302 + $0x160] sm:$0xff]
        %v2012 = vld [vmem:[%s302 + $0x168] sm:$0xff]
        %v2013 = vld [vmem:[%s302 + $0x170] sm:$0xff]
        %v2014 = vld [vmem:[%s302 + $0x178] sm:$0xff]
        %v2015 = vld [vmem:[%s302 + $0x180] sm:$0xff]
        %v2016 = vld [vmem:[%s302 + $0x188] sm:$0xff]
        %v2017 = vld [vmem:[%s302 + $0x190] sm:$0xff]
        %v2018 = vld [vmem:[%s302 + $0x198] sm:$0xff]
        %v2019 = vld [vmem:[%s302 + $0x1a0] sm:$0xff]
        %v2020 = vld [vmem:[%s302 + $0x1a8] sm:$0xff]
        %v2021 = vld [vmem:[%s302 + $0x1b0] sm:$0xff]
        %v2022 = vld [vmem:[%s302 + $0x1b8] sm:$0xff]
        %v2023 = vld [vmem:[%s302 + $0x1c0] sm:$0xff]
        %v2024 = vld [vmem:[%s302 + $0x1c8] sm:$0xff]
        %v2025 = vld [vmem:[%s302 + $0x1d0] sm:$0xff]
        %v2026 = vld [vmem:[%s302 + $0x1d8] sm:$0xff]
        %v2027 = vld [vmem:[%s302 + $0x1e0] sm:$0xff]
        %v2028 = vld [vmem:[%s302 + $0x1e8] sm:$0xff]
        %v2029 = vld [vmem:[%s302 + $0x1f0] sm:$0xff]
        %v2030 = vld [vmem:[%s302 + $0x1f8] sm:$0xff]
        %v2031 = vld [vmem:[%s302 + $0x200] sm:$0xff]
        %v2032 = vld [vmem:[%s302 + $0x208] sm:$0xff]
        %v2033 = vld [vmem:[%s302 + $0x210] sm:$0xff]
        %v2034 = vld [vmem:[%s302 + $0x218] sm:$0xff]
        %v2035 = vld [vmem:[%s302 + $0x220] sm:$0xff]
        %v2036 = vld [vmem:[%s302 + $0x228] sm:$0xff]
        %v2037 = vld [vmem:[%s302 + $0x230] sm:$0xff]
        %v2038 = vld [vmem:[%s302 + $0x238] sm:$0xff]
        %v2039 = vld [vmem:[%s302 + $0x240] sm:$0xff]
        %v2040 = vld [vmem:[%s302 + $0x248] sm:$0xff]
        %v2041 = vld [vmem:[%s302 + $0x250] sm:$0xff]
        %v2042 = vld [vmem:[%s302 + $0x258] sm:$0xff]
        %v2043 = vld [vmem:[%s302 + $0x260] sm:$0xff]
        %v2044 = vld [vmem:[%s302 + $0x268] sm:$0xff]
        %v2045 = vld [vmem:[%s302 + $0x270] sm:$0xff]
        %v2046 = vld [vmem:[%s302 + $0x278] sm:$0xff]
        %v2047 = vld [vmem:[%s302 + $0x280] sm:$0xff]
        %v2048 = vld [vmem:[%s302 + $0x288] sm:$0xff]
        %v2049 = vld [vmem:[%s302 + $0x290] sm:$0xff]
        %v2050 = vld [vmem:[%s302 + $0x298] sm:$0xff]
        %v2051 = vld [vmem:[%s302 + $0x2a0] sm:$0xff]
        %v2052 = vld [vmem:[%s302 + $0x2a8] sm:$0xff]
        %v2053 = vld [vmem:[%s302 + $0x2b0] sm:$0xff]
        %v2054 = vld [vmem:[%s302 + $0x2b8] sm:$0xff]
        %v2055 = vld [vmem:[%s302 + $0x2c0] sm:$0xff]
        %v2056 = vld [vmem:[%s302 + $0x2c8] sm:$0xff]
        %v2057 = vld [vmem:[%s302 + $0x2d0] sm:$0xff]
        %v2058 = vld [vmem:[%s302 + $0x2d8] sm:$0xff]
        %v2059 = vld [vmem:[%s302 + $0x2e0] sm:$0xff]
        %v2060 = vld [vmem:[%s302 + $0x2e8] sm:$0xff]
        %v2061 = vld [vmem:[%s302 + $0x2f0] sm:$0xff]
        %v2062 = vld [vmem:[%s302 + $0x2f8] sm:$0xff]
        %v2063 = vld [vmem:[%s302 + $0x300] sm:$0xff]
        %v2064 = vld [vmem:[%s302 + $0x308] sm:$0xff]
        %v2065 = vld [vmem:[%s302 + $0x310] sm:$0xff]
        %v2066 = vld [vmem:[%s302 + $0x318] sm:$0xff]
        %v2067 = vld [vmem:[%s302 + $0x320] sm:$0xff]
        %v2068 = vld [vmem:[%s302 + $0x328] sm:$0xff]
        %v2069 = vld [vmem:[%s302 + $0x330] sm:$0xff]
        %v2070 = vld [vmem:[%s302 + $0x338] sm:$0xff]
        %v2071 = vld [vmem:[%s302 + $0x340] sm:$0xff]
        %v2072 = vld [vmem:[%s302 + $0x348] sm:$0xff]
        %v2073 = vld [vmem:[%s302 + $0x350] sm:$0xff]
        %v2074 = vld [vmem:[%s302 + $0x358] sm:$0xff]
        %v2075 = vld [vmem:[%s302 + $0x360] sm:$0xff]
        %v2076 = vld [vmem:[%s302 + $0x368] sm:$0xff]
        %v2077 = vld [vmem:[%s302 + $0x370] sm:$0xff]
        %v2078 = vld [vmem:[%s302 + $0x378] sm:$0xff]
        %v2079 = vld [vmem:[%s302 + $0x380] sm:$0xff]
        %v2080 = vld [vmem:[%s302 + $0x388] sm:$0xff]
        %v2081 = vld [vmem:[%s302 + $0x390] sm:$0xff]
        %v2082 = vld [vmem:[%s302 + $0x398] sm:$0xff]
        %v2083 = vld [vmem:[%s302 + $0x3a0] sm:$0xff]
        %v2084 = vld [vmem:[%s302 + $0x3a8] sm:$0xff]
        %v2085 = vld [vmem:[%s302 + $0x3b0] sm:$0xff]
        %v2086 = vld [vmem:[%s302 + $0x3b8] sm:$0xff]
        %v2087 = vld [vmem:[%s302 + $0x3c0] sm:$0xff]
        %v2088 = vld [vmem:[%s302 + $0x3c8] sm:$0xff]
        %v2089 = vld [vmem:[%s302 + $0x3d0] sm:$0xff]
        %v2090 = vld [vmem:[%s302 + $0x3d8] sm:$0xff]
        %v2091 = vld [vmem:[%s302 + $0x3e0] sm:$0xff]
        %v2092 = vld [vmem:[%s302 + $0x3e8] sm:$0xff]
        %v2093 = vld [vmem:[%s302 + $0x3f0] sm:$0xff]
        %v2094 = vld [vmem:[%s302 + $0x3f8] sm:$0xff]
        %v2095 = vld [vmem:[%s302 + $0x400] sm:$0xff]
        %v2096 = vld [vmem:[%s302 + $0x408] sm:$0xff]
        %v2097 = vld [vmem:[%s302 + $0x410] sm:$0xff]
        %v2098 = vld [vmem:[%s302 + $0x418] sm:$0xff]
        %v2099 = vld [vmem:[%s302 + $0x420] sm:$0xff]
        %v2100 = vld [vmem:[%s302 + $0x428] sm:$0xff]
        %v2101 = vld [vmem:[%s302 + $0x430] sm:$0xff]
        %v2102 = vld [vmem:[%s302 + $0x438] sm:$0xff]
        %v2103 = vld [vmem:[%s302 + $0x440] sm:$0xff]
        %v2104 = vld [vmem:[%s302 + $0x448] sm:$0xff]
        %v2105 = vld [vmem:[%s302 + $0x450] sm:$0xff]
        %v2106 = vld [vmem:[%s302 + $0x458] sm:$0xff]
        %v2107 = vld [vmem:[%s302 + $0x460] sm:$0xff]
        %v2108 = vld [vmem:[%s302 + $0x468] sm:$0xff]
        %v2109 = vld [vmem:[%s302 + $0x470] sm:$0xff]
        %v2110 = vld [vmem:[%s302 + $0x478] sm:$0xff]
        %v2111 = vld [vmem:[%s302 + $0x480] sm:$0xff]
        %v2112 = vld [vmem:[%s302 + $0x488] sm:$0xff]
        %v2113 = vld [vmem:[%s302 + $0x490] sm:$0xff]
        %v2114 = vld [vmem:[%s302 + $0x498] sm:$0xff]
        %v2115 = vld [vmem:[%s302 + $0x4a0] sm:$0xff]
        %v2116 = vld [vmem:[%s302 + $0x4a8] sm:$0xff]
        %v2117 = vld [vmem:[%s302 + $0x4b0] sm:$0xff]
        %v2118 = vld [vmem:[%s302 + $0x4b8] sm:$0xff]
        %v2119 = vld [vmem:[%s302 + $0x4c0] sm:$0xff]
        %v2120 = vld [vmem:[%s302 + $0x4c8] sm:$0xff]
        %v2121 = vld [vmem:[%s302 + $0x4d0] sm:$0xff]
        %v2122 = vld [vmem:[%s302 + $0x4d8] sm:$0xff]
        %v2123 = vld [vmem:[%s302 + $0x4e0] sm:$0xff]
        %v2124 = vld [vmem:[%s302 + $0x4e8] sm:$0xff]
        %v2125 = vld [vmem:[%s302 + $0x4f0] sm:$0xff]
        %v2126 = vld [vmem:[%s302 + $0x4f8] sm:$0xff]
        %v2127 = vld [vmem:[%s302 + $0x500] sm:$0xff]
        %v2128 = vld [vmem:[%s302 + $0x508] sm:$0xff]
        %v2129 = vld [vmem:[%s302 + $0x510] sm:$0xff]
        %v2130 = vld [vmem:[%s302 + $0x518] sm:$0xff]
        %v2131 = vld [vmem:[%s302 + $0x520] sm:$0xff]
        %v2132 = vld [vmem:[%s302 + $0x528] sm:$0xff]
        %v2133 = vld [vmem:[%s302 + $0x530] sm:$0xff]
        %v2134 = vld [vmem:[%s302 + $0x538] sm:$0xff]
        %v2135 = vld [vmem:[%s302 + $0x540] sm:$0xff]
        %v2136 = vld [vmem:[%s302 + $0x548] sm:$0xff]
        %v2137 = vld [vmem:[%s302 + $0x550] sm:$0xff]
        %v2138 = vld [vmem:[%s302 + $0x558] sm:$0xff]
        %v2139 = vld [vmem:[%s302 + $0x560] sm:$0xff]
        %v2140 = vld [vmem:[%s302 + $0x568] sm:$0xff]
        %v2141 = vld [vmem:[%s302 + $0x570] sm:$0xff]
        %v2142 = vld [vmem:[%s302 + $0x578] sm:$0xff]
        %v2143 = vld [vmem:[%s302 + $0x580] sm:$0xff]
        %v2144 = vld [vmem:[%s302 + $0x588] sm:$0xff]
        %v2145 = vld [vmem:[%s302 + $0x590] sm:$0xff]
        %v2146 = vld [vmem:[%s302 + $0x598] sm:$0xff]
        %v2147 = vld [vmem:[%s302 + $0x5a0] sm:$0xff]
        %v2148 = vld [vmem:[%s302 + $0x5a8] sm:$0xff]
        %v2149 = vld [vmem:[%s302 + $0x5b0] sm:$0xff]
        %v2150 = vld [vmem:[%s302 + $0x5b8] sm:$0xff]
        %v2151 = vld [vmem:[%s302 + $0x5c0] sm:$0xff]
        %v2152 = vld [vmem:[%s302 + $0x5c8] sm:$0xff]
        %v2153 = vld [vmem:[%s302 + $0x5d0] sm:$0xff]
        %v2154 = vld [vmem:[%s302 + $0x5d8] sm:$0xff]
        %v2155 = vld [vmem:[%s302 + $0x5e0] sm:$0xff]
        %v2156 = vld [vmem:[%s302 + $0x5e8] sm:$0xff]
        %v2157 = vld [vmem:[%s302 + $0x5f0] sm:$0xff]
        %v2158 = vld [vmem:[%s302 + $0x5f8] sm:$0xff]
        %v2159 = vld [vmem:[%s302 + $0x600] sm:$0xff]
        %v2160 = vld [vmem:[%s302 + $0x608] sm:$0xff]
        %v2161 = vld [vmem:[%s302 + $0x610] sm:$0xff]
        %v2162 = vld [vmem:[%s302 + $0x618] sm:$0xff]
        %v2163 = vld [vmem:[%s302 + $0x620] sm:$0xff]
        %v2164 = vld [vmem:[%s302 + $0x628] sm:$0xff]
        %v2165 = vld [vmem:[%s302 + $0x630] sm:$0xff]
        %v2166 = vld [vmem:[%s302 + $0x638] sm:$0xff]
        %v2167 = vld [vmem:[%s302 + $0x640] sm:$0xff]
        %v2168 = vld [vmem:[%s302 + $0x648] sm:$0xff]
        %v2169 = vld [vmem:[%s302 + $0x650] sm:$0xff]
        %v2170 = vld [vmem:[%s302 + $0x658] sm:$0xff]
        %v2171 = vld [vmem:[%s302 + $0x660] sm:$0xff]
        %v2172 = vld [vmem:[%s302 + $0x668] sm:$0xff]
        %v2173 = vld [vmem:[%s302 + $0x670] sm:$0xff]
        %v2174 = vld [vmem:[%s302 + $0x678] sm:$0xff]
        %v2175 = vld [vmem:[%s302 + $0x680] sm:$0xff]
        %v2176 = vld [vmem:[%s302 + $0x688] sm:$0xff]
        %v2177 = vld [vmem:[%s302 + $0x690] sm:$0xff]
        %v2178 = vld [vmem:[%s302 + $0x698] sm:$0xff]
        %v2179 = vld [vmem:[%s302 + $0x6a0] sm:$0xff]
        %v2180 = vld [vmem:[%s302 + $0x6a8] sm:$0xff]
        %v2181 = vld [vmem:[%s302 + $0x6b0] sm:$0xff]
        %v2182 = vld [vmem:[%s302 + $0x6b8] sm:$0xff]
        %v2183 = vld [vmem:[%s302 + $0x6c0] sm:$0xff]
        %v2184 = vld [vmem:[%s302 + $0x6c8] sm:$0xff]
        %v2185 = vld [vmem:[%s302 + $0x6d0] sm:$0xff]
        %v2186 = vld [vmem:[%s302 + $0x6d8] sm:$0xff]
        %v2187 = vld [vmem:[%s302 + $0x6e0] sm:$0xff]
        %v2188 = vld [vmem:[%s302 + $0x6e8] sm:$0xff]
        %v2189 = vld [vmem:[%s302 + $0x6f0] sm:$0xff]
        %v2190 = vld [vmem:[%s302 + $0x6f8] sm:$0xff]
        %v2191 = vld [vmem:[%s302 + $0x700] sm:$0xff]
        %v2192 = vld [vmem:[%s302 + $0x708] sm:$0xff]
        %v2193 = vld [vmem:[%s302 + $0x710] sm:$0xff]
        %v2194 = vld [vmem:[%s302 + $0x718] sm:$0xff]
        %v2195 = vld [vmem:[%s302 + $0x720] sm:$0xff]
        %v2196 = vld [vmem:[%s302 + $0x728] sm:$0xff]
        %v2197 = vld [vmem:[%s302 + $0x730] sm:$0xff]
        %v2198 = vld [vmem:[%s302 + $0x738] sm:$0xff]
        %v2199 = vld [vmem:[%s302 + $0x740] sm:$0xff]
        %v2200 = vld [vmem:[%s302 + $0x748] sm:$0xff]
        %v2201 = vld [vmem:[%s302 + $0x750] sm:$0xff]
        %v2202 = vld [vmem:[%s302 + $0x758] sm:$0xff]
        %v2203 = vld [vmem:[%s302 + $0x760] sm:$0xff]
        %v2204 = vld [vmem:[%s302 + $0x768] sm:$0xff]
        %v2205 = vld [vmem:[%s302 + $0x770] sm:$0xff]
        %v2206 = vld [vmem:[%s302 + $0x778] sm:$0xff]
        %v2207 = vld [vmem:[%s302 + $0x780] sm:$0xff]
        %v2208 = vld [vmem:[%s302 + $0x788] sm:$0xff]
        %v2209 = vld [vmem:[%s302 + $0x790] sm:$0xff]
        %v2210 = vld [vmem:[%s302 + $0x798] sm:$0xff]
        %v2211 = vld [vmem:[%s302 + $0x7a0] sm:$0xff]
        %v2212 = vld [vmem:[%s302 + $0x7a8] sm:$0xff]
        %v2213 = vld [vmem:[%s302 + $0x7b0] sm:$0xff]
        %v2214 = vld [vmem:[%s302 + $0x7b8] sm:$0xff]
        %v2215 = vld [vmem:[%s302 + $0x7c0] sm:$0xff]
        %v2216 = vld [vmem:[%s302 + $0x7c8] sm:$0xff]
        %v2217 = vld [vmem:[%s302 + $0x7d0] sm:$0xff]
        %v2218 = vld [vmem:[%s302 + $0x7d8] sm:$0xff]
        %v2219 = vld [vmem:[%s302 + $0x7e0] sm:$0xff]
        %v2220 = vld [vmem:[%s302 + $0x7e8] sm:$0xff]
        %v2221 = vld [vmem:[%s302 + $0x7f0] sm:$0xff]
        %v2222 = vld [vmem:[%s302 + $0x7f8] sm:$0xff]
        %v2223 = vld [vmem:[%s311] sm:$0xff]
        %v2224 = vld [vmem:[%s311 + $0x8] sm:$0xff]
        %v2227 = vlaneseq
        %v2228 = vshrl.u32 %v2227, 7
        %v2229 = vsub.s32 0, %v2228
        %v2230 = vrot.slane %v2223, %v2229
        %v2231 = vlaneseq
        %v2232 = vshrl.u32 %v2231, 7
        %v2233 = vsub.s32 1, %v2232
        %v2234 = vrot.slane %v2223, %v2233
        %v2235 = vlaneseq
        %v2236 = vshrl.u32 %v2235, 7
        %v2237 = vsub.s32 2, %v2236
        %v2238 = vrot.slane %v2223, %v2237
        %v2239 = vlaneseq
        %v2240 = vshrl.u32 %v2239, 7
        %v2241 = vsub.s32 3, %v2240
        %v2242 = vrot.slane %v2223, %v2241
        %v2243 = vlaneseq
        %v2244 = vshrl.u32 %v2243, 7
        %v2245 = vsub.s32 4, %v2244
        %v2246 = vrot.slane %v2223, %v2245
        %v2247 = vlaneseq
        %v2248 = vshrl.u32 %v2247, 7
        %v2249 = vsub.s32 5, %v2248
        %v2250 = vrot.slane %v2223, %v2249
        %v2251 = vlaneseq
        %v2252 = vshrl.u32 %v2251, 7
        %v2253 = vsub.s32 6, %v2252
        %v2254 = vrot.slane %v2223, %v2253
        %v2255 = vlaneseq
        %v2256 = vshrl.u32 %v2255, 7
        %v2257 = vsub.s32 7, %v2256
        %v2258 = vrot.slane %v2223, %v2257
        %v2259 = vlaneseq
        %v2260 = vshrl.u32 %v2259, 7
        %v2261 = vsub.s32 0, %v2260
        %v2262 = vrot.slane %v2224, %v2261
        %v2263 = vlaneseq
        %v2264 = vshrl.u32 %v2263, 7
        %v2265 = vsub.s32 1, %v2264
        %v2266 = vrot.slane %v2224, %v2265
        %v2267 = vlaneseq
        %v2268 = vshrl.u32 %v2267, 7
        %v2269 = vsub.s32 2, %v2268
        %v2270 = vrot.slane %v2224, %v2269
        %v2271 = vlaneseq
        %v2272 = vshrl.u32 %v2271, 7
        %v2273 = vsub.s32 3, %v2272
        %v2274 = vrot.slane %v2224, %v2273
        %v2275 = vlaneseq
        %v2276 = vshrl.u32 %v2275, 7
        %v2277 = vsub.s32 4, %v2276
        %v2278 = vrot.slane %v2224, %v2277
        %v2279 = vlaneseq
        %v2280 = vshrl.u32 %v2279, 7
        %v2281 = vsub.s32 5, %v2280
        %v2282 = vrot.slane %v2224, %v2281
        %v2283 = vlaneseq
        %v2284 = vshrl.u32 %v2283, 7
        %v2285 = vsub.s32 6, %v2284
        %v2286 = vrot.slane %v2224, %v2285
        %v2287 = vlaneseq
        %v2288 = vshrl.u32 %v2287, 7
        %v2289 = vsub.s32 7, %v2288
        %v2290 = vrot.slane %v2224, %v2289
        %v2563 = vunpack.c.l.b16 %v1967
        %v2564 = vunpack.c.h.b16 %v1967
        %v2565 = vunpack.c.l.b16 %v1968
        %v2566 = vunpack.c.h.b16 %v1968
        %v2567 = vunpack.c.l.b16 %v1969
        %v2568 = vunpack.c.h.b16 %v1969
        %v2569 = vunpack.c.l.b16 %v1970
        %v2570 = vunpack.c.h.b16 %v1970
        %v2571 = vunpack.c.l.b16 %v1971
        %v2572 = vunpack.c.h.b16 %v1971
        %v2573 = vunpack.c.l.b16 %v1972
        %v2574 = vunpack.c.h.b16 %v1972
        %v2575 = vunpack.c.l.b16 %v1973
        %v2576 = vunpack.c.h.b16 %v1973
        %v2577 = vunpack.c.l.b16 %v1974
        %v2578 = vunpack.c.h.b16 %v1974
        %v2579 = vunpack.c.l.b16 %v1975
        %v2580 = vunpack.c.h.b16 %v1975
        %v2581 = vunpack.c.l.b16 %v1976
        %v2582 = vunpack.c.h.b16 %v1976
        %v2583 = vunpack.c.l.b16 %v1977
        %v2584 = vunpack.c.h.b16 %v1977
        %v2585 = vunpack.c.l.b16 %v1978
        %v2586 = vunpack.c.h.b16 %v1978
        %v2587 = vunpack.c.l.b16 %v1979
        %v2588 = vunpack.c.h.b16 %v1979
        %v2589 = vunpack.c.l.b16 %v1980
        %v2590 = vunpack.c.h.b16 %v1980
        %v2591 = vunpack.c.l.b16 %v1981
        %v2592 = vunpack.c.h.b16 %v1981
        %v2593 = vunpack.c.l.b16 %v1982
        %v2594 = vunpack.c.h.b16 %v1982
        %v2595 = vunpack.c.l.b16 %v1983
        %v2596 = vunpack.c.h.b16 %v1983
        %v2597 = vunpack.c.l.b16 %v1984
        %v2598 = vunpack.c.h.b16 %v1984
        %v2599 = vunpack.c.l.b16 %v1985
        %v2600 = vunpack.c.h.b16 %v1985
        %v2601 = vunpack.c.l.b16 %v1986
        %v2602 = vunpack.c.h.b16 %v1986
        %v2603 = vunpack.c.l.b16 %v1987
        %v2604 = vunpack.c.h.b16 %v1987
        %v2605 = vunpack.c.l.b16 %v1988
        %v2606 = vunpack.c.h.b16 %v1988
        %v2607 = vunpack.c.l.b16 %v1989
        %v2608 = vunpack.c.h.b16 %v1989
        %v2609 = vunpack.c.l.b16 %v1990
        %v2610 = vunpack.c.h.b16 %v1990
        %v2611 = vunpack.c.l.b16 %v1991
        %v2612 = vunpack.c.h.b16 %v1991
        %v2613 = vunpack.c.l.b16 %v1992
        %v2614 = vunpack.c.h.b16 %v1992
        %v2615 = vunpack.c.l.b16 %v1993
        %v2616 = vunpack.c.h.b16 %v1993
        %v2617 = vunpack.c.l.b16 %v1994
        %v2618 = vunpack.c.h.b16 %v1994
        %v2619 = vunpack.c.l.b16 %v1995
        %v2620 = vunpack.c.h.b16 %v1995
        %v2621 = vunpack.c.l.b16 %v1996
        %v2622 = vunpack.c.h.b16 %v1996
        %v2623 = vunpack.c.l.b16 %v1997
        %v2624 = vunpack.c.h.b16 %v1997
        %v2625 = vunpack.c.l.b16 %v1998
        %v2626 = vunpack.c.h.b16 %v1998
        %v2627 = vunpack.c.l.b16 %v1999
        %v2628 = vunpack.c.h.b16 %v1999
        %v2629 = vunpack.c.l.b16 %v2000
        %v2630 = vunpack.c.h.b16 %v2000
        %v2631 = vunpack.c.l.b16 %v2001
        %v2632 = vunpack.c.h.b16 %v2001
        %v2633 = vunpack.c.l.b16 %v2002
        %v2634 = vunpack.c.h.b16 %v2002
        %v2635 = vunpack.c.l.b16 %v2003
        %v2636 = vunpack.c.h.b16 %v2003
        %v2637 = vunpack.c.l.b16 %v2004
        %v2638 = vunpack.c.h.b16 %v2004
        %v2639 = vunpack.c.l.b16 %v2005
        %v2640 = vunpack.c.h.b16 %v2005
        %v2641 = vunpack.c.l.b16 %v2006
        %v2642 = vunpack.c.h.b16 %v2006
        %v2643 = vunpack.c.l.b16 %v2007
        %v2644 = vunpack.c.h.b16 %v2007
        %v2645 = vunpack.c.l.b16 %v2008
        %v2646 = vunpack.c.h.b16 %v2008
        %v2647 = vunpack.c.l.b16 %v2009
        %v2648 = vunpack.c.h.b16 %v2009
        %v2649 = vunpack.c.l.b16 %v2010
        %v2650 = vunpack.c.h.b16 %v2010
        %v2651 = vunpack.c.l.b16 %v2011
        %v2652 = vunpack.c.h.b16 %v2011
        %v2653 = vunpack.c.l.b16 %v2012
        %v2654 = vunpack.c.h.b16 %v2012
        %v2655 = vunpack.c.l.b16 %v2013
        %v2656 = vunpack.c.h.b16 %v2013
        %v2657 = vunpack.c.l.b16 %v2014
        %v2658 = vunpack.c.h.b16 %v2014
        %v2659 = vunpack.c.l.b16 %v2015
        %v2660 = vunpack.c.h.b16 %v2015
        %v2661 = vunpack.c.l.b16 %v2016
        %v2662 = vunpack.c.h.b16 %v2016
        %v2663 = vunpack.c.l.b16 %v2017
        %v2664 = vunpack.c.h.b16 %v2017
        %v2665 = vunpack.c.l.b16 %v2018
        %v2666 = vunpack.c.h.b16 %v2018
        %v2667 = vunpack.c.l.b16 %v2019
        %v2668 = vunpack.c.h.b16 %v2019
        %v2669 = vunpack.c.l.b16 %v2020
        %v2670 = vunpack.c.h.b16 %v2020
        %v2671 = vunpack.c.l.b16 %v2021
        %v2672 = vunpack.c.h.b16 %v2021
        %v2673 = vunpack.c.l.b16 %v2022
        %v2674 = vunpack.c.h.b16 %v2022
        %v2675 = vunpack.c.l.b16 %v2023
        %v2676 = vunpack.c.h.b16 %v2023
        %v2677 = vunpack.c.l.b16 %v2024
        %v2678 = vunpack.c.h.b16 %v2024
        %v2679 = vunpack.c.l.b16 %v2025
        %v2680 = vunpack.c.h.b16 %v2025
        %v2681 = vunpack.c.l.b16 %v2026
        %v2682 = vunpack.c.h.b16 %v2026
        %v2683 = vunpack.c.l.b16 %v2027
        %v2684 = vunpack.c.h.b16 %v2027
        %v2685 = vunpack.c.l.b16 %v2028
        %v2686 = vunpack.c.h.b16 %v2028
        %v2687 = vunpack.c.l.b16 %v2029
        %v2688 = vunpack.c.h.b16 %v2029
        %v2689 = vunpack.c.l.b16 %v2030
        %v2690 = vunpack.c.h.b16 %v2030
        %v2691 = vunpack.c.l.b16 %v2031
        %v2692 = vunpack.c.h.b16 %v2031
        %v2693 = vunpack.c.l.b16 %v2032
        %v2694 = vunpack.c.h.b16 %v2032
        %v2695 = vunpack.c.l.b16 %v2033
        %v2696 = vunpack.c.h.b16 %v2033
        %v2697 = vunpack.c.l.b16 %v2034
        %v2698 = vunpack.c.h.b16 %v2034
        %v2699 = vunpack.c.l.b16 %v2035
        %v2700 = vunpack.c.h.b16 %v2035
        %v2701 = vunpack.c.l.b16 %v2036
        %v2702 = vunpack.c.h.b16 %v2036
        %v2703 = vunpack.c.l.b16 %v2037
        %v2704 = vunpack.c.h.b16 %v2037
        %v2705 = vunpack.c.l.b16 %v2038
        %v2706 = vunpack.c.h.b16 %v2038
        %v2707 = vunpack.c.l.b16 %v2039
        %v2708 = vunpack.c.h.b16 %v2039
        %v2709 = vunpack.c.l.b16 %v2040
        %v2710 = vunpack.c.h.b16 %v2040
        %v2711 = vunpack.c.l.b16 %v2041
        %v2712 = vunpack.c.h.b16 %v2041
        %v2713 = vunpack.c.l.b16 %v2042
        %v2714 = vunpack.c.h.b16 %v2042
        %v2715 = vunpack.c.l.b16 %v2043
        %v2716 = vunpack.c.h.b16 %v2043
        %v2717 = vunpack.c.l.b16 %v2044
        %v2718 = vunpack.c.h.b16 %v2044
        %v2719 = vunpack.c.l.b16 %v2045
        %v2720 = vunpack.c.h.b16 %v2045
        %v2721 = vunpack.c.l.b16 %v2046
        %v2722 = vunpack.c.h.b16 %v2046
        %v2723 = vunpack.c.l.b16 %v2047
        %v2724 = vunpack.c.h.b16 %v2047
        %v2725 = vunpack.c.l.b16 %v2048
        %v2726 = vunpack.c.h.b16 %v2048
        %v2727 = vunpack.c.l.b16 %v2049
        %v2728 = vunpack.c.h.b16 %v2049
        %v2729 = vunpack.c.l.b16 %v2050
        %v2730 = vunpack.c.h.b16 %v2050
        %v2731 = vunpack.c.l.b16 %v2051
        %v2732 = vunpack.c.h.b16 %v2051
        %v2733 = vunpack.c.l.b16 %v2052
        %v2734 = vunpack.c.h.b16 %v2052
        %v2735 = vunpack.c.l.b16 %v2053
        %v2736 = vunpack.c.h.b16 %v2053
        %v2737 = vunpack.c.l.b16 %v2054
        %v2738 = vunpack.c.h.b16 %v2054
        %v2739 = vunpack.c.l.b16 %v2055
        %v2740 = vunpack.c.h.b16 %v2055
        %v2741 = vunpack.c.l.b16 %v2056
        %v2742 = vunpack.c.h.b16 %v2056
        %v2743 = vunpack.c.l.b16 %v2057
        %v2744 = vunpack.c.h.b16 %v2057
        %v2745 = vunpack.c.l.b16 %v2058
        %v2746 = vunpack.c.h.b16 %v2058
        %v2747 = vunpack.c.l.b16 %v2059
        %v2748 = vunpack.c.h.b16 %v2059
        %v2749 = vunpack.c.l.b16 %v2060
        %v2750 = vunpack.c.h.b16 %v2060
        %v2751 = vunpack.c.l.b16 %v2061
        %v2752 = vunpack.c.h.b16 %v2061
        %v2753 = vunpack.c.l.b16 %v2062
        %v2754 = vunpack.c.h.b16 %v2062
        %v2755 = vunpack.c.l.b16 %v2063
        %v2756 = vunpack.c.h.b16 %v2063
        %v2757 = vunpack.c.l.b16 %v2064
        %v2758 = vunpack.c.h.b16 %v2064
        %v2759 = vunpack.c.l.b16 %v2065
        %v2760 = vunpack.c.h.b16 %v2065
        %v2761 = vunpack.c.l.b16 %v2066
        %v2762 = vunpack.c.h.b16 %v2066
        %v2763 = vunpack.c.l.b16 %v2067
        %v2764 = vunpack.c.h.b16 %v2067
        %v2765 = vunpack.c.l.b16 %v2068
        %v2766 = vunpack.c.h.b16 %v2068
        %v2767 = vunpack.c.l.b16 %v2069
        %v2768 = vunpack.c.h.b16 %v2069
        %v2769 = vunpack.c.l.b16 %v2070
        %v2770 = vunpack.c.h.b16 %v2070
        %v2771 = vunpack.c.l.b16 %v2071
        %v2772 = vunpack.c.h.b16 %v2071
        %v2773 = vunpack.c.l.b16 %v2072
        %v2774 = vunpack.c.h.b16 %v2072
        %v2775 = vunpack.c.l.b16 %v2073
        %v2776 = vunpack.c.h.b16 %v2073
        %v2777 = vunpack.c.l.b16 %v2074
        %v2778 = vunpack.c.h.b16 %v2074
        %v2779 = vunpack.c.l.b16 %v2075
        %v2780 = vunpack.c.h.b16 %v2075
        %v2781 = vunpack.c.l.b16 %v2076
        %v2782 = vunpack.c.h.b16 %v2076
        %v2783 = vunpack.c.l.b16 %v2077
        %v2784 = vunpack.c.h.b16 %v2077
        %v2785 = vunpack.c.l.b16 %v2078
        %v2786 = vunpack.c.h.b16 %v2078
        %v2787 = vunpack.c.l.b16 %v2079
        %v2788 = vunpack.c.h.b16 %v2079
        %v2789 = vunpack.c.l.b16 %v2080
        %v2790 = vunpack.c.h.b16 %v2080
        %v2791 = vunpack.c.l.b16 %v2081
        %v2792 = vunpack.c.h.b16 %v2081
        %v2793 = vunpack.c.l.b16 %v2082
        %v2794 = vunpack.c.h.b16 %v2082
        %v2795 = vunpack.c.l.b16 %v2083
        %v2796 = vunpack.c.h.b16 %v2083
        %v2797 = vunpack.c.l.b16 %v2084
        %v2798 = vunpack.c.h.b16 %v2084
        %v2799 = vunpack.c.l.b16 %v2085
        %v2800 = vunpack.c.h.b16 %v2085
        %v2801 = vunpack.c.l.b16 %v2086
        %v2802 = vunpack.c.h.b16 %v2086
        %v2803 = vunpack.c.l.b16 %v2087
        %v2804 = vunpack.c.h.b16 %v2087
        %v2805 = vunpack.c.l.b16 %v2088
        %v2806 = vunpack.c.h.b16 %v2088
        %v2807 = vunpack.c.l.b16 %v2089
        %v2808 = vunpack.c.h.b16 %v2089
        %v2809 = vunpack.c.l.b16 %v2090
        %v2810 = vunpack.c.h.b16 %v2090
        %v2811 = vunpack.c.l.b16 %v2091
        %v2812 = vunpack.c.h.b16 %v2091
        %v2813 = vunpack.c.l.b16 %v2092
        %v2814 = vunpack.c.h.b16 %v2092
        %v2815 = vunpack.c.l.b16 %v2093
        %v2816 = vunpack.c.h.b16 %v2093
        %v2817 = vunpack.c.l.b16 %v2094
        %v2818 = vunpack.c.h.b16 %v2094
        %v2819 = vunpack.c.l.b16 %v2095
        %v2820 = vunpack.c.h.b16 %v2095
        %v2821 = vunpack.c.l.b16 %v2096
        %v2822 = vunpack.c.h.b16 %v2096
        %v2823 = vunpack.c.l.b16 %v2097
        %v2824 = vunpack.c.h.b16 %v2097
        %v2825 = vunpack.c.l.b16 %v2098
        %v2826 = vunpack.c.h.b16 %v2098
        %v2827 = vunpack.c.l.b16 %v2099
        %v2828 = vunpack.c.h.b16 %v2099
        %v2829 = vunpack.c.l.b16 %v2100
        %v2830 = vunpack.c.h.b16 %v2100
        %v2831 = vunpack.c.l.b16 %v2101
        %v2832 = vunpack.c.h.b16 %v2101
        %v2833 = vunpack.c.l.b16 %v2102
        %v2834 = vunpack.c.h.b16 %v2102
        %v2835 = vunpack.c.l.b16 %v2103
        %v2836 = vunpack.c.h.b16 %v2103
        %v2837 = vunpack.c.l.b16 %v2104
        %v2838 = vunpack.c.h.b16 %v2104
        %v2839 = vunpack.c.l.b16 %v2105
        %v2840 = vunpack.c.h.b16 %v2105
        %v2841 = vunpack.c.l.b16 %v2106
        %v2842 = vunpack.c.h.b16 %v2106
        %v2843 = vunpack.c.l.b16 %v2107
        %v2844 = vunpack.c.h.b16 %v2107
        %v2845 = vunpack.c.l.b16 %v2108
        %v2846 = vunpack.c.h.b16 %v2108
        %v2847 = vunpack.c.l.b16 %v2109
        %v2848 = vunpack.c.h.b16 %v2109
        %v2849 = vunpack.c.l.b16 %v2110
        %v2850 = vunpack.c.h.b16 %v2110
        %v2851 = vunpack.c.l.b16 %v2111
        %v2852 = vunpack.c.h.b16 %v2111
        %v2853 = vunpack.c.l.b16 %v2112
        %v2854 = vunpack.c.h.b16 %v2112
        %v2855 = vunpack.c.l.b16 %v2113
        %v2856 = vunpack.c.h.b16 %v2113
        %v2857 = vunpack.c.l.b16 %v2114
        %v2858 = vunpack.c.h.b16 %v2114
        %v2859 = vunpack.c.l.b16 %v2115
        %v2860 = vunpack.c.h.b16 %v2115
        %v2861 = vunpack.c.l.b16 %v2116
        %v2862 = vunpack.c.h.b16 %v2116
        %v2863 = vunpack.c.l.b16 %v2117
        %v2864 = vunpack.c.h.b16 %v2117
        %v2865 = vunpack.c.l.b16 %v2118
        %v2866 = vunpack.c.h.b16 %v2118
        %v2867 = vunpack.c.l.b16 %v2119
        %v2868 = vunpack.c.h.b16 %v2119
        %v2869 = vunpack.c.l.b16 %v2120
        %v2870 = vunpack.c.h.b16 %v2120
        %v2871 = vunpack.c.l.b16 %v2121
        %v2872 = vunpack.c.h.b16 %v2121
        %v2873 = vunpack.c.l.b16 %v2122
        %v2874 = vunpack.c.h.b16 %v2122
        %v2875 = vunpack.c.l.b16 %v2123
        %v2876 = vunpack.c.h.b16 %v2123
        %v2877 = vunpack.c.l.b16 %v2124
        %v2878 = vunpack.c.h.b16 %v2124
        %v2879 = vunpack.c.l.b16 %v2125
        %v2880 = vunpack.c.h.b16 %v2125
        %v2881 = vunpack.c.l.b16 %v2126
        %v2882 = vunpack.c.h.b16 %v2126
        %v2883 = vunpack.c.l.b16 %v2127
        %v2884 = vunpack.c.h.b16 %v2127
        %v2885 = vunpack.c.l.b16 %v2128
        %v2886 = vunpack.c.h.b16 %v2128
        %v2887 = vunpack.c.l.b16 %v2129
        %v2888 = vunpack.c.h.b16 %v2129
        %v2889 = vunpack.c.l.b16 %v2130
        %v2890 = vunpack.c.h.b16 %v2130
        %v2891 = vunpack.c.l.b16 %v2131
        %v2892 = vunpack.c.h.b16 %v2131
        %v2893 = vunpack.c.l.b16 %v2132
        %v2894 = vunpack.c.h.b16 %v2132
        %v2895 = vunpack.c.l.b16 %v2133
        %v2896 = vunpack.c.h.b16 %v2133
        %v2897 = vunpack.c.l.b16 %v2134
        %v2898 = vunpack.c.h.b16 %v2134
        %v2899 = vunpack.c.l.b16 %v2135
        %v2900 = vunpack.c.h.b16 %v2135
        %v2901 = vunpack.c.l.b16 %v2136
        %v2902 = vunpack.c.h.b16 %v2136
        %v2903 = vunpack.c.l.b16 %v2137
        %v2904 = vunpack.c.h.b16 %v2137
        %v2905 = vunpack.c.l.b16 %v2138
        %v2906 = vunpack.c.h.b16 %v2138
        %v2907 = vunpack.c.l.b16 %v2139
        %v2908 = vunpack.c.h.b16 %v2139
        %v2909 = vunpack.c.l.b16 %v2140
        %v2910 = vunpack.c.h.b16 %v2140
        %v2911 = vunpack.c.l.b16 %v2141
        %v2912 = vunpack.c.h.b16 %v2141
        %v2913 = vunpack.c.l.b16 %v2142
        %v2914 = vunpack.c.h.b16 %v2142
        %v2915 = vunpack.c.l.b16 %v2143
        %v2916 = vunpack.c.h.b16 %v2143
        %v2917 = vunpack.c.l.b16 %v2144
        %v2918 = vunpack.c.h.b16 %v2144
        %v2919 = vunpack.c.l.b16 %v2145
        %v2920 = vunpack.c.h.b16 %v2145
        %v2921 = vunpack.c.l.b16 %v2146
        %v2922 = vunpack.c.h.b16 %v2146
        %v2923 = vunpack.c.l.b16 %v2147
        %v2924 = vunpack.c.h.b16 %v2147
        %v2925 = vunpack.c.l.b16 %v2148
        %v2926 = vunpack.c.h.b16 %v2148
        %v2927 = vunpack.c.l.b16 %v2149
        %v2928 = vunpack.c.h.b16 %v2149
        %v2929 = vunpack.c.l.b16 %v2150
        %v2930 = vunpack.c.h.b16 %v2150
        %v2931 = vunpack.c.l.b16 %v2151
        %v2932 = vunpack.c.h.b16 %v2151
        %v2933 = vunpack.c.l.b16 %v2152
        %v2934 = vunpack.c.h.b16 %v2152
        %v2935 = vunpack.c.l.b16 %v2153
        %v2936 = vunpack.c.h.b16 %v2153
        %v2937 = vunpack.c.l.b16 %v2154
        %v2938 = vunpack.c.h.b16 %v2154
        %v2939 = vunpack.c.l.b16 %v2155
        %v2940 = vunpack.c.h.b16 %v2155
        %v2941 = vunpack.c.l.b16 %v2156
        %v2942 = vunpack.c.h.b16 %v2156
        %v2943 = vunpack.c.l.b16 %v2157
        %v2944 = vunpack.c.h.b16 %v2157
        %v2945 = vunpack.c.l.b16 %v2158
        %v2946 = vunpack.c.h.b16 %v2158
        %v2947 = vunpack.c.l.b16 %v2159
        %v2948 = vunpack.c.h.b16 %v2159
        %v2949 = vunpack.c.l.b16 %v2160
        %v2950 = vunpack.c.h.b16 %v2160
        %v2951 = vunpack.c.l.b16 %v2161
        %v2952 = vunpack.c.h.b16 %v2161
        %v2953 = vunpack.c.l.b16 %v2162
        %v2954 = vunpack.c.h.b16 %v2162
        %v2955 = vunpack.c.l.b16 %v2163
        %v2956 = vunpack.c.h.b16 %v2163
        %v2957 = vunpack.c.l.b16 %v2164
        %v2958 = vunpack.c.h.b16 %v2164
        %v2959 = vunpack.c.l.b16 %v2165
        %v2960 = vunpack.c.h.b16 %v2165
        %v2961 = vunpack.c.l.b16 %v2166
        %v2962 = vunpack.c.h.b16 %v2166
        %v2963 = vunpack.c.l.b16 %v2167
        %v2964 = vunpack.c.h.b16 %v2167
        %v2965 = vunpack.c.l.b16 %v2168
        %v2966 = vunpack.c.h.b16 %v2168
        %v2967 = vunpack.c.l.b16 %v2169
        %v2968 = vunpack.c.h.b16 %v2169
        %v2969 = vunpack.c.l.b16 %v2170
        %v2970 = vunpack.c.h.b16 %v2170
        %v2971 = vunpack.c.l.b16 %v2171
        %v2972 = vunpack.c.h.b16 %v2171
        %v2973 = vunpack.c.l.b16 %v2172
        %v2974 = vunpack.c.h.b16 %v2172
        %v2975 = vunpack.c.l.b16 %v2173
        %v2976 = vunpack.c.h.b16 %v2173
        %v2977 = vunpack.c.l.b16 %v2174
        %v2978 = vunpack.c.h.b16 %v2174
        %v2979 = vunpack.c.l.b16 %v2175
        %v2980 = vunpack.c.h.b16 %v2175
        %v2981 = vunpack.c.l.b16 %v2176
        %v2982 = vunpack.c.h.b16 %v2176
        %v2983 = vunpack.c.l.b16 %v2177
        %v2984 = vunpack.c.h.b16 %v2177
        %v2985 = vunpack.c.l.b16 %v2178
        %v2986 = vunpack.c.h.b16 %v2178
        %v2987 = vunpack.c.l.b16 %v2179
        %v2988 = vunpack.c.h.b16 %v2179
        %v2989 = vunpack.c.l.b16 %v2180
        %v2990 = vunpack.c.h.b16 %v2180
        %v2991 = vunpack.c.l.b16 %v2181
        %v2992 = vunpack.c.h.b16 %v2181
        %v2993 = vunpack.c.l.b16 %v2182
        %v2994 = vunpack.c.h.b16 %v2182
        %v2995 = vunpack.c.l.b16 %v2183
        %v2996 = vunpack.c.h.b16 %v2183
        %v2997 = vunpack.c.l.b16 %v2184
        %v2998 = vunpack.c.h.b16 %v2184
        %v2999 = vunpack.c.l.b16 %v2185
        %v3000 = vunpack.c.h.b16 %v2185
        %v3001 = vunpack.c.l.b16 %v2186
        %v3002 = vunpack.c.h.b16 %v2186
        %v3003 = vunpack.c.l.b16 %v2187
        %v3004 = vunpack.c.h.b16 %v2187
        %v3005 = vunpack.c.l.b16 %v2188
        %v3006 = vunpack.c.h.b16 %v2188
        %v3007 = vunpack.c.l.b16 %v2189
        %v3008 = vunpack.c.h.b16 %v2189
        %v3009 = vunpack.c.l.b16 %v2190
        %v3010 = vunpack.c.h.b16 %v2190
        %v3011 = vunpack.c.l.b16 %v2191
        %v3012 = vunpack.c.h.b16 %v2191
        %v3013 = vunpack.c.l.b16 %v2192
        %v3014 = vunpack.c.h.b16 %v2192
        %v3015 = vunpack.c.l.b16 %v2193
        %v3016 = vunpack.c.h.b16 %v2193
        %v3017 = vunpack.c.l.b16 %v2194
        %v3018 = vunpack.c.h.b16 %v2194
        %v3019 = vunpack.c.l.b16 %v2195
        %v3020 = vunpack.c.h.b16 %v2195
        %v3021 = vunpack.c.l.b16 %v2196
        %v3022 = vunpack.c.h.b16 %v2196
        %v3023 = vunpack.c.l.b16 %v2197
        %v3024 = vunpack.c.h.b16 %v2197
        %v3025 = vunpack.c.l.b16 %v2198
        %v3026 = vunpack.c.h.b16 %v2198
        %v3027 = vunpack.c.l.b16 %v2199
        %v3028 = vunpack.c.h.b16 %v2199
        %v3029 = vunpack.c.l.b16 %v2200
        %v3030 = vunpack.c.h.b16 %v2200
        %v3031 = vunpack.c.l.b16 %v2201
        %v3032 = vunpack.c.h.b16 %v2201
        %v3033 = vunpack.c.l.b16 %v2202
        %v3034 = vunpack.c.h.b16 %v2202
        %v3035 = vunpack.c.l.b16 %v2203
        %v3036 = vunpack.c.h.b16 %v2203
        %v3037 = vunpack.c.l.b16 %v2204
        %v3038 = vunpack.c.h.b16 %v2204
        %v3039 = vunpack.c.l.b16 %v2205
        %v3040 = vunpack.c.h.b16 %v2205
        %v3041 = vunpack.c.l.b16 %v2206
        %v3042 = vunpack.c.h.b16 %v2206
        %v3043 = vunpack.c.l.b16 %v2207
        %v3044 = vunpack.c.h.b16 %v2207
        %v3045 = vunpack.c.l.b16 %v2208
        %v3046 = vunpack.c.h.b16 %v2208
        %v3047 = vunpack.c.l.b16 %v2209
        %v3048 = vunpack.c.h.b16 %v2209
        %v3049 = vunpack.c.l.b16 %v2210
        %v3050 = vunpack.c.h.b16 %v2210
        %v3051 = vunpack.c.l.b16 %v2211
        %v3052 = vunpack.c.h.b16 %v2211
        %v3053 = vunpack.c.l.b16 %v2212
        %v3054 = vunpack.c.h.b16 %v2212
        %v3055 = vunpack.c.l.b16 %v2213
        %v3056 = vunpack.c.h.b16 %v2213
        %v3057 = vunpack.c.l.b16 %v2214
        %v3058 = vunpack.c.h.b16 %v2214
        %v3059 = vunpack.c.l.b16 %v2215
        %v3060 = vunpack.c.h.b16 %v2215
        %v3061 = vunpack.c.l.b16 %v2216
        %v3062 = vunpack.c.h.b16 %v2216
        %v3063 = vunpack.c.l.b16 %v2217
        %v3064 = vunpack.c.h.b16 %v2217
        %v3065 = vunpack.c.l.b16 %v2218
        %v3066 = vunpack.c.h.b16 %v2218
        %v3067 = vunpack.c.l.b16 %v2219
        %v3068 = vunpack.c.h.b16 %v2219
        %v3069 = vunpack.c.l.b16 %v2220
        %v3070 = vunpack.c.h.b16 %v2220
        %v3071 = vunpack.c.l.b16 %v2221
        %v3072 = vunpack.c.h.b16 %v2221
        %v3073 = vunpack.c.l.b16 %v2222
        %v3074 = vunpack.c.h.b16 %v2222
        %v3075 = vpack.c.b16 %v2579, %v2563
        %v3076 = vpack.c.b16 %v2580, %v2564
        %v3077 = vpack.c.b16 %v2581, %v2565
        %v3078 = vpack.c.b16 %v2582, %v2566
        %v3079 = vpack.c.b16 %v2583, %v2567
        %v3080 = vpack.c.b16 %v2584, %v2568
        %v3081 = vpack.c.b16 %v2585, %v2569
        %v3082 = vpack.c.b16 %v2586, %v2570
        %v3083 = vpack.c.b16 %v2587, %v2571
        %v3084 = vpack.c.b16 %v2588, %v2572
        %v3085 = vpack.c.b16 %v2589, %v2573
        %v3086 = vpack.c.b16 %v2590, %v2574
        %v3087 = vpack.c.b16 %v2591, %v2575
        %v3088 = vpack.c.b16 %v2592, %v2576
        %v3089 = vpack.c.b16 %v2593, %v2577
        %v3090 = vpack.c.b16 %v2594, %v2578
        %v3091 = vpack.c.b16 %v2611, %v2595
        %v3092 = vpack.c.b16 %v2612, %v2596
        %v3093 = vpack.c.b16 %v2613, %v2597
        %v3094 = vpack.c.b16 %v2614, %v2598
        %v3095 = vpack.c.b16 %v2615, %v2599
        %v3096 = vpack.c.b16 %v2616, %v2600
        %v3097 = vpack.c.b16 %v2617, %v2601
        %v3098 = vpack.c.b16 %v2618, %v2602
        %v3099 = vpack.c.b16 %v2619, %v2603
        %v3100 = vpack.c.b16 %v2620, %v2604
        %v3101 = vpack.c.b16 %v2621, %v2605
        %v3102 = vpack.c.b16 %v2622, %v2606
        %v3103 = vpack.c.b16 %v2623, %v2607
        %v3104 = vpack.c.b16 %v2624, %v2608
        %v3105 = vpack.c.b16 %v2625, %v2609
        %v3106 = vpack.c.b16 %v2626, %v2610
        %v3107 = vpack.c.b16 %v2643, %v2627
        %v3108 = vpack.c.b16 %v2644, %v2628
        %v3109 = vpack.c.b16 %v2645, %v2629
        %v3110 = vpack.c.b16 %v2646, %v2630
        %v3111 = vpack.c.b16 %v2647, %v2631
        %v3112 = vpack.c.b16 %v2648, %v2632
        %v3113 = vpack.c.b16 %v2649, %v2633
        %v3114 = vpack.c.b16 %v2650, %v2634
        %v3115 = vpack.c.b16 %v2651, %v2635
        %v3116 = vpack.c.b16 %v2652, %v2636
        %v3117 = vpack.c.b16 %v2653, %v2637
        %v3118 = vpack.c.b16 %v2654, %v2638
        %v3119 = vpack.c.b16 %v2655, %v2639
        %v3120 = vpack.c.b16 %v2656, %v2640
        %v3121 = vpack.c.b16 %v2657, %v2641
        %v3122 = vpack.c.b16 %v2658, %v2642
        %v3123 = vpack.c.b16 %v2675, %v2659
        %v3124 = vpack.c.b16 %v2676, %v2660
        %v3125 = vpack.c.b16 %v2677, %v2661
        %v3126 = vpack.c.b16 %v2678, %v2662
        %v3127 = vpack.c.b16 %v2679, %v2663
        %v3128 = vpack.c.b16 %v2680, %v2664
        %v3129 = vpack.c.b16 %v2681, %v2665
        %v3130 = vpack.c.b16 %v2682, %v2666
        %v3131 = vpack.c.b16 %v2683, %v2667
        %v3132 = vpack.c.b16 %v2684, %v2668
        %v3133 = vpack.c.b16 %v2685, %v2669
        %v3134 = vpack.c.b16 %v2686, %v2670
        %v3135 = vpack.c.b16 %v2687, %v2671
        %v3136 = vpack.c.b16 %v2688, %v2672
        %v3137 = vpack.c.b16 %v2689, %v2673
        %v3138 = vpack.c.b16 %v2690, %v2674
        %v3139 = vpack.c.b16 %v2707, %v2691
        %v3140 = vpack.c.b16 %v2708, %v2692
        %v3141 = vpack.c.b16 %v2709, %v2693
        %v3142 = vpack.c.b16 %v2710, %v2694
        %v3143 = vpack.c.b16 %v2711, %v2695
        %v3144 = vpack.c.b16 %v2712, %v2696
        %v3145 = vpack.c.b16 %v2713, %v2697
        %v3146 = vpack.c.b16 %v2714, %v2698
        %v3147 = vpack.c.b16 %v2715, %v2699
        %v3148 = vpack.c.b16 %v2716, %v2700
        %v3149 = vpack.c.b16 %v2717, %v2701
        %v3150 = vpack.c.b16 %v2718, %v2702
        %v3151 = vpack.c.b16 %v2719, %v2703
        %v3152 = vpack.c.b16 %v2720, %v2704
        %v3153 = vpack.c.b16 %v2721, %v2705
        %v3154 = vpack.c.b16 %v2722, %v2706
        %v3155 = vpack.c.b16 %v2739, %v2723
        %v3156 = vpack.c.b16 %v2740, %v2724
        %v3157 = vpack.c.b16 %v2741, %v2725
        %v3158 = vpack.c.b16 %v2742, %v2726
        %v3159 = vpack.c.b16 %v2743, %v2727
        %v3160 = vpack.c.b16 %v2744, %v2728
        %v3161 = vpack.c.b16 %v2745, %v2729
        %v3162 = vpack.c.b16 %v2746, %v2730
        %v3163 = vpack.c.b16 %v2747, %v2731
        %v3164 = vpack.c.b16 %v2748, %v2732
        %v3165 = vpack.c.b16 %v2749, %v2733
        %v3166 = vpack.c.b16 %v2750, %v2734
        %v3167 = vpack.c.b16 %v2751, %v2735
        %v3168 = vpack.c.b16 %v2752, %v2736
        %v3169 = vpack.c.b16 %v2753, %v2737
        %v3170 = vpack.c.b16 %v2754, %v2738
        %v3171 = vpack.c.b16 %v2771, %v2755
        %v3172 = vpack.c.b16 %v2772, %v2756
        %v3173 = vpack.c.b16 %v2773, %v2757
        %v3174 = vpack.c.b16 %v2774, %v2758
        %v3175 = vpack.c.b16 %v2775, %v2759
        %v3176 = vpack.c.b16 %v2776, %v2760
        %v3177 = vpack.c.b16 %v2777, %v2761
        %v3178 = vpack.c.b16 %v2778, %v2762
        %v3179 = vpack.c.b16 %v2779, %v2763
        %v3180 = vpack.c.b16 %v2780, %v2764
        %v3181 = vpack.c.b16 %v2781, %v2765
        %v3182 = vpack.c.b16 %v2782, %v2766
        %v3183 = vpack.c.b16 %v2783, %v2767
        %v3184 = vpack.c.b16 %v2784, %v2768
        %v3185 = vpack.c.b16 %v2785, %v2769
        %v3186 = vpack.c.b16 %v2786, %v2770
        %v3187 = vpack.c.b16 %v2803, %v2787
        %v3188 = vpack.c.b16 %v2804, %v2788
        %v3189 = vpack.c.b16 %v2805, %v2789
        %v3190 = vpack.c.b16 %v2806, %v2790
        %v3191 = vpack.c.b16 %v2807, %v2791
        %v3192 = vpack.c.b16 %v2808, %v2792
        %v3193 = vpack.c.b16 %v2809, %v2793
        %v3194 = vpack.c.b16 %v2810, %v2794
        %v3195 = vpack.c.b16 %v2811, %v2795
        %v3196 = vpack.c.b16 %v2812, %v2796
        %v3197 = vpack.c.b16 %v2813, %v2797
        %v3198 = vpack.c.b16 %v2814, %v2798
        %v3199 = vpack.c.b16 %v2815, %v2799
        %v3200 = vpack.c.b16 %v2816, %v2800
        %v3201 = vpack.c.b16 %v2817, %v2801
        %v3202 = vpack.c.b16 %v2818, %v2802
        %v3203 = vpack.c.b16 %v2835, %v2819
        %v3204 = vpack.c.b16 %v2836, %v2820
        %v3205 = vpack.c.b16 %v2837, %v2821
        %v3206 = vpack.c.b16 %v2838, %v2822
        %v3207 = vpack.c.b16 %v2839, %v2823
        %v3208 = vpack.c.b16 %v2840, %v2824
        %v3209 = vpack.c.b16 %v2841, %v2825
        %v3210 = vpack.c.b16 %v2842, %v2826
        %v3211 = vpack.c.b16 %v2843, %v2827
        %v3212 = vpack.c.b16 %v2844, %v2828
        %v3213 = vpack.c.b16 %v2845, %v2829
        %v3214 = vpack.c.b16 %v2846, %v2830
        %v3215 = vpack.c.b16 %v2847, %v2831
        %v3216 = vpack.c.b16 %v2848, %v2832
        %v3217 = vpack.c.b16 %v2849, %v2833
        %v3218 = vpack.c.b16 %v2850, %v2834
        %v3219 = vpack.c.b16 %v2867, %v2851
        %v3220 = vpack.c.b16 %v2868, %v2852
        %v3221 = vpack.c.b16 %v2869, %v2853
        %v3222 = vpack.c.b16 %v2870, %v2854
        %v3223 = vpack.c.b16 %v2871, %v2855
        %v3224 = vpack.c.b16 %v2872, %v2856
        %v3225 = vpack.c.b16 %v2873, %v2857
        %v3226 = vpack.c.b16 %v2874, %v2858
        %v3227 = vpack.c.b16 %v2875, %v2859
        %v3228 = vpack.c.b16 %v2876, %v2860
        %v3229 = vpack.c.b16 %v2877, %v2861
        %v3230 = vpack.c.b16 %v2878, %v2862
        %v3231 = vpack.c.b16 %v2879, %v2863
        %v3232 = vpack.c.b16 %v2880, %v2864
        %v3233 = vpack.c.b16 %v2881, %v2865
        %v3234 = vpack.c.b16 %v2882, %v2866
        %v3235 = vpack.c.b16 %v2899, %v2883
        %v3236 = vpack.c.b16 %v2900, %v2884
        %v3237 = vpack.c.b16 %v2901, %v2885
        %v3238 = vpack.c.b16 %v2902, %v2886
        %v3239 = vpack.c.b16 %v2903, %v2887
        %v3240 = vpack.c.b16 %v2904, %v2888
        %v3241 = vpack.c.b16 %v2905, %v2889
        %v3242 = vpack.c.b16 %v2906, %v2890
        %v3243 = vpack.c.b16 %v2907, %v2891
        %v3244 = vpack.c.b16 %v2908, %v2892
        %v3245 = vpack.c.b16 %v2909, %v2893
        %v3246 = vpack.c.b16 %v2910, %v2894
        %v3247 = vpack.c.b16 %v2911, %v2895
        %v3248 = vpack.c.b16 %v2912, %v2896
        %v3249 = vpack.c.b16 %v2913, %v2897
        %v3250 = vpack.c.b16 %v2914, %v2898
        %v3251 = vpack.c.b16 %v2931, %v2915
        %v3252 = vpack.c.b16 %v2932, %v2916
        %v3253 = vpack.c.b16 %v2933, %v2917
        %v3254 = vpack.c.b16 %v2934, %v2918
        %v3255 = vpack.c.b16 %v2935, %v2919
        %v3256 = vpack.c.b16 %v2936, %v2920
        %v3257 = vpack.c.b16 %v2937, %v2921
        %v3258 = vpack.c.b16 %v2938, %v2922
        %v3259 = vpack.c.b16 %v2939, %v2923
        %v3260 = vpack.c.b16 %v2940, %v2924
        %v3261 = vpack.c.b16 %v2941, %v2925
        %v3262 = vpack.c.b16 %v2942, %v2926
        %v3263 = vpack.c.b16 %v2943, %v2927
        %v3264 = vpack.c.b16 %v2944, %v2928
        %v3265 = vpack.c.b16 %v2945, %v2929
        %v3266 = vpack.c.b16 %v2946, %v2930
        %v3267 = vpack.c.b16 %v2963, %v2947
        %v3268 = vpack.c.b16 %v2964, %v2948
        %v3269 = vpack.c.b16 %v2965, %v2949
        %v3270 = vpack.c.b16 %v2966, %v2950
        %v3271 = vpack.c.b16 %v2967, %v2951
        %v3272 = vpack.c.b16 %v2968, %v2952
        %v3273 = vpack.c.b16 %v2969, %v2953
        %v3274 = vpack.c.b16 %v2970, %v2954
        %v3275 = vpack.c.b16 %v2971, %v2955
        %v3276 = vpack.c.b16 %v2972, %v2956
        %v3277 = vpack.c.b16 %v2973, %v2957
        %v3278 = vpack.c.b16 %v2974, %v2958
        %v3279 = vpack.c.b16 %v2975, %v2959
        %v3280 = vpack.c.b16 %v2976, %v2960
        %v3281 = vpack.c.b16 %v2977, %v2961
        %v3282 = vpack.c.b16 %v2978, %v2962
        %v3283 = vpack.c.b16 %v2995, %v2979
        %v3284 = vpack.c.b16 %v2996, %v2980
        %v3285 = vpack.c.b16 %v2997, %v2981
        %v3286 = vpack.c.b16 %v2998, %v2982
        %v3287 = vpack.c.b16 %v2999, %v2983
        %v3288 = vpack.c.b16 %v3000, %v2984
        %v3289 = vpack.c.b16 %v3001, %v2985
        %v3290 = vpack.c.b16 %v3002, %v2986
        %v3291 = vpack.c.b16 %v3003, %v2987
        %v3292 = vpack.c.b16 %v3004, %v2988
        %v3293 = vpack.c.b16 %v3005, %v2989
        %v3294 = vpack.c.b16 %v3006, %v2990
        %v3295 = vpack.c.b16 %v3007, %v2991
        %v3296 = vpack.c.b16 %v3008, %v2992
        %v3297 = vpack.c.b16 %v3009, %v2993
        %v3298 = vpack.c.b16 %v3010, %v2994
        %v3299 = vpack.c.b16 %v3027, %v3011
        %v3300 = vpack.c.b16 %v3028, %v3012
        %v3301 = vpack.c.b16 %v3029, %v3013
        %v3302 = vpack.c.b16 %v3030, %v3014
        %v3303 = vpack.c.b16 %v3031, %v3015
        %v3304 = vpack.c.b16 %v3032, %v3016
        %v3305 = vpack.c.b16 %v3033, %v3017
        %v3306 = vpack.c.b16 %v3034, %v3018
        %v3307 = vpack.c.b16 %v3035, %v3019
        %v3308 = vpack.c.b16 %v3036, %v3020
        %v3309 = vpack.c.b16 %v3037, %v3021
        %v3310 = vpack.c.b16 %v3038, %v3022
        %v3311 = vpack.c.b16 %v3039, %v3023
        %v3312 = vpack.c.b16 %v3040, %v3024
        %v3313 = vpack.c.b16 %v3041, %v3025
        %v3314 = vpack.c.b16 %v3042, %v3026
        %v3315 = vpack.c.b16 %v3059, %v3043
        %v3316 = vpack.c.b16 %v3060, %v3044
        %v3317 = vpack.c.b16 %v3061, %v3045
        %v3318 = vpack.c.b16 %v3062, %v3046
        %v3319 = vpack.c.b16 %v3063, %v3047
        %v3320 = vpack.c.b16 %v3064, %v3048
        %v3321 = vpack.c.b16 %v3065, %v3049
        %v3322 = vpack.c.b16 %v3066, %v3050
        %v3323 = vpack.c.b16 %v3067, %v3051
        %v3324 = vpack.c.b16 %v3068, %v3052
        %v3325 = vpack.c.b16 %v3069, %v3053
        %v3326 = vpack.c.b16 %v3070, %v3054
        %v3327 = vpack.c.b16 %v3071, %v3055
        %v3328 = vpack.c.b16 %v3072, %v3056
        %v3329 = vpack.c.b16 %v3073, %v3057
        %v3330 = vpack.c.b16 %v3074, %v3058
        %3587 = vmatprep.subr.bf16.mxu0 %v3076
        %3588 = vmatpush1.bf16.msra.mxu0 %v3075
        %3589 = vmatprep.subr.bf16.mxu0 %v3092
        %3590 = vmatpush1.bf16.msra.mxu0 %v3091
        %3591 = vmatprep.subr.bf16.mxu0 %v3108
        %3592 = vmatpush1.bf16.msra.mxu0 %v3107
        %3593 = vmatprep.subr.bf16.mxu0 %v3124
        %3594 = vmatpush1.bf16.msra.mxu0 %v3123
        %3595 = vmatprep.subr.bf16.mxu0 %v3140
        %3596 = vmatpush1.bf16.msra.mxu0 %v3139
        %3597 = vmatprep.subr.bf16.mxu0 %v3156
        %3598 = vmatpush1.bf16.msra.mxu0 %v3155
        %3599 = vmatprep.subr.bf16.mxu0 %v3172
        %3600 = vmatpush1.bf16.msra.mxu0 %v3171
        %3601 = vmatprep.subr.bf16.mxu0 %v3188
        %3602 = vmatpush1.bf16.msra.mxu0 %v3187
        %3603 = vmatprep.subr.bf16.mxu0 %v3204
        %3604 = vmatpush1.bf16.msra.mxu0 %v3203
        %3605 = vmatprep.subr.bf16.mxu0 %v3220
        %3606 = vmatpush1.bf16.msra.mxu0 %v3219
        %3607 = vmatprep.subr.bf16.mxu0 %v3236
        %3608 = vmatpush1.bf16.msra.mxu0 %v3235
        %3609 = vmatprep.subr.bf16.mxu0 %v3252
        %3610 = vmatpush1.bf16.msra.mxu0 %v3251
        %3611 = vmatprep.subr.bf16.mxu0 %v3268
        %3612 = vmatpush1.bf16.msra.mxu0 %v3267
        %3613 = vmatprep.subr.bf16.mxu0 %v3284
        %3614 = vmatpush1.bf16.msra.mxu0 %v3283
        %3615 = vmatprep.subr.bf16.mxu0 %v3300
        %3616 = vmatpush1.bf16.msra.mxu0 %v3299
        %3617 = vmatprep.subr.bf16.mxu0 %v3316
        %3618 = vmatpush1.bf16.msra.mxu0 %v3315
        %3619 = vmatprep.mubr.bf16.mxu0 %v1936
        %3620 = vmatmul.mubr.bf16.gmra.mrb[0].mxu0 %v1935
        %v3621 = vpop.f32.mrb[0].mxu0
        %v3622 = vadd.f32 %v2230, %v3621
        %v3623 = vpop.f32.mrb[0].mxu0
        %v3624 = vadd.f32 %v2234, %v3623
        %v3625 = vpop.f32.mrb[0].mxu0
        %v3626 = vadd.f32 %v2230, %v3625
        %v3627 = vpop.f32.mrb[0].mxu0
        %v3628 = vadd.f32 %v2234, %v3627
        %3629 = vmatprep.mubr.bf16.mxu0 %v1938
        %3630 = vmatmul.mubr.bf16.gmra.mrb[0].mxu0 %v1937
        %v3631 = vpop.f32.mrb[0].mxu0
        %v3632 = vadd.f32 %v2230, %v3631
        %v3633 = vpop.f32.mrb[0].mxu0
        %v3634 = vadd.f32 %v2234, %v3633
        %v3635 = vpop.f32.mrb[0].mxu0
        %v3636 = vadd.f32 %v2230, %v3635
        %v3637 = vpop.f32.mrb[0].mxu0
        %v3638 = vadd.f32 %v2234, %v3637
        %3639 = vmatprep.mubr.bf16.mxu0 %v1940
        %3640 = vmatmul.mubr.bf16.gmra.mrb[0].mxu0 %v1939
        %v3641 = vpop.f32.mrb[0].mxu0
        %v3642 = vadd.f32 %v2230, %v3641
        %v3643 = vpop.f32.mrb[0].mxu0
        %v3644 = vadd.f32 %v2234, %v3643
        %v3645 = vpop.f32.mrb[0].mxu0
        %v3646 = vadd.f32 %v2230, %v3645
        %v3647 = vpop.f32.mrb[0].mxu0
        %v3648 = vadd.f32 %v2234, %v3647
        %3649 = vmatprep.mubr.bf16.mxu0 %v1942
        %3650 = vmatmul.mubr.bf16.gmra.mrb[0].mxu0 %v1941
        %v3651 = vpop.f32.mrb[0].mxu0
        %v3652 = vadd.f32 %v2230, %v3651
        %v3653 = vpop.f32.mrb[0].mxu0
        %v3654 = vadd.f32 %v2234, %v3653
        %v3655 = vpop.f32.mrb[0].mxu0
        %v3656 = vadd.f32 %v2230, %v3655
        %v3657 = vpop.f32.mrb[0].mxu0
        %v3658 = vadd.f32 %v2234, %v3657
        %3659 = vmatprep.mubr.bf16.mxu0 %v1944
        %3660 = vmatmul.mubr.bf16.gmra.mrb[0].mxu0 %v1943
        %v3661 = vpop.f32.mrb[0].mxu0
        %v3662 = vadd.f32 %v2230, %v3661
        %v3663 = vpop.f32.mrb[0].mxu0
        %v3664 = vadd.f32 %v2234, %v3663
        %v3665 = vpop.f32.mrb[0].mxu0
        %v3666 = vadd.f32 %v2230, %v3665
        %v3667 = vpop.f32.mrb[0].mxu0
        %v3668 = vadd.f32 %v2234, %v3667
        %3669 = vmatprep.mubr.bf16.mxu0 %v1946
        %3670 = vmatmul.mubr.bf16.gmra.mrb[0].mxu0 %v1945
        %v3671 = vpop.f32.mrb[0].mxu0
        %v3672 = vadd.f32 %v2230, %v3671
        %v3673 = vpop.f32.mrb[0].mxu0
        %v3674 = vadd.f32 %v2234, %v3673
        %v3675 = vpop.f32.mrb[0].mxu0
        %v3676 = vadd.f32 %v2230, %v3675
        %v3677 = vpop.f32.mrb[0].mxu0
        %v3678 = vadd.f32 %v2234, %v3677
        %3679 = vmatprep.mubr.bf16.mxu0 %v1948
        %3680 = vmatmul.mubr.bf16.gmra.mrb[0].mxu0 %v1947
        %v3681 = vpop.f32.mrb[0].mxu0
        %v3682 = vadd.f32 %v2230, %v3681
        %v3683 = vpop.f32.mrb[0].mxu0
        %v3684 = vadd.f32 %v2234, %v3683
        %v3685 = vpop.f32.mrb[0].mxu0
        %v3686 = vadd.f32 %v2230, %v3685
        %v3687 = vpop.f32.mrb[0].mxu0
        %v3688 = vadd.f32 %v2234, %v3687
        %3689 = vmatprep.mubr.bf16.mxu0 %v1950
        %3690 = vmatmul.mubr.bf16.gmra.mrb[0].mxu0 %v1949
        %v3691 = vpop.f32.mrb[0].mxu0
        %v3692 = vadd.f32 %v2230, %v3691
        %v3693 = vpop.f32.mrb[0].mxu0
        %v3694 = vadd.f32 %v2234, %v3693
        %v3695 = vpop.f32.mrb[0].mxu0
        %v3696 = vadd.f32 %v2230, %v3695
        %v3697 = vpop.f32.mrb[0].mxu0
        %v3698 = vadd.f32 %v2234, %v3697
        %3699 = vmatprep.mubr.bf16.mxu0 %v1952
        %3700 = vmatmul.mubr.bf16.gmra.mrb[0].mxu0 %v1951
        %v3701 = vpop.f32.mrb[0].mxu0
        %v3702 = vadd.f32 %v2230, %v3701
        %v3703 = vpop.f32.mrb[0].mxu0
        %v3704 = vadd.f32 %v2234, %v3703
        %v3705 = vpop.f32.mrb[0].mxu0
        %v3706 = vadd.f32 %v2230, %v3705
        %v3707 = vpop.f32.mrb[0].mxu0
        %v3708 = vadd.f32 %v2234, %v3707
        %3709 = vmatprep.mubr.bf16.mxu0 %v1954
        %3710 = vmatmul.mubr.bf16.gmra.mrb[0].mxu0 %v1953
        %v3711 = vpop.f32.mrb[0].mxu0
        %v3712 = vadd.f32 %v2230, %v3711
        %v3713 = vpop.f32.mrb[0].mxu0
        %v3714 = vadd.f32 %v2234, %v3713
        %v3715 = vpop.f32.mrb[0].mxu0
        %v3716 = vadd.f32 %v2230, %v3715
        %v3717 = vpop.f32.mrb[0].mxu0
        %v3718 = vadd.f32 %v2234, %v3717
        %3719 = vmatprep.mubr.bf16.mxu0 %v1956
        %3720 = vmatmul.mubr.bf16.gmra.mrb[0].mxu0 %v1955
        %v3721 = vpop.f32.mrb[0].mxu0
        %v3722 = vadd.f32 %v2230, %v3721
        %v3723 = vpop.f32.mrb[0].mxu0
        %v3724 = vadd.f32 %v2234, %v3723
        %v3725 = vpop.f32.mrb[0].mxu0
        %v3726 = vadd.f32 %v2230, %v3725
        %v3727 = vpop.f32.mrb[0].mxu0
        %v3728 = vadd.f32 %v2234, %v3727
        %3729 = vmatprep.mubr.bf16.mxu0 %v1958
        %3730 = vmatmul.mubr.bf16.gmra.mrb[0].mxu0 %v1957
        %v3731 = vpop.f32.mrb[0].mxu0
        %v3732 = vadd.f32 %v2230, %v3731
        %v3733 = vpop.f32.mrb[0].mxu0
        %v3734 = vadd.f32 %v2234, %v3733
        %v3735 = vpop.f32.mrb[0].mxu0
        %v3736 = vadd.f32 %v2230, %v3735
        %v3737 = vpop.f32.mrb[0].mxu0
        %v3738 = vadd.f32 %v2234, %v3737
        %3739 = vmatprep.mubr.bf16.mxu0 %v1960
        %3740 = vmatmul.mubr.bf16.gmra.mrb[0].mxu0 %v1959
        %v3741 = vpop.f32.mrb[0].mxu0
        %v3742 = vadd.f32 %v2230, %v3741
        %v3743 = vpop.f32.mrb[0].mxu0
        %v3744 = vadd.f32 %v2234, %v3743
        %v3745 = vpop.f32.mrb[0].mxu0
        %v3746 = vadd.f32 %v2230, %v3745
        %v3747 = vpop.f32.mrb[0].mxu0
        %v3748 = vadd.f32 %v2234, %v3747
        %3749 = vmatprep.mubr.bf16.mxu0 %v1962
        %3750 = vmatmul.mubr.bf16.gmra.mrb[0].mxu0 %v1961
        %v3751 = vpop.f32.mrb[0].mxu0
        %v3752 = vadd.f32 %v2230, %v3751
        %v3753 = vpop.f32.mrb[0].mxu0
        %v3754 = vadd.f32 %v2234, %v3753
        %v3755 = vpop.f32.mrb[0].mxu0
        %v3756 = vadd.f32 %v2230, %v3755
        %v3757 = vpop.f32.mrb[0].mxu0
        %v3758 = vadd.f32 %v2234, %v3757
        %3759 = vmatprep.mubr.bf16.mxu0 %v1964
        %3760 = vmatmul.mubr.bf16.gmra.mrb[0].mxu0 %v1963
        %v3761 = vpop.f32.mrb[0].mxu0
        %v3762 = vadd.f32 %v2230, %v3761
        %v3763 = vpop.f32.mrb[0].mxu0
        %v3764 = vadd.f32 %v2234, %v3763
        %v3765 = vpop.f32.mrb[0].mxu0
        %v3766 = vadd.f32 %v2230, %v3765
        %v3767 = vpop.f32.mrb[0].mxu0
        %v3768 = vadd.f32 %v2234, %v3767
        %3769 = vmatprep.mubr.bf16.mxu0 %v1966
        %3770 = vmatmul.mubr.bf16.gmra.mrb[0].mxu0 %v1965
        %v3771 = vpop.f32.mrb[0].mxu0
        %v3772 = vadd.f32 %v2230, %v3771
        %v3773 = vpop.f32.mrb[0].mxu0
        %v3774 = vadd.f32 %v2234, %v3773
        %v3775 = vpop.f32.mrb[0].mxu0
        %v3776 = vadd.f32 %v2230, %v3775
        %v3777 = vpop.f32.mrb[0].mxu0
        %v3778 = vadd.f32 %v2234, %v3777
        %3779 = vdwg.mxu0
        %3780 = vmatprep.subr.bf16.mxu0 %v3078
        %3781 = vmatpush1.bf16.msra.mxu0 %v3077
        %3782 = vmatprep.subr.bf16.mxu0 %v3094
        %3783 = vmatpush1.bf16.msra.mxu0 %v3093
        %3784 = vmatprep.subr.bf16.mxu0 %v3110
        %3785 = vmatpush1.bf16.msra.mxu0 %v3109
        %3786 = vmatprep.subr.bf16.mxu0 %v3126
        %3787 = vmatpush1.bf16.msra.mxu0 %v3125
        %3788 = vmatprep.subr.bf16.mxu0 %v3142
        %3789 = vmatpush1.bf16.msra.mxu0 %v3141
        %3790 = vmatprep.subr.bf16.mxu0 %v3158
        %3791 = vmatpush1.bf16.msra.mxu0 %v3157
        %3792 = vmatprep.subr.bf16.mxu0 %v3174
        %3793 = vmatpush1.bf16.msra.mxu0 %v3173
        %3794 = vmatprep.subr.bf16.mxu0 %v3190
        %3795 = vmatpush1.bf16.msra.mxu0 %v3189
        %3796 = vmatprep.subr.bf16.mxu0 %v3206
        %3797 = vmatpush1.bf16.msra.mxu0 %v3205
        %3798 = vmatprep.subr.bf16.mxu0 %v3222
        %3799 = vmatpush1.bf16.msra.mxu0 %v3221
        %3800 = vmatprep.subr.bf16.mxu0 %v3238
        %3801 = vmatpush1.bf16.msra.mxu0 %v3237
        %3802 = vmatprep.subr.bf16.mxu0 %v3254
        %3803 = vmatpush1.bf16.msra.mxu0 %v3253
        %3804 = vmatprep.subr.bf16.mxu0 %v3270
        %3805 = vmatpush1.bf16.msra.mxu0 %v3269
        %3806 = vmatprep.subr.bf16.mxu0 %v3286
        %3807 = vmatpush1.bf16.msra.mxu0 %v3285
        %3808 = vmatprep.subr.bf16.mxu0 %v3302
        %3809 = vmatpush1.bf16.msra.mxu0 %v3301
        %3810 = vmatprep.subr.bf16.mxu0 %v3318
        %3811 = vmatpush1.bf16.msra.mxu0 %v3317
        %3812 = vmatprep.mubr.bf16.mxu0 %v1936
        %3813 = vmatmul.mubr.bf16.gmra.mrb[0].mxu0 %v1935
        %v3814 = vpop.f32.mrb[0].mxu0
        %v3815 = vadd.f32 %v2238, %v3814
        %v3816 = vpop.f32.mrb[0].mxu0
        %v3817 = vadd.f32 %v2242, %v3816
        %v3818 = vpop.f32.mrb[0].mxu0
        %v3819 = vadd.f32 %v2238, %v3818
        %v3820 = vpop.f32.mrb[0].mxu0
        %v3821 = vadd.f32 %v2242, %v3820
        %3822 = vmatprep.mubr.bf16.mxu0 %v1938
        %3823 = vmatmul.mubr.bf16.gmra.mrb[0].mxu0 %v1937
        %v3824 = vpop.f32.mrb[0].mxu0
        %v3825 = vadd.f32 %v2238, %v3824
        %v3826 = vpop.f32.mrb[0].mxu0
        %v3827 = vadd.f32 %v2242, %v3826
        %v3828 = vpop.f32.mrb[0].mxu0
        %v3829 = vadd.f32 %v2238, %v3828
        %v3830 = vpop.f32.mrb[0].mxu0
        %v3831 = vadd.f32 %v2242, %v3830
        %3832 = vmatprep.mubr.bf16.mxu0 %v1940
        %3833 = vmatmul.mubr.bf16.gmra.mrb[0].mxu0 %v1939
        %v3834 = vpop.f32.mrb[0].mxu0
        %v3835 = vadd.f32 %v2238, %v3834
        %v3836 = vpop.f32.mrb[0].mxu0
        %v3837 = vadd.f32 %v2242, %v3836
        %v3838 = vpop.f32.mrb[0].mxu0
        %v3839 = vadd.f32 %v2238, %v3838
        %v3840 = vpop.f32.mrb[0].mxu0
        %v3841 = vadd.f32 %v2242, %v3840
        %3842 = vmatprep.mubr.bf16.mxu0 %v1942
        %3843 = vmatmul.mubr.bf16.gmra.mrb[0].mxu0 %v1941
        %v3844 = vpop.f32.mrb[0].mxu0
        %v3845 = vadd.f32 %v2238, %v3844
        %v3846 = vpop.f32.mrb[0].mxu0
        %v3847 = vadd.f32 %v2242, %v3846
        %v3848 = vpop.f32.mrb[0].mxu0
        %v3849 = vadd.f32 %v2238, %v3848
        %v3850 = vpop.f32.mrb[0].mxu0
        %v3851 = vadd.f32 %v2242, %v3850
        %3852 = vmatprep.mubr.bf16.mxu0 %v1944
        %3853 = vmatmul.mubr.bf16.gmra.mrb[0].mxu0 %v1943
        %v3854 = vpop.f32.mrb[0].mxu0
        %v3855 = vadd.f32 %v2238, %v3854
        %v3856 = vpop.f32.mrb[0].mxu0
        %v3857 = vadd.f32 %v2242, %v3856
        %v3858 = vpop.f32.mrb[0].mxu0
        %v3859 = vadd.f32 %v2238, %v3858
        %v3860 = vpop.f32.mrb[0].mxu0
        %v3861 = vadd.f32 %v2242, %v3860
        %3862 = vmatprep.mubr.bf16.mxu0 %v1946
        %3863 = vmatmul.mubr.bf16.gmra.mrb[0].mxu0 %v1945
        %v3864 = vpop.f32.mrb[0].mxu0
        %v3865 = vadd.f32 %v2238, %v3864
        %v3866 = vpop.f32.mrb[0].mxu0
        %v3867 = vadd.f32 %v2242, %v3866
        %v3868 = vpop.f32.mrb[0].mxu0
        %v3869 = vadd.f32 %v2238, %v3868
        %v3870 = vpop.f32.mrb[0].mxu0
        %v3871 = vadd.f32 %v2242, %v3870
        %3872 = vmatprep.mubr.bf16.mxu0 %v1948
        %3873 = vmatmul.mubr.bf16.gmra.mrb[0].mxu0 %v1947
        %v3874 = vpop.f32.mrb[0].mxu0
        %v3875 = vadd.f32 %v2238, %v3874
        %v3876 = vpop.f32.mrb[0].mxu0
        %v3877 = vadd.f32 %v2242, %v3876
        %v3878 = vpop.f32.mrb[0].mxu0
        %v3879 = vadd.f32 %v2238, %v3878
        %v3880 = vpop.f32.mrb[0].mxu0
        %v3881 = vadd.f32 %v2242, %v3880
        %3882 = vmatprep.mubr.bf16.mxu0 %v1950
        %3883 = vmatmul.mubr.bf16.gmra.mrb[0].mxu0 %v1949
        %v3884 = vpop.f32.mrb[0].mxu0
        %v3885 = vadd.f32 %v2238, %v3884
        %v3886 = vpop.f32.mrb[0].mxu0
        %v3887 = vadd.f32 %v2242, %v3886
        %v3888 = vpop.f32.mrb[0].mxu0
        %v3889 = vadd.f32 %v2238, %v3888
        %v3890 = vpop.f32.mrb[0].mxu0
        %v3891 = vadd.f32 %v2242, %v3890
        %3892 = vmatprep.mubr.bf16.mxu0 %v1952
        %3893 = vmatmul.mubr.bf16.gmra.mrb[0].mxu0 %v1951
        %v3894 = vpop.f32.mrb[0].mxu0
        %v3895 = vadd.f32 %v2238, %v3894
        %v3896 = vpop.f32.mrb[0].mxu0
        %v3897 = vadd.f32 %v2242, %v3896
        %v3898 = vpop.f32.mrb[0].mxu0
        %v3899 = vadd.f32 %v2238, %v3898
        %v3900 = vpop.f32.mrb[0].mxu0
        %v3901 = vadd.f32 %v2242, %v3900
        %3902 = vmatprep.mubr.bf16.mxu0 %v1954
        %3903 = vmatmul.mubr.bf16.gmra.mrb[0].mxu0 %v1953
        %v3904 = vpop.f32.mrb[0].mxu0
        %v3905 = vadd.f32 %v2238, %v3904
        %v3906 = vpop.f32.mrb[0].mxu0
        %v3907 = vadd.f32 %v2242, %v3906
        %v3908 = vpop.f32.mrb[0].mxu0
        %v3909 = vadd.f32 %v2238, %v3908
        %v3910 = vpop.f32.mrb[0].mxu0
        %v3911 = vadd.f32 %v2242, %v3910
        %3912 = vmatprep.mubr.bf16.mxu0 %v1956
        %3913 = vmatmul.mubr.bf16.gmra.mrb[0].mxu0 %v1955
        %v3914 = vpop.f32.mrb[0].mxu0
        %v3915 = vadd.f32 %v2238, %v3914
        %v3916 = vpop.f32.mrb[0].mxu0
        %v3917 = vadd.f32 %v2242, %v3916
        %v3918 = vpop.f32.mrb[0].mxu0
        %v3919 = vadd.f32 %v2238, %v3918
        %v3920 = vpop.f32.mrb[0].mxu0
        %v3921 = vadd.f32 %v2242, %v3920
        %3922 = vmatprep.mubr.bf16.mxu0 %v1958
        %3923 = vmatmul.mubr.bf16.gmra.mrb[0].mxu0 %v1957
        %v3924 = vpop.f32.mrb[0].mxu0
        %v3925 = vadd.f32 %v2238, %v3924
        %v3926 = vpop.f32.mrb[0].mxu0
        %v3927 = vadd.f32 %v2242, %v3926
        %v3928 = vpop.f32.mrb[0].mxu0
        %v3929 = vadd.f32 %v2238, %v3928
        %v3930 = vpop.f32.mrb[0].mxu0
        %v3931 = vadd.f32 %v2242, %v3930
        %3932 = vmatprep.mubr.bf16.mxu0 %v1960
        %3933 = vmatmul.mubr.bf16.gmra.mrb[0].mxu0 %v1959
        %v3934 = vpop.f32.mrb[0].mxu0
        %v3935 = vadd.f32 %v2238, %v3934
        %v3936 = vpop.f32.mrb[0].mxu0
        %v3937 = vadd.f32 %v2242, %v3936
        %v3938 = vpop.f32.mrb[0].mxu0
        %v3939 = vadd.f32 %v2238, %v3938
        %v3940 = vpop.f32.mrb[0].mxu0
        %v3941 = vadd.f32 %v2242, %v3940
        %3942 = vmatprep.mubr.bf16.mxu0 %v1962
        %3943 = vmatmul.mubr.bf16.gmra.mrb[0].mxu0 %v1961
        %v3944 = vpop.f32.mrb[0].mxu0
        %v3945 = vadd.f32 %v2238, %v3944
        %v3946 = vpop.f32.mrb[0].mxu0
        %v3947 = vadd.f32 %v2242, %v3946
        %v3948 = vpop.f32.mrb[0].mxu0
        %v3949 = vadd.f32 %v2238, %v3948
        %v3950 = vpop.f32.mrb[0].mxu0
        %v3951 = vadd.f32 %v2242, %v3950
        %3952 = vmatprep.mubr.bf16.mxu0 %v1964
        %3953 = vmatmul.mubr.bf16.gmra.mrb[0].mxu0 %v1963
        %v3954 = vpop.f32.mrb[0].mxu0
        %v3955 = vadd.f32 %v2238, %v3954
        %v3956 = vpop.f32.mrb[0].mxu0
        %v3957 = vadd.f32 %v2242, %v3956
        %v3958 = vpop.f32.mrb[0].mxu0
        %v3959 = vadd.f32 %v2238, %v3958
        %v3960 = vpop.f32.mrb[0].mxu0
        %v3961 = vadd.f32 %v2242, %v3960
        %3962 = vmatprep.mubr.bf16.mxu0 %v1966
        %3963 = vmatmul.mubr.bf16.gmra.mrb[0].mxu0 %v1965
        %v3964 = vpop.f32.mrb[0].mxu0
        %v3965 = vadd.f32 %v2238, %v3964
        %v3966 = vpop.f32.mrb[0].mxu0
        %v3967 = vadd.f32 %v2242, %v3966
        %v3968 = vpop.f32.mrb[0].mxu0
        %v3969 = vadd.f32 %v2238, %v3968
        %v3970 = vpop.f32.mrb[0].mxu0
        %v3971 = vadd.f32 %v2242, %v3970
        %3972 = vdwg.mxu0
        %3973 = vmatprep.subr.bf16.mxu0 %v3080
        %3974 = vmatpush1.bf16.msra.mxu0 %v3079
        %3975 = vmatprep.subr.bf16.mxu0 %v3096
        %3976 = vmatpush1.bf16.msra.mxu0 %v3095
        %3977 = vmatprep.subr.bf16.mxu0 %v3112
        %3978 = vmatpush1.bf16.msra.mxu0 %v3111
        %3979 = vmatprep.subr.bf16.mxu0 %v3128
        %3980 = vmatpush1.bf16.msra.mxu0 %v3127
        %3981 = vmatprep.subr.bf16.mxu0 %v3144
        %3982 = vmatpush1.bf16.msra.mxu0 %v3143
        %3983 = vmatprep.subr.bf16.mxu0 %v3160
        %3984 = vmatpush1.bf16.msra.mxu0 %v3159
        %3985 = vmatprep.subr.bf16.mxu0 %v3176
        %3986 = vmatpush1.bf16.msra.mxu0 %v3175
        %3987 = vmatprep.subr.bf16.mxu0 %v3192
        %3988 = vmatpush1.bf16.msra.mxu0 %v3191
        %3989 = vmatprep.subr.bf16.mxu0 %v3208
        %3990 = vmatpush1.bf16.msra.mxu0 %v3207
        %3991 = vmatprep.subr.bf16.mxu0 %v3224
        %3992 = vmatpush1.bf16.msra.mxu0 %v3223
        %3993 = vmatprep.subr.bf16.mxu0 %v3240
        %3994 = vmatpush1.bf16.msra.mxu0 %v3239
        %3995 = vmatprep.subr.bf16.mxu0 %v3256
        %3996 = vmatpush1.bf16.msra.mxu0 %v3255
        %3997 = vmatprep.subr.bf16.mxu0 %v3272
        %3998 = vmatpush1.bf16.msra.mxu0 %v3271
        %3999 = vmatprep.subr.bf16.mxu0 %v3288
        %4000 = vmatpush1.bf16.msra.mxu0 %v3287
        %4001 = vmatprep.subr.bf16.mxu0 %v3304
        %4002 = vmatpush1.bf16.msra.mxu0 %v3303
        %4003 = vmatprep.subr.bf16.mxu0 %v3320
        %4004 = vmatpush1.bf16.msra.mxu0 %v3319
        %4005 = vmatprep.mubr.bf16.mxu0 %v1936
        %4006 = vmatmul.mubr.bf16.gmra.mrb[0].mxu0 %v1935
        %v4007 = vpop.f32.mrb[0].mxu0
        %v4008 = vadd.f32 %v2246, %v4007
        %v4009 = vpop.f32.mrb[0].mxu0
        %v4010 = vadd.f32 %v2250, %v4009
        %v4011 = vpop.f32.mrb[0].mxu0
        %v4012 = vadd.f32 %v2246, %v4011
        %v4013 = vpop.f32.mrb[0].mxu0
        %v4014 = vadd.f32 %v2250, %v4013
        %4015 = vmatprep.mubr.bf16.mxu0 %v1938
        %4016 = vmatmul.mubr.bf16.gmra.mrb[0].mxu0 %v1937
        %v4017 = vpop.f32.mrb[0].mxu0
        %v4018 = vadd.f32 %v2246, %v4017
        %v4019 = vpop.f32.mrb[0].mxu0
        %v4020 = vadd.f32 %v2250, %v4019
        %v4021 = vpop.f32.mrb[0].mxu0
        %v4022 = vadd.f32 %v2246, %v4021
        %v4023 = vpop.f32.mrb[0].mxu0
        %v4024 = vadd.f32 %v2250, %v4023
        %4025 = vmatprep.mubr.bf16.mxu0 %v1940
        %4026 = vmatmul.mubr.bf16.gmra.mrb[0].mxu0 %v1939
        %v4027 = vpop.f32.mrb[0].mxu0
        %v4028 = vadd.f32 %v2246, %v4027
        %v4029 = vpop.f32.mrb[0].mxu0
        %v4030 = vadd.f32 %v2250, %v4029
        %v4031 = vpop.f32.mrb[0].mxu0
        %v4032 = vadd.f32 %v2246, %v4031
        %v4033 = vpop.f32.mrb[0].mxu0
        %v4034 = vadd.f32 %v2250, %v4033
        %4035 = vmatprep.mubr.bf16.mxu0 %v1942
        %4036 = vmatmul.mubr.bf16.gmra.mrb[0].mxu0 %v1941
        %v4037 = vpop.f32.mrb[0].mxu0
        %v4038 = vadd.f32 %v2246, %v4037
        %v4039 = vpop.f32.mrb[0].mxu0
        %v4040 = vadd.f32 %v2250, %v4039
        %v4041 = vpop.f32.mrb[0].mxu0
        %v4042 = vadd.f32 %v2246, %v4041
        %v4043 = vpop.f32.mrb[0].mxu0
        %v4044 = vadd.f32 %v2250, %v4043
        %4045 = vmatprep.mubr.bf16.mxu0 %v1944
        %4046 = vmatmul.mubr.bf16.gmra.mrb[0].mxu0 %v1943
        %v4047 = vpop.f32.mrb[0].mxu0
        %v4048 = vadd.f32 %v2246, %v4047
        %v4049 = vpop.f32.mrb[0].mxu0
        %v4050 = vadd.f32 %v2250, %v4049
        %v4051 = vpop.f32.mrb[0].mxu0
        %v4052 = vadd.f32 %v2246, %v4051
        %v4053 = vpop.f32.mrb[0].mxu0
        %v4054 = vadd.f32 %v2250, %v4053
        %4055 = vmatprep.mubr.bf16.mxu0 %v1946
        %4056 = vmatmul.mubr.bf16.gmra.mrb[0].mxu0 %v1945
        %v4057 = vpop.f32.mrb[0].mxu0
        %v4058 = vadd.f32 %v2246, %v4057
        %v4059 = vpop.f32.mrb[0].mxu0
        %v4060 = vadd.f32 %v2250, %v4059
        %v4061 = vpop.f32.mrb[0].mxu0
        %v4062 = vadd.f32 %v2246, %v4061
        %v4063 = vpop.f32.mrb[0].mxu0
        %v4064 = vadd.f32 %v2250, %v4063
        %4065 = vmatprep.mubr.bf16.mxu0 %v1948
        %4066 = vmatmul.mubr.bf16.gmra.mrb[0].mxu0 %v1947
        %v4067 = vpop.f32.mrb[0].mxu0
        %v4068 = vadd.f32 %v2246, %v4067
        %v4069 = vpop.f32.mrb[0].mxu0
        %v4070 = vadd.f32 %v2250, %v4069
        %v4071 = vpop.f32.mrb[0].mxu0
        %v4072 = vadd.f32 %v2246, %v4071
        %v4073 = vpop.f32.mrb[0].mxu0
        %v4074 = vadd.f32 %v2250, %v4073
        %4075 = vmatprep.mubr.bf16.mxu0 %v1950
        %4076 = vmatmul.mubr.bf16.gmra.mrb[0].mxu0 %v1949
        %v4077 = vpop.f32.mrb[0].mxu0
        %v4078 = vadd.f32 %v2246, %v4077
        %v4079 = vpop.f32.mrb[0].mxu0
        %v4080 = vadd.f32 %v2250, %v4079
        %v4081 = vpop.f32.mrb[0].mxu0
        %v4082 = vadd.f32 %v2246, %v4081
        %v4083 = vpop.f32.mrb[0].mxu0
        %v4084 = vadd.f32 %v2250, %v4083
        %4085 = vmatprep.mubr.bf16.mxu0 %v1952
        %4086 = vmatmul.mubr.bf16.gmra.mrb[0].mxu0 %v1951
        %v4087 = vpop.f32.mrb[0].mxu0
        %v4088 = vadd.f32 %v2246, %v4087
        %v4089 = vpop.f32.mrb[0].mxu0
        %v4090 = vadd.f32 %v2250, %v4089
        %v4091 = vpop.f32.mrb[0].mxu0
        %v4092 = vadd.f32 %v2246, %v4091
        %v4093 = vpop.f32.mrb[0].mxu0
        %v4094 = vadd.f32 %v2250, %v4093
        %4095 = vmatprep.mubr.bf16.mxu0 %v1954
        %4096 = vmatmul.mubr.bf16.gmra.mrb[0].mxu0 %v1953
        %v4097 = vpop.f32.mrb[0].mxu0
        %v4098 = vadd.f32 %v2246, %v4097
        %v4099 = vpop.f32.mrb[0].mxu0
        %v4100 = vadd.f32 %v2250, %v4099
        %v4101 = vpop.f32.mrb[0].mxu0
        %v4102 = vadd.f32 %v2246, %v4101
        %v4103 = vpop.f32.mrb[0].mxu0
        %v4104 = vadd.f32 %v2250, %v4103
        %4105 = vmatprep.mubr.bf16.mxu0 %v1956
        %4106 = vmatmul.mubr.bf16.gmra.mrb[0].mxu0 %v1955
        %v4107 = vpop.f32.mrb[0].mxu0
        %v4108 = vadd.f32 %v2246, %v4107
        %v4109 = vpop.f32.mrb[0].mxu0
        %v4110 = vadd.f32 %v2250, %v4109
        %v4111 = vpop.f32.mrb[0].mxu0
        %v4112 = vadd.f32 %v2246, %v4111
        %v4113 = vpop.f32.mrb[0].mxu0
        %v4114 = vadd.f32 %v2250, %v4113
        %4115 = vmatprep.mubr.bf16.mxu0 %v1958
        %4116 = vmatmul.mubr.bf16.gmra.mrb[0].mxu0 %v1957
        %v4117 = vpop.f32.mrb[0].mxu0
        %v4118 = vadd.f32 %v2246, %v4117
        %v4119 = vpop.f32.mrb[0].mxu0
        %v4120 = vadd.f32 %v2250, %v4119
        %v4121 = vpop.f32.mrb[0].mxu0
        %v4122 = vadd.f32 %v2246, %v4121
        %v4123 = vpop.f32.mrb[0].mxu0
        %v4124 = vadd.f32 %v2250, %v4123
        %4125 = vmatprep.mubr.bf16.mxu0 %v1960
        %4126 = vmatmul.mubr.bf16.gmra.mrb[0].mxu0 %v1959
        %v4127 = vpop.f32.mrb[0].mxu0
        %v4128 = vadd.f32 %v2246, %v4127
        %v4129 = vpop.f32.mrb[0].mxu0
        %v4130 = vadd.f32 %v2250, %v4129
        %v4131 = vpop.f32.mrb[0].mxu0
        %v4132 = vadd.f32 %v2246, %v4131
        %v4133 = vpop.f32.mrb[0].mxu0
        %v4134 = vadd.f32 %v2250, %v4133
        %4135 = vmatprep.mubr.bf16.mxu0 %v1962
        %4136 = vmatmul.mubr.bf16.gmra.mrb[0].mxu0 %v1961
        %v4137 = vpop.f32.mrb[0].mxu0
        %v4138 = vadd.f32 %v2246, %v4137
        %v4139 = vpop.f32.mrb[0].mxu0
        %v4140 = vadd.f32 %v2250, %v4139
        %v4141 = vpop.f32.mrb[0].mxu0
        %v4142 = vadd.f32 %v2246, %v4141
        %v4143 = vpop.f32.mrb[0].mxu0
        %v4144 = vadd.f32 %v2250, %v4143
        %4145 = vmatprep.mubr.bf16.mxu0 %v1964
        %4146 = vmatmul.mubr.bf16.gmra.mrb[0].mxu0 %v1963
        %v4147 = vpop.f32.mrb[0].mxu0
        %v4148 = vadd.f32 %v2246, %v4147
        %v4149 = vpop.f32.mrb[0].mxu0
        %v4150 = vadd.f32 %v2250, %v4149
        %v4151 = vpop.f32.mrb[0].mxu0
        %v4152 = vadd.f32 %v2246, %v4151
        %v4153 = vpop.f32.mrb[0].mxu0
        %v4154 = vadd.f32 %v2250, %v4153
        %4155 = vmatprep.mubr.bf16.mxu0 %v1966
        %4156 = vmatmul.mubr.bf16.gmra.mrb[0].mxu0 %v1965
        %v4157 = vpop.f32.mrb[0].mxu0
        %v4158 = vadd.f32 %v2246, %v4157
        %v4159 = vpop.f32.mrb[0].mxu0
        %v4160 = vadd.f32 %v2250, %v4159
        %v4161 = vpop.f32.mrb[0].mxu0
        %v4162 = vadd.f32 %v2246, %v4161
        %v4163 = vpop.f32.mrb[0].mxu0
        %v4164 = vadd.f32 %v2250, %v4163
        %4165 = vdwg.mxu0
        %4166 = vmatprep.subr.bf16.mxu0 %v3082
        %4167 = vmatpush1.bf16.msra.mxu0 %v3081
        %4168 = vmatprep.subr.bf16.mxu0 %v3098
        %4169 = vmatpush1.bf16.msra.mxu0 %v3097
        %4170 = vmatprep.subr.bf16.mxu0 %v3114
        %4171 = vmatpush1.bf16.msra.mxu0 %v3113
        %4172 = vmatprep.subr.bf16.mxu0 %v3130
        %4173 = vmatpush1.bf16.msra.mxu0 %v3129
        %4174 = vmatprep.subr.bf16.mxu0 %v3146
        %4175 = vmatpush1.bf16.msra.mxu0 %v3145
        %4176 = vmatprep.subr.bf16.mxu0 %v3162
        %4177 = vmatpush1.bf16.msra.mxu0 %v3161
        %4178 = vmatprep.subr.bf16.mxu0 %v3178
        %4179 = vmatpush1.bf16.msra.mxu0 %v3177
        %4180 = vmatprep.subr.bf16.mxu0 %v3194
        %4181 = vmatpush1.bf16.msra.mxu0 %v3193
        %4182 = vmatprep.subr.bf16.mxu0 %v3210
        %4183 = vmatpush1.bf16.msra.mxu0 %v3209
        %4184 = vmatprep.subr.bf16.mxu0 %v3226
        %4185 = vmatpush1.bf16.msra.mxu0 %v3225
        %4186 = vmatprep.subr.bf16.mxu0 %v3242
        %4187 = vmatpush1.bf16.msra.mxu0 %v3241
        %4188 = vmatprep.subr.bf16.mxu0 %v3258
        %4189 = vmatpush1.bf16.msra.mxu0 %v3257
        %4190 = vmatprep.subr.bf16.mxu0 %v3274
        %4191 = vmatpush1.bf16.msra.mxu0 %v3273
        %4192 = vmatprep.subr.bf16.mxu0 %v3290
        %4193 = vmatpush1.bf16.msra.mxu0 %v3289
        %4194 = vmatprep.subr.bf16.mxu0 %v3306
        %4195 = vmatpush1.bf16.msra.mxu0 %v3305
        %4196 = vmatprep.subr.bf16.mxu0 %v3322
        %4197 = vmatpush1.bf16.msra.mxu0 %v3321
        %4198 = vmatprep.mubr.bf16.mxu0 %v1936
        %4199 = vmatmul.mubr.bf16.gmra.mrb[0].mxu0 %v1935
        %v4200 = vpop.f32.mrb[0].mxu0
        %v4201 = vadd.f32 %v2254, %v4200
        %v4202 = vpop.f32.mrb[0].mxu0
        %v4203 = vadd.f32 %v2258, %v4202
        %v4204 = vpop.f32.mrb[0].mxu0
        %v4205 = vadd.f32 %v2254, %v4204
        %v4206 = vpop.f32.mrb[0].mxu0
        %v4207 = vadd.f32 %v2258, %v4206
        %4208 = vmatprep.mubr.bf16.mxu0 %v1938
        %4209 = vmatmul.mubr.bf16.gmra.mrb[0].mxu0 %v1937
        %v4210 = vpop.f32.mrb[0].mxu0
        %v4211 = vadd.f32 %v2254, %v4210
        %v4212 = vpop.f32.mrb[0].mxu0
        %v4213 = vadd.f32 %v2258, %v4212
        %v4214 = vpop.f32.mrb[0].mxu0
        %v4215 = vadd.f32 %v2254, %v4214
        %v4216 = vpop.f32.mrb[0].mxu0
        %v4217 = vadd.f32 %v2258, %v4216
        %4218 = vmatprep.mubr.bf16.mxu0 %v1940
        %4219 = vmatmul.mubr.bf16.gmra.mrb[0].mxu0 %v1939
        %v4220 = vpop.f32.mrb[0].mxu0
        %v4221 = vadd.f32 %v2254, %v4220
        %v4222 = vpop.f32.mrb[0].mxu0
        %v4223 = vadd.f32 %v2258, %v4222
        %v4224 = vpop.f32.mrb[0].mxu0
        %v4225 = vadd.f32 %v2254, %v4224
        %v4226 = vpop.f32.mrb[0].mxu0
        %v4227 = vadd.f32 %v2258, %v4226
        %4228 = vmatprep.mubr.bf16.mxu0 %v1942
        %4229 = vmatmul.mubr.bf16.gmra.mrb[0].mxu0 %v1941
        %v4230 = vpop.f32.mrb[0].mxu0
        %v4231 = vadd.f32 %v2254, %v4230
        %v4232 = vpop.f32.mrb[0].mxu0
        %v4233 = vadd.f32 %v2258, %v4232
        %v4234 = vpop.f32.mrb[0].mxu0
        %v4235 = vadd.f32 %v2254, %v4234
        %v4236 = vpop.f32.mrb[0].mxu0
        %v4237 = vadd.f32 %v2258, %v4236
        %4238 = vmatprep.mubr.bf16.mxu0 %v1944
        %4239 = vmatmul.mubr.bf16.gmra.mrb[0].mxu0 %v1943
        %v4240 = vpop.f32.mrb[0].mxu0
        %v4241 = vadd.f32 %v2254, %v4240
        %v4242 = vpop.f32.mrb[0].mxu0
        %v4243 = vadd.f32 %v2258, %v4242
        %v4244 = vpop.f32.mrb[0].mxu0
        %v4245 = vadd.f32 %v2254, %v4244
        %v4246 = vpop.f32.mrb[0].mxu0
        %v4247 = vadd.f32 %v2258, %v4246
        %4248 = vmatprep.mubr.bf16.mxu0 %v1946
        %4249 = vmatmul.mubr.bf16.gmra.mrb[0].mxu0 %v1945
        %v4250 = vpop.f32.mrb[0].mxu0
        %v4251 = vadd.f32 %v2254, %v4250
        %v4252 = vpop.f32.mrb[0].mxu0
        %v4253 = vadd.f32 %v2258, %v4252
        %v4254 = vpop.f32.mrb[0].mxu0
        %v4255 = vadd.f32 %v2254, %v4254
        %v4256 = vpop.f32.mrb[0].mxu0
        %v4257 = vadd.f32 %v2258, %v4256
        %4258 = vmatprep.mubr.bf16.mxu0 %v1948
        %4259 = vmatmul.mubr.bf16.gmra.mrb[0].mxu0 %v1947
        %v4260 = vpop.f32.mrb[0].mxu0
        %v4261 = vadd.f32 %v2254, %v4260
        %v4262 = vpop.f32.mrb[0].mxu0
        %v4263 = vadd.f32 %v2258, %v4262
        %v4264 = vpop.f32.mrb[0].mxu0
        %v4265 = vadd.f32 %v2254, %v4264
        %v4266 = vpop.f32.mrb[0].mxu0
        %v4267 = vadd.f32 %v2258, %v4266
        %4268 = vmatprep.mubr.bf16.mxu0 %v1950
        %4269 = vmatmul.mubr.bf16.gmra.mrb[0].mxu0 %v1949
        %v4270 = vpop.f32.mrb[0].mxu0
        %v4271 = vadd.f32 %v2254, %v4270
        %v4272 = vpop.f32.mrb[0].mxu0
        %v4273 = vadd.f32 %v2258, %v4272
        %v4274 = vpop.f32.mrb[0].mxu0
        %v4275 = vadd.f32 %v2254, %v4274
        %v4276 = vpop.f32.mrb[0].mxu0
        %v4277 = vadd.f32 %v2258, %v4276
        %4278 = vmatprep.mubr.bf16.mxu0 %v1952
        %4279 = vmatmul.mubr.bf16.gmra.mrb[0].mxu0 %v1951
        %v4280 = vpop.f32.mrb[0].mxu0
        %v4281 = vadd.f32 %v2254, %v4280
        %v4282 = vpop.f32.mrb[0].mxu0
        %v4283 = vadd.f32 %v2258, %v4282
        %v4284 = vpop.f32.mrb[0].mxu0
        %v4285 = vadd.f32 %v2254, %v4284
        %v4286 = vpop.f32.mrb[0].mxu0
        %v4287 = vadd.f32 %v2258, %v4286
        %4288 = vmatprep.mubr.bf16.mxu0 %v1954
        %4289 = vmatmul.mubr.bf16.gmra.mrb[0].mxu0 %v1953
        %v4290 = vpop.f32.mrb[0].mxu0
        %v4291 = vadd.f32 %v2254, %v4290
        %v4292 = vpop.f32.mrb[0].mxu0
        %v4293 = vadd.f32 %v2258, %v4292
        %v4294 = vpop.f32.mrb[0].mxu0
        %v4295 = vadd.f32 %v2254, %v4294
        %v4296 = vpop.f32.mrb[0].mxu0
        %v4297 = vadd.f32 %v2258, %v4296
        %4298 = vmatprep.mubr.bf16.mxu0 %v1956
        %4299 = vmatmul.mubr.bf16.gmra.mrb[0].mxu0 %v1955
        %v4300 = vpop.f32.mrb[0].mxu0
        %v4301 = vadd.f32 %v2254, %v4300
        %v4302 = vpop.f32.mrb[0].mxu0
        %v4303 = vadd.f32 %v2258, %v4302
        %v4304 = vpop.f32.mrb[0].mxu0
        %v4305 = vadd.f32 %v2254, %v4304
        %v4306 = vpop.f32.mrb[0].mxu0
        %v4307 = vadd.f32 %v2258, %v4306
        %4308 = vmatprep.mubr.bf16.mxu0 %v1958
        %4309 = vmatmul.mubr.bf16.gmra.mrb[0].mxu0 %v1957
        %v4310 = vpop.f32.mrb[0].mxu0
        %v4311 = vadd.f32 %v2254, %v4310
        %v4312 = vpop.f32.mrb[0].mxu0
        %v4313 = vadd.f32 %v2258, %v4312
        %v4314 = vpop.f32.mrb[0].mxu0
        %v4315 = vadd.f32 %v2254, %v4314
        %v4316 = vpop.f32.mrb[0].mxu0
        %v4317 = vadd.f32 %v2258, %v4316
        %4318 = vmatprep.mubr.bf16.mxu0 %v1960
        %4319 = vmatmul.mubr.bf16.gmra.mrb[0].mxu0 %v1959
        %v4320 = vpop.f32.mrb[0].mxu0
        %v4321 = vadd.f32 %v2254, %v4320
        %v4322 = vpop.f32.mrb[0].mxu0
        %v4323 = vadd.f32 %v2258, %v4322
        %v4324 = vpop.f32.mrb[0].mxu0
        %v4325 = vadd.f32 %v2254, %v4324
        %v4326 = vpop.f32.mrb[0].mxu0
        %v4327 = vadd.f32 %v2258, %v4326
        %4328 = vmatprep.mubr.bf16.mxu0 %v1962
        %4329 = vmatmul.mubr.bf16.gmra.mrb[0].mxu0 %v1961
        %v4330 = vpop.f32.mrb[0].mxu0
        %v4331 = vadd.f32 %v2254, %v4330
        %v4332 = vpop.f32.mrb[0].mxu0
        %v4333 = vadd.f32 %v2258, %v4332
        %v4334 = vpop.f32.mrb[0].mxu0
        %v4335 = vadd.f32 %v2254, %v4334
        %v4336 = vpop.f32.mrb[0].mxu0
        %v4337 = vadd.f32 %v2258, %v4336
        %4338 = vmatprep.mubr.bf16.mxu0 %v1964
        %4339 = vmatmul.mubr.bf16.gmra.mrb[0].mxu0 %v1963
        %v4340 = vpop.f32.mrb[0].mxu0
        %v4341 = vadd.f32 %v2254, %v4340
        %v4342 = vpop.f32.mrb[0].mxu0
        %v4343 = vadd.f32 %v2258, %v4342
        %v4344 = vpop.f32.mrb[0].mxu0
        %v4345 = vadd.f32 %v2254, %v4344
        %v4346 = vpop.f32.mrb[0].mxu0
        %v4347 = vadd.f32 %v2258, %v4346
        %4348 = vmatprep.mubr.bf16.mxu0 %v1966
        %4349 = vmatmul.mubr.bf16.gmra.mrb[0].mxu0 %v1965
        %v4350 = vpop.f32.mrb[0].mxu0
        %v4351 = vadd.f32 %v2254, %v4350
        %v4352 = vpop.f32.mrb[0].mxu0
        %v4353 = vadd.f32 %v2258, %v4352
        %v4354 = vpop.f32.mrb[0].mxu0
        %v4355 = vadd.f32 %v2254, %v4354
        %v4356 = vpop.f32.mrb[0].mxu0
        %v4357 = vadd.f32 %v2258, %v4356
        %4358 = vdwg.mxu0
        %4359 = vmatprep.subr.bf16.mxu0 %v3084
        %4360 = vmatpush1.bf16.msra.mxu0 %v3083
        %4361 = vmatprep.subr.bf16.mxu0 %v3100
        %4362 = vmatpush1.bf16.msra.mxu0 %v3099
        %4363 = vmatprep.subr.bf16.mxu0 %v3116
        %4364 = vmatpush1.bf16.msra.mxu0 %v3115
        %4365 = vmatprep.subr.bf16.mxu0 %v3132
        %4366 = vmatpush1.bf16.msra.mxu0 %v3131
        %4367 = vmatprep.subr.bf16.mxu0 %v3148
        %4368 = vmatpush1.bf16.msra.mxu0 %v3147
        %4369 = vmatprep.subr.bf16.mxu0 %v3164
        %4370 = vmatpush1.bf16.msra.mxu0 %v3163
        %4371 = vmatprep.subr.bf16.mxu0 %v3180
        %4372 = vmatpush1.bf16.msra.mxu0 %v3179
        %4373 = vmatprep.subr.bf16.mxu0 %v3196
        %4374 = vmatpush1.bf16.msra.mxu0 %v3195
        %4375 = vmatprep.subr.bf16.mxu0 %v3212
        %4376 = vmatpush1.bf16.msra.mxu0 %v3211
        %4377 = vmatprep.subr.bf16.mxu0 %v3228
        %4378 = vmatpush1.bf16.msra.mxu0 %v3227
        %4379 = vmatprep.subr.bf16.mxu0 %v3244
        %4380 = vmatpush1.bf16.msra.mxu0 %v3243
        %4381 = vmatprep.subr.bf16.mxu0 %v3260
        %4382 = vmatpush1.bf16.msra.mxu0 %v3259
        %4383 = vmatprep.subr.bf16.mxu0 %v3276
        %4384 = vmatpush1.bf16.msra.mxu0 %v3275
        %4385 = vmatprep.subr.bf16.mxu0 %v3292
        %4386 = vmatpush1.bf16.msra.mxu0 %v3291
        %4387 = vmatprep.subr.bf16.mxu0 %v3308
        %4388 = vmatpush1.bf16.msra.mxu0 %v3307
        %4389 = vmatprep.subr.bf16.mxu0 %v3324
        %4390 = vmatpush1.bf16.msra.mxu0 %v3323
        %4391 = vmatprep.mubr.bf16.mxu0 %v1936
        %4392 = vmatmul.mubr.bf16.gmra.mrb[0].mxu0 %v1935
        %v4393 = vpop.f32.mrb[0].mxu0
        %v4394 = vadd.f32 %v2262, %v4393
        %v4395 = vpop.f32.mrb[0].mxu0
        %v4396 = vadd.f32 %v2266, %v4395
        %v4397 = vpop.f32.mrb[0].mxu0
        %v4398 = vadd.f32 %v2262, %v4397
        %v4399 = vpop.f32.mrb[0].mxu0
        %v4400 = vadd.f32 %v2266, %v4399
        %4401 = vmatprep.mubr.bf16.mxu0 %v1938
        %4402 = vmatmul.mubr.bf16.gmra.mrb[0].mxu0 %v1937
        %v4403 = vpop.f32.mrb[0].mxu0
        %v4404 = vadd.f32 %v2262, %v4403
        %v4405 = vpop.f32.mrb[0].mxu0
        %v4406 = vadd.f32 %v2266, %v4405
        %v4407 = vpop.f32.mrb[0].mxu0
        %v4408 = vadd.f32 %v2262, %v4407
        %v4409 = vpop.f32.mrb[0].mxu0
        %v4410 = vadd.f32 %v2266, %v4409
        %4411 = vmatprep.mubr.bf16.mxu0 %v1940
        %4412 = vmatmul.mubr.bf16.gmra.mrb[0].mxu0 %v1939
        %v4413 = vpop.f32.mrb[0].mxu0
        %v4414 = vadd.f32 %v2262, %v4413
        %v4415 = vpop.f32.mrb[0].mxu0
        %v4416 = vadd.f32 %v2266, %v4415
        %v4417 = vpop.f32.mrb[0].mxu0
        %v4418 = vadd.f32 %v2262, %v4417
        %v4419 = vpop.f32.mrb[0].mxu0
        %v4420 = vadd.f32 %v2266, %v4419
        %4421 = vmatprep.mubr.bf16.mxu0 %v1942
        %4422 = vmatmul.mubr.bf16.gmra.mrb[0].mxu0 %v1941
        %v4423 = vpop.f32.mrb[0].mxu0
        %v4424 = vadd.f32 %v2262, %v4423
        %v4425 = vpop.f32.mrb[0].mxu0
        %v4426 = vadd.f32 %v2266, %v4425
        %v4427 = vpop.f32.mrb[0].mxu0
        %v4428 = vadd.f32 %v2262, %v4427
        %v4429 = vpop.f32.mrb[0].mxu0
        %v4430 = vadd.f32 %v2266, %v4429
        %4431 = vmatprep.mubr.bf16.mxu0 %v1944
        %4432 = vmatmul.mubr.bf16.gmra.mrb[0].mxu0 %v1943
        %v4433 = vpop.f32.mrb[0].mxu0
        %v4434 = vadd.f32 %v2262, %v4433
        %v4435 = vpop.f32.mrb[0].mxu0
        %v4436 = vadd.f32 %v2266, %v4435
        %v4437 = vpop.f32.mrb[0].mxu0
        %v4438 = vadd.f32 %v2262, %v4437
        %v4439 = vpop.f32.mrb[0].mxu0
        %v4440 = vadd.f32 %v2266, %v4439
        %4441 = vmatprep.mubr.bf16.mxu0 %v1946
        %4442 = vmatmul.mubr.bf16.gmra.mrb[0].mxu0 %v1945
        %v4443 = vpop.f32.mrb[0].mxu0
        %v4444 = vadd.f32 %v2262, %v4443
        %v4445 = vpop.f32.mrb[0].mxu0
        %v4446 = vadd.f32 %v2266, %v4445
        %v4447 = vpop.f32.mrb[0].mxu0
        %v4448 = vadd.f32 %v2262, %v4447
        %v4449 = vpop.f32.mrb[0].mxu0
        %v4450 = vadd.f32 %v2266, %v4449
        %4451 = vmatprep.mubr.bf16.mxu0 %v1948
        %4452 = vmatmul.mubr.bf16.gmra.mrb[0].mxu0 %v1947
        %v4453 = vpop.f32.mrb[0].mxu0
        %v4454 = vadd.f32 %v2262, %v4453
        %v4455 = vpop.f32.mrb[0].mxu0
        %v4456 = vadd.f32 %v2266, %v4455
        %v4457 = vpop.f32.mrb[0].mxu0
        %v4458 = vadd.f32 %v2262, %v4457
        %v4459 = vpop.f32.mrb[0].mxu0
        %v4460 = vadd.f32 %v2266, %v4459
        %4461 = vmatprep.mubr.bf16.mxu0 %v1950
        %4462 = vmatmul.mubr.bf16.gmra.mrb[0].mxu0 %v1949
        %v4463 = vpop.f32.mrb[0].mxu0
        %v4464 = vadd.f32 %v2262, %v4463
        %v4465 = vpop.f32.mrb[0].mxu0
        %v4466 = vadd.f32 %v2266, %v4465
        %v4467 = vpop.f32.mrb[0].mxu0
        %v4468 = vadd.f32 %v2262, %v4467
        %v4469 = vpop.f32.mrb[0].mxu0
        %v4470 = vadd.f32 %v2266, %v4469
        %4471 = vmatprep.mubr.bf16.mxu0 %v1952
        %4472 = vmatmul.mubr.bf16.gmra.mrb[0].mxu0 %v1951
        %v4473 = vpop.f32.mrb[0].mxu0
        %v4474 = vadd.f32 %v2262, %v4473
        %v4475 = vpop.f32.mrb[0].mxu0
        %v4476 = vadd.f32 %v2266, %v4475
        %v4477 = vpop.f32.mrb[0].mxu0
        %v4478 = vadd.f32 %v2262, %v4477
        %v4479 = vpop.f32.mrb[0].mxu0
        %v4480 = vadd.f32 %v2266, %v4479
        %4481 = vmatprep.mubr.bf16.mxu0 %v1954
        %4482 = vmatmul.mubr.bf16.gmra.mrb[0].mxu0 %v1953
        %v4483 = vpop.f32.mrb[0].mxu0
        %v4484 = vadd.f32 %v2262, %v4483
        %v4485 = vpop.f32.mrb[0].mxu0
        %v4486 = vadd.f32 %v2266, %v4485
        %v4487 = vpop.f32.mrb[0].mxu0
        %v4488 = vadd.f32 %v2262, %v4487
        %v4489 = vpop.f32.mrb[0].mxu0
        %v4490 = vadd.f32 %v2266, %v4489
        %4491 = vmatprep.mubr.bf16.mxu0 %v1956
        %4492 = vmatmul.mubr.bf16.gmra.mrb[0].mxu0 %v1955
        %v4493 = vpop.f32.mrb[0].mxu0
        %v4494 = vadd.f32 %v2262, %v4493
        %v4495 = vpop.f32.mrb[0].mxu0
        %v4496 = vadd.f32 %v2266, %v4495
        %v4497 = vpop.f32.mrb[0].mxu0
        %v4498 = vadd.f32 %v2262, %v4497
        %v4499 = vpop.f32.mrb[0].mxu0
        %v4500 = vadd.f32 %v2266, %v4499
        %4501 = vmatprep.mubr.bf16.mxu0 %v1958
        %4502 = vmatmul.mubr.bf16.gmra.mrb[0].mxu0 %v1957
        %v4503 = vpop.f32.mrb[0].mxu0
        %v4504 = vadd.f32 %v2262, %v4503
        %v4505 = vpop.f32.mrb[0].mxu0
        %v4506 = vadd.f32 %v2266, %v4505
        %v4507 = vpop.f32.mrb[0].mxu0
        %v4508 = vadd.f32 %v2262, %v4507
        %v4509 = vpop.f32.mrb[0].mxu0
        %v4510 = vadd.f32 %v2266, %v4509
        %4511 = vmatprep.mubr.bf16.mxu0 %v1960
        %4512 = vmatmul.mubr.bf16.gmra.mrb[0].mxu0 %v1959
        %v4513 = vpop.f32.mrb[0].mxu0
        %v4514 = vadd.f32 %v2262, %v4513
        %v4515 = vpop.f32.mrb[0].mxu0
        %v4516 = vadd.f32 %v2266, %v4515
        %v4517 = vpop.f32.mrb[0].mxu0
        %v4518 = vadd.f32 %v2262, %v4517
        %v4519 = vpop.f32.mrb[0].mxu0
        %v4520 = vadd.f32 %v2266, %v4519
        %4521 = vmatprep.mubr.bf16.mxu0 %v1962
        %4522 = vmatmul.mubr.bf16.gmra.mrb[0].mxu0 %v1961
        %v4523 = vpop.f32.mrb[0].mxu0
        %v4524 = vadd.f32 %v2262, %v4523
        %v4525 = vpop.f32.mrb[0].mxu0
        %v4526 = vadd.f32 %v2266, %v4525
        %v4527 = vpop.f32.mrb[0].mxu0
        %v4528 = vadd.f32 %v2262, %v4527
        %v4529 = vpop.f32.mrb[0].mxu0
        %v4530 = vadd.f32 %v2266, %v4529
        %4531 = vmatprep.mubr.bf16.mxu0 %v1964
        %4532 = vmatmul.mubr.bf16.gmra.mrb[0].mxu0 %v1963
        %v4533 = vpop.f32.mrb[0].mxu0
        %v4534 = vadd.f32 %v2262, %v4533
        %v4535 = vpop.f32.mrb[0].mxu0
        %v4536 = vadd.f32 %v2266, %v4535
        %v4537 = vpop.f32.mrb[0].mxu0
        %v4538 = vadd.f32 %v2262, %v4537
        %v4539 = vpop.f32.mrb[0].mxu0
        %v4540 = vadd.f32 %v2266, %v4539
        %4541 = vmatprep.mubr.bf16.mxu0 %v1966
        %4542 = vmatmul.mubr.bf16.gmra.mrb[0].mxu0 %v1965
        %v4543 = vpop.f32.mrb[0].mxu0
        %v4544 = vadd.f32 %v2262, %v4543
        %v4545 = vpop.f32.mrb[0].mxu0
        %v4546 = vadd.f32 %v2266, %v4545
        %v4547 = vpop.f32.mrb[0].mxu0
        %v4548 = vadd.f32 %v2262, %v4547
        %v4549 = vpop.f32.mrb[0].mxu0
        %v4550 = vadd.f32 %v2266, %v4549
        %4551 = vdwg.mxu0
        %4552 = vmatprep.subr.bf16.mxu0 %v3086
        %4553 = vmatpush1.bf16.msra.mxu0 %v3085
        %4554 = vmatprep.subr.bf16.mxu0 %v3102
        %4555 = vmatpush1.bf16.msra.mxu0 %v3101
        %4556 = vmatprep.subr.bf16.mxu0 %v3118
        %4557 = vmatpush1.bf16.msra.mxu0 %v3117
        %4558 = vmatprep.subr.bf16.mxu0 %v3134
        %4559 = vmatpush1.bf16.msra.mxu0 %v3133
        %4560 = vmatprep.subr.bf16.mxu0 %v3150
        %4561 = vmatpush1.bf16.msra.mxu0 %v3149
        %4562 = vmatprep.subr.bf16.mxu0 %v3166
        %4563 = vmatpush1.bf16.msra.mxu0 %v3165
        %4564 = vmatprep.subr.bf16.mxu0 %v3182
        %4565 = vmatpush1.bf16.msra.mxu0 %v3181
        %4566 = vmatprep.subr.bf16.mxu0 %v3198
        %4567 = vmatpush1.bf16.msra.mxu0 %v3197
        %4568 = vmatprep.subr.bf16.mxu0 %v3214
        %4569 = vmatpush1.bf16.msra.mxu0 %v3213
        %4570 = vmatprep.subr.bf16.mxu0 %v3230
        %4571 = vmatpush1.bf16.msra.mxu0 %v3229
        %4572 = vmatprep.subr.bf16.mxu0 %v3246
        %4573 = vmatpush1.bf16.msra.mxu0 %v3245
        %4574 = vmatprep.subr.bf16.mxu0 %v3262
        %4575 = vmatpush1.bf16.msra.mxu0 %v3261
        %4576 = vmatprep.subr.bf16.mxu0 %v3278
        %4577 = vmatpush1.bf16.msra.mxu0 %v3277
        %4578 = vmatprep.subr.bf16.mxu0 %v3294
        %4579 = vmatpush1.bf16.msra.mxu0 %v3293
        %4580 = vmatprep.subr.bf16.mxu0 %v3310
        %4581 = vmatpush1.bf16.msra.mxu0 %v3309
        %4582 = vmatprep.subr.bf16.mxu0 %v3326
        %4583 = vmatpush1.bf16.msra.mxu0 %v3325
        %4584 = vmatprep.mubr.bf16.mxu0 %v1936
        %4585 = vmatmul.mubr.bf16.gmra.mrb[0].mxu0 %v1935
        %v4586 = vpop.f32.mrb[0].mxu0
        %v4587 = vadd.f32 %v2270, %v4586
        %v4588 = vpop.f32.mrb[0].mxu0
        %v4589 = vadd.f32 %v2274, %v4588
        %v4590 = vpop.f32.mrb[0].mxu0
        %v4591 = vadd.f32 %v2270, %v4590
        %v4592 = vpop.f32.mrb[0].mxu0
        %v4593 = vadd.f32 %v2274, %v4592
        %4594 = vmatprep.mubr.bf16.mxu0 %v1938
        %4595 = vmatmul.mubr.bf16.gmra.mrb[0].mxu0 %v1937
        %v4596 = vpop.f32.mrb[0].mxu0
        %v4597 = vadd.f32 %v2270, %v4596
        %v4598 = vpop.f32.mrb[0].mxu0
        %v4599 = vadd.f32 %v2274, %v4598
        %v4600 = vpop.f32.mrb[0].mxu0
        %v4601 = vadd.f32 %v2270, %v4600
        %v4602 = vpop.f32.mrb[0].mxu0
        %v4603 = vadd.f32 %v2274, %v4602
        %4604 = vmatprep.mubr.bf16.mxu0 %v1940
        %4605 = vmatmul.mubr.bf16.gmra.mrb[0].mxu0 %v1939
        %v4606 = vpop.f32.mrb[0].mxu0
        %v4607 = vadd.f32 %v2270, %v4606
        %v4608 = vpop.f32.mrb[0].mxu0
        %v4609 = vadd.f32 %v2274, %v4608
        %v4610 = vpop.f32.mrb[0].mxu0
        %v4611 = vadd.f32 %v2270, %v4610
        %v4612 = vpop.f32.mrb[0].mxu0
        %v4613 = vadd.f32 %v2274, %v4612
        %4614 = vmatprep.mubr.bf16.mxu0 %v1942
        %4615 = vmatmul.mubr.bf16.gmra.mrb[0].mxu0 %v1941
        %v4616 = vpop.f32.mrb[0].mxu0
        %v4617 = vadd.f32 %v2270, %v4616
        %v4618 = vpop.f32.mrb[0].mxu0
        %v4619 = vadd.f32 %v2274, %v4618
        %v4620 = vpop.f32.mrb[0].mxu0
        %v4621 = vadd.f32 %v2270, %v4620
        %v4622 = vpop.f32.mrb[0].mxu0
        %v4623 = vadd.f32 %v2274, %v4622
        %4624 = vmatprep.mubr.bf16.mxu0 %v1944
        %4625 = vmatmul.mubr.bf16.gmra.mrb[0].mxu0 %v1943
        %v4626 = vpop.f32.mrb[0].mxu0
        %v4627 = vadd.f32 %v2270, %v4626
        %v4628 = vpop.f32.mrb[0].mxu0
        %v4629 = vadd.f32 %v2274, %v4628
        %v4630 = vpop.f32.mrb[0].mxu0
        %v4631 = vadd.f32 %v2270, %v4630
        %v4632 = vpop.f32.mrb[0].mxu0
        %v4633 = vadd.f32 %v2274, %v4632
        %4634 = vmatprep.mubr.bf16.mxu0 %v1946
        %4635 = vmatmul.mubr.bf16.gmra.mrb[0].mxu0 %v1945
        %v4636 = vpop.f32.mrb[0].mxu0
        %v4637 = vadd.f32 %v2270, %v4636
        %v4638 = vpop.f32.mrb[0].mxu0
        %v4639 = vadd.f32 %v2274, %v4638
        %v4640 = vpop.f32.mrb[0].mxu0
        %v4641 = vadd.f32 %v2270, %v4640
        %v4642 = vpop.f32.mrb[0].mxu0
        %v4643 = vadd.f32 %v2274, %v4642
        %4644 = vmatprep.mubr.bf16.mxu0 %v1948
        %4645 = vmatmul.mubr.bf16.gmra.mrb[0].mxu0 %v1947
        %v4646 = vpop.f32.mrb[0].mxu0
        %v4647 = vadd.f32 %v2270, %v4646
        %v4648 = vpop.f32.mrb[0].mxu0
        %v4649 = vadd.f32 %v2274, %v4648
        %v4650 = vpop.f32.mrb[0].mxu0
        %v4651 = vadd.f32 %v2270, %v4650
        %v4652 = vpop.f32.mrb[0].mxu0
        %v4653 = vadd.f32 %v2274, %v4652
        %4654 = vmatprep.mubr.bf16.mxu0 %v1950
        %4655 = vmatmul.mubr.bf16.gmra.mrb[0].mxu0 %v1949
        %v4656 = vpop.f32.mrb[0].mxu0
        %v4657 = vadd.f32 %v2270, %v4656
        %v4658 = vpop.f32.mrb[0].mxu0
        %v4659 = vadd.f32 %v2274, %v4658
        %v4660 = vpop.f32.mrb[0].mxu0
        %v4661 = vadd.f32 %v2270, %v4660
        %v4662 = vpop.f32.mrb[0].mxu0
        %v4663 = vadd.f32 %v2274, %v4662
        %4664 = vmatprep.mubr.bf16.mxu0 %v1952
        %4665 = vmatmul.mubr.bf16.gmra.mrb[0].mxu0 %v1951
        %v4666 = vpop.f32.mrb[0].mxu0
        %v4667 = vadd.f32 %v2270, %v4666
        %v4668 = vpop.f32.mrb[0].mxu0
        %v4669 = vadd.f32 %v2274, %v4668
        %v4670 = vpop.f32.mrb[0].mxu0
        %v4671 = vadd.f32 %v2270, %v4670
        %v4672 = vpop.f32.mrb[0].mxu0
        %v4673 = vadd.f32 %v2274, %v4672
        %4674 = vmatprep.mubr.bf16.mxu0 %v1954
        %4675 = vmatmul.mubr.bf16.gmra.mrb[0].mxu0 %v1953
        %v4676 = vpop.f32.mrb[0].mxu0
        %v4677 = vadd.f32 %v2270, %v4676
        %v4678 = vpop.f32.mrb[0].mxu0
        %v4679 = vadd.f32 %v2274, %v4678
        %v4680 = vpop.f32.mrb[0].mxu0
        %v4681 = vadd.f32 %v2270, %v4680
        %v4682 = vpop.f32.mrb[0].mxu0
        %v4683 = vadd.f32 %v2274, %v4682
        %4684 = vmatprep.mubr.bf16.mxu0 %v1956
        %4685 = vmatmul.mubr.bf16.gmra.mrb[0].mxu0 %v1955
        %v4686 = vpop.f32.mrb[0].mxu0
        %v4687 = vadd.f32 %v2270, %v4686
        %v4688 = vpop.f32.mrb[0].mxu0
        %v4689 = vadd.f32 %v2274, %v4688
        %v4690 = vpop.f32.mrb[0].mxu0
        %v4691 = vadd.f32 %v2270, %v4690
        %v4692 = vpop.f32.mrb[0].mxu0
        %v4693 = vadd.f32 %v2274, %v4692
        %4694 = vmatprep.mubr.bf16.mxu0 %v1958
        %4695 = vmatmul.mubr.bf16.gmra.mrb[0].mxu0 %v1957
        %v4696 = vpop.f32.mrb[0].mxu0
        %v4697 = vadd.f32 %v2270, %v4696
        %v4698 = vpop.f32.mrb[0].mxu0
        %v4699 = vadd.f32 %v2274, %v4698
        %v4700 = vpop.f32.mrb[0].mxu0
        %v4701 = vadd.f32 %v2270, %v4700
        %v4702 = vpop.f32.mrb[0].mxu0
        %v4703 = vadd.f32 %v2274, %v4702
        %4704 = vmatprep.mubr.bf16.mxu0 %v1960
        %4705 = vmatmul.mubr.bf16.gmra.mrb[0].mxu0 %v1959
        %v4706 = vpop.f32.mrb[0].mxu0
        %v4707 = vadd.f32 %v2270, %v4706
        %v4708 = vpop.f32.mrb[0].mxu0
        %v4709 = vadd.f32 %v2274, %v4708
        %v4710 = vpop.f32.mrb[0].mxu0
        %v4711 = vadd.f32 %v2270, %v4710
        %v4712 = vpop.f32.mrb[0].mxu0
        %v4713 = vadd.f32 %v2274, %v4712
        %4714 = vmatprep.mubr.bf16.mxu0 %v1962
        %4715 = vmatmul.mubr.bf16.gmra.mrb[0].mxu0 %v1961
        %v4716 = vpop.f32.mrb[0].mxu0
        %v4717 = vadd.f32 %v2270, %v4716
        %v4718 = vpop.f32.mrb[0].mxu0
        %v4719 = vadd.f32 %v2274, %v4718
        %v4720 = vpop.f32.mrb[0].mxu0
        %v4721 = vadd.f32 %v2270, %v4720
        %v4722 = vpop.f32.mrb[0].mxu0
        %v4723 = vadd.f32 %v2274, %v4722
        %4724 = vmatprep.mubr.bf16.mxu0 %v1964
        %4725 = vmatmul.mubr.bf16.gmra.mrb[0].mxu0 %v1963
        %v4726 = vpop.f32.mrb[0].mxu0
        %v4727 = vadd.f32 %v2270, %v4726
        %v4728 = vpop.f32.mrb[0].mxu0
        %v4729 = vadd.f32 %v2274, %v4728
        %v4730 = vpop.f32.mrb[0].mxu0
        %v4731 = vadd.f32 %v2270, %v4730
        %v4732 = vpop.f32.mrb[0].mxu0
        %v4733 = vadd.f32 %v2274, %v4732
        %4734 = vmatprep.mubr.bf16.mxu0 %v1966
        %4735 = vmatmul.mubr.bf16.gmra.mrb[0].mxu0 %v1965
        %v4736 = vpop.f32.mrb[0].mxu0
        %v4737 = vadd.f32 %v2270, %v4736
        %v4738 = vpop.f32.mrb[0].mxu0
        %v4739 = vadd.f32 %v2274, %v4738
        %v4740 = vpop.f32.mrb[0].mxu0
        %v4741 = vadd.f32 %v2270, %v4740
        %v4742 = vpop.f32.mrb[0].mxu0
        %v4743 = vadd.f32 %v2274, %v4742
        %4744 = vdwg.mxu0
        %4745 = vmatprep.subr.bf16.mxu0 %v3088
        %4746 = vmatpush1.bf16.msra.mxu0 %v3087
        %4747 = vmatprep.subr.bf16.mxu0 %v3104
        %4748 = vmatpush1.bf16.msra.mxu0 %v3103
        %4749 = vmatprep.subr.bf16.mxu0 %v3120
        %4750 = vmatpush1.bf16.msra.mxu0 %v3119
        %4751 = vmatprep.subr.bf16.mxu0 %v3136
        %4752 = vmatpush1.bf16.msra.mxu0 %v3135
        %4753 = vmatprep.subr.bf16.mxu0 %v3152
        %4754 = vmatpush1.bf16.msra.mxu0 %v3151
        %4755 = vmatprep.subr.bf16.mxu0 %v3168
        %4756 = vmatpush1.bf16.msra.mxu0 %v3167
        %4757 = vmatprep.subr.bf16.mxu0 %v3184
        %4758 = vmatpush1.bf16.msra.mxu0 %v3183
        %4759 = vmatprep.subr.bf16.mxu0 %v3200
        %4760 = vmatpush1.bf16.msra.mxu0 %v3199
        %4761 = vmatprep.subr.bf16.mxu0 %v3216
        %4762 = vmatpush1.bf16.msra.mxu0 %v3215
        %4763 = vmatprep.subr.bf16.mxu0 %v3232
        %4764 = vmatpush1.bf16.msra.mxu0 %v3231
        %4765 = vmatprep.subr.bf16.mxu0 %v3248
        %4766 = vmatpush1.bf16.msra.mxu0 %v3247
        %4767 = vmatprep.subr.bf16.mxu0 %v3264
        %4768 = vmatpush1.bf16.msra.mxu0 %v3263
        %4769 = vmatprep.subr.bf16.mxu0 %v3280
        %4770 = vmatpush1.bf16.msra.mxu0 %v3279
        %4771 = vmatprep.subr.bf16.mxu0 %v3296
        %4772 = vmatpush1.bf16.msra.mxu0 %v3295
        %4773 = vmatprep.subr.bf16.mxu0 %v3312
        %4774 = vmatpush1.bf16.msra.mxu0 %v3311
        %4775 = vmatprep.subr.bf16.mxu0 %v3328
        %4776 = vmatpush1.bf16.msra.mxu0 %v3327
        %4777 = vmatprep.mubr.bf16.mxu0 %v1936
        %4778 = vmatmul.mubr.bf16.gmra.mrb[0].mxu0 %v1935
        %v4779 = vpop.f32.mrb[0].mxu0
        %v4780 = vadd.f32 %v2278, %v4779
        %v4781 = vpop.f32.mrb[0].mxu0
        %v4782 = vadd.f32 %v2282, %v4781
        %v4783 = vpop.f32.mrb[0].mxu0
        %v4784 = vadd.f32 %v2278, %v4783
        %v4785 = vpop.f32.mrb[0].mxu0
        %v4786 = vadd.f32 %v2282, %v4785
        %4787 = vmatprep.mubr.bf16.mxu0 %v1938
        %4788 = vmatmul.mubr.bf16.gmra.mrb[0].mxu0 %v1937
        %v4789 = vpop.f32.mrb[0].mxu0
        %v4790 = vadd.f32 %v2278, %v4789
        %v4791 = vpop.f32.mrb[0].mxu0
        %v4792 = vadd.f32 %v2282, %v4791
        %v4793 = vpop.f32.mrb[0].mxu0
        %v4794 = vadd.f32 %v2278, %v4793
        %v4795 = vpop.f32.mrb[0].mxu0
        %v4796 = vadd.f32 %v2282, %v4795
        %4797 = vmatprep.mubr.bf16.mxu0 %v1940
        %4798 = vmatmul.mubr.bf16.gmra.mrb[0].mxu0 %v1939
        %v4799 = vpop.f32.mrb[0].mxu0
        %v4800 = vadd.f32 %v2278, %v4799
        %v4801 = vpop.f32.mrb[0].mxu0
        %v4802 = vadd.f32 %v2282, %v4801
        %v4803 = vpop.f32.mrb[0].mxu0
        %v4804 = vadd.f32 %v2278, %v4803
        %v4805 = vpop.f32.mrb[0].mxu0
        %v4806 = vadd.f32 %v2282, %v4805
        %4807 = vmatprep.mubr.bf16.mxu0 %v1942
        %4808 = vmatmul.mubr.bf16.gmra.mrb[0].mxu0 %v1941
        %v4809 = vpop.f32.mrb[0].mxu0
        %v4810 = vadd.f32 %v2278, %v4809
        %v4811 = vpop.f32.mrb[0].mxu0
        %v4812 = vadd.f32 %v2282, %v4811
        %v4813 = vpop.f32.mrb[0].mxu0
        %v4814 = vadd.f32 %v2278, %v4813
        %v4815 = vpop.f32.mrb[0].mxu0
        %v4816 = vadd.f32 %v2282, %v4815
        %4817 = vmatprep.mubr.bf16.mxu0 %v1944
        %4818 = vmatmul.mubr.bf16.gmra.mrb[0].mxu0 %v1943
        %v4819 = vpop.f32.mrb[0].mxu0
        %v4820 = vadd.f32 %v2278, %v4819
        %v4821 = vpop.f32.mrb[0].mxu0
        %v4822 = vadd.f32 %v2282, %v4821
        %v4823 = vpop.f32.mrb[0].mxu0
        %v4824 = vadd.f32 %v2278, %v4823
        %v4825 = vpop.f32.mrb[0].mxu0
        %v4826 = vadd.f32 %v2282, %v4825
        %4827 = vmatprep.mubr.bf16.mxu0 %v1946
        %4828 = vmatmul.mubr.bf16.gmra.mrb[0].mxu0 %v1945
        %v4829 = vpop.f32.mrb[0].mxu0
        %v4830 = vadd.f32 %v2278, %v4829
        %v4831 = vpop.f32.mrb[0].mxu0
        %v4832 = vadd.f32 %v2282, %v4831
        %v4833 = vpop.f32.mrb[0].mxu0
        %v4834 = vadd.f32 %v2278, %v4833
        %v4835 = vpop.f32.mrb[0].mxu0
        %v4836 = vadd.f32 %v2282, %v4835
        %4837 = vmatprep.mubr.bf16.mxu0 %v1948
        %4838 = vmatmul.mubr.bf16.gmra.mrb[0].mxu0 %v1947
        %v4839 = vpop.f32.mrb[0].mxu0
        %v4840 = vadd.f32 %v2278, %v4839
        %v4841 = vpop.f32.mrb[0].mxu0
        %v4842 = vadd.f32 %v2282, %v4841
        %v4843 = vpop.f32.mrb[0].mxu0
        %v4844 = vadd.f32 %v2278, %v4843
        %v4845 = vpop.f32.mrb[0].mxu0
        %v4846 = vadd.f32 %v2282, %v4845
        %4847 = vmatprep.mubr.bf16.mxu0 %v1950
        %4848 = vmatmul.mubr.bf16.gmra.mrb[0].mxu0 %v1949
        %v4849 = vpop.f32.mrb[0].mxu0
        %v4850 = vadd.f32 %v2278, %v4849
        %v4851 = vpop.f32.mrb[0].mxu0
        %v4852 = vadd.f32 %v2282, %v4851
        %v4853 = vpop.f32.mrb[0].mxu0
        %v4854 = vadd.f32 %v2278, %v4853
        %v4855 = vpop.f32.mrb[0].mxu0
        %v4856 = vadd.f32 %v2282, %v4855
        %4857 = vmatprep.mubr.bf16.mxu0 %v1952
        %4858 = vmatmul.mubr.bf16.gmra.mrb[0].mxu0 %v1951
        %v4859 = vpop.f32.mrb[0].mxu0
        %v4860 = vadd.f32 %v2278, %v4859
        %v4861 = vpop.f32.mrb[0].mxu0
        %v4862 = vadd.f32 %v2282, %v4861
        %v4863 = vpop.f32.mrb[0].mxu0
        %v4864 = vadd.f32 %v2278, %v4863
        %v4865 = vpop.f32.mrb[0].mxu0
        %v4866 = vadd.f32 %v2282, %v4865
        %4867 = vmatprep.mubr.bf16.mxu0 %v1954
        %4868 = vmatmul.mubr.bf16.gmra.mrb[0].mxu0 %v1953
        %v4869 = vpop.f32.mrb[0].mxu0
        %v4870 = vadd.f32 %v2278, %v4869
        %v4871 = vpop.f32.mrb[0].mxu0
        %v4872 = vadd.f32 %v2282, %v4871
        %v4873 = vpop.f32.mrb[0].mxu0
        %v4874 = vadd.f32 %v2278, %v4873
        %v4875 = vpop.f32.mrb[0].mxu0
        %v4876 = vadd.f32 %v2282, %v4875
        %4877 = vmatprep.mubr.bf16.mxu0 %v1956
        %4878 = vmatmul.mubr.bf16.gmra.mrb[0].mxu0 %v1955
        %v4879 = vpop.f32.mrb[0].mxu0
        %v4880 = vadd.f32 %v2278, %v4879
        %v4881 = vpop.f32.mrb[0].mxu0
        %v4882 = vadd.f32 %v2282, %v4881
        %v4883 = vpop.f32.mrb[0].mxu0
        %v4884 = vadd.f32 %v2278, %v4883
        %v4885 = vpop.f32.mrb[0].mxu0
        %v4886 = vadd.f32 %v2282, %v4885
        %4887 = vmatprep.mubr.bf16.mxu0 %v1958
        %4888 = vmatmul.mubr.bf16.gmra.mrb[0].mxu0 %v1957
        %v4889 = vpop.f32.mrb[0].mxu0
        %v4890 = vadd.f32 %v2278, %v4889
        %v4891 = vpop.f32.mrb[0].mxu0
        %v4892 = vadd.f32 %v2282, %v4891
        %v4893 = vpop.f32.mrb[0].mxu0
        %v4894 = vadd.f32 %v2278, %v4893
        %v4895 = vpop.f32.mrb[0].mxu0
        %v4896 = vadd.f32 %v2282, %v4895
        %4897 = vmatprep.mubr.bf16.mxu0 %v1960
        %4898 = vmatmul.mubr.bf16.gmra.mrb[0].mxu0 %v1959
        %v4899 = vpop.f32.mrb[0].mxu0
        %v4900 = vadd.f32 %v2278, %v4899
        %v4901 = vpop.f32.mrb[0].mxu0
        %v4902 = vadd.f32 %v2282, %v4901
        %v4903 = vpop.f32.mrb[0].mxu0
        %v4904 = vadd.f32 %v2278, %v4903
        %v4905 = vpop.f32.mrb[0].mxu0
        %v4906 = vadd.f32 %v2282, %v4905
        %4907 = vmatprep.mubr.bf16.mxu0 %v1962
        %4908 = vmatmul.mubr.bf16.gmra.mrb[0].mxu0 %v1961
        %v4909 = vpop.f32.mrb[0].mxu0
        %v4910 = vadd.f32 %v2278, %v4909
        %v4911 = vpop.f32.mrb[0].mxu0
        %v4912 = vadd.f32 %v2282, %v4911
        %v4913 = vpop.f32.mrb[0].mxu0
        %v4914 = vadd.f32 %v2278, %v4913
        %v4915 = vpop.f32.mrb[0].mxu0
        %v4916 = vadd.f32 %v2282, %v4915
        %4917 = vmatprep.mubr.bf16.mxu0 %v1964
        %4918 = vmatmul.mubr.bf16.gmra.mrb[0].mxu0 %v1963
        %v4919 = vpop.f32.mrb[0].mxu0
        %v4920 = vadd.f32 %v2278, %v4919
        %v4921 = vpop.f32.mrb[0].mxu0
        %v4922 = vadd.f32 %v2282, %v4921
        %v4923 = vpop.f32.mrb[0].mxu0
        %v4924 = vadd.f32 %v2278, %v4923
        %v4925 = vpop.f32.mrb[0].mxu0
        %v4926 = vadd.f32 %v2282, %v4925
        %4927 = vmatprep.mubr.bf16.mxu0 %v1966
        %4928 = vmatmul.mubr.bf16.gmra.mrb[0].mxu0 %v1965
        %v4929 = vpop.f32.mrb[0].mxu0
        %v4930 = vadd.f32 %v2278, %v4929
        %v4931 = vpop.f32.mrb[0].mxu0
        %v4932 = vadd.f32 %v2282, %v4931
        %v4933 = vpop.f32.mrb[0].mxu0
        %v4934 = vadd.f32 %v2278, %v4933
        %v4935 = vpop.f32.mrb[0].mxu0
        %v4936 = vadd.f32 %v2282, %v4935
        %4937 = vdwg.mxu0
        %4938 = vmatprep.subr.bf16.mxu0 %v3090
        %4939 = vmatpush1.bf16.msra.mxu0 %v3089
        %4940 = vmatprep.subr.bf16.mxu0 %v3106
        %4941 = vmatpush1.bf16.msra.mxu0 %v3105
        %4942 = vmatprep.subr.bf16.mxu0 %v3122
        %4943 = vmatpush1.bf16.msra.mxu0 %v3121
        %4944 = vmatprep.subr.bf16.mxu0 %v3138
        %4945 = vmatpush1.bf16.msra.mxu0 %v3137
        %4946 = vmatprep.subr.bf16.mxu0 %v3154
        %4947 = vmatpush1.bf16.msra.mxu0 %v3153
        %4948 = vmatprep.subr.bf16.mxu0 %v3170
        %4949 = vmatpush1.bf16.msra.mxu0 %v3169
        %4950 = vmatprep.subr.bf16.mxu0 %v3186
        %4951 = vmatpush1.bf16.msra.mxu0 %v3185
        %4952 = vmatprep.subr.bf16.mxu0 %v3202
        %4953 = vmatpush1.bf16.msra.mxu0 %v3201
        %4954 = vmatprep.subr.bf16.mxu0 %v3218
        %4955 = vmatpush1.bf16.msra.mxu0 %v3217
        %4956 = vmatprep.subr.bf16.mxu0 %v3234
        %4957 = vmatpush1.bf16.msra.mxu0 %v3233
        %4958 = vmatprep.subr.bf16.mxu0 %v3250
        %4959 = vmatpush1.bf16.msra.mxu0 %v3249
        %4960 = vmatprep.subr.bf16.mxu0 %v3266
        %4961 = vmatpush1.bf16.msra.mxu0 %v3265
        %4962 = vmatprep.subr.bf16.mxu0 %v3282
        %4963 = vmatpush1.bf16.msra.mxu0 %v3281
        %4964 = vmatprep.subr.bf16.mxu0 %v3298
        %4965 = vmatpush1.bf16.msra.mxu0 %v3297
        %4966 = vmatprep.subr.bf16.mxu0 %v3314
        %4967 = vmatpush1.bf16.msra.mxu0 %v3313
        %4968 = vmatprep.subr.bf16.mxu0 %v3330
        %4969 = vmatpush1.bf16.msra.mxu0 %v3329
        %4970 = vmatprep.mubr.bf16.mxu0 %v1936
        %4971 = vmatmul.mubr.bf16.gmra.mrb[0].mxu0 %v1935
        %v4972 = vpop.f32.mrb[0].mxu0
        %v4973 = vadd.f32 %v2286, %v4972
        %v4974 = vpop.f32.mrb[0].mxu0
        %v4975 = vadd.f32 %v2290, %v4974
        %v4976 = vpop.f32.mrb[0].mxu0
        %v4977 = vadd.f32 %v2286, %v4976
        %v4978 = vpop.f32.mrb[0].mxu0
        %v4979 = vadd.f32 %v2290, %v4978
        %4980 = vmatprep.mubr.bf16.mxu0 %v1938
        %4981 = vmatmul.mubr.bf16.gmra.mrb[0].mxu0 %v1937
        %v4982 = vpop.f32.mrb[0].mxu0
        %v4983 = vadd.f32 %v2286, %v4982
        %v4984 = vpop.f32.mrb[0].mxu0
        %v4985 = vadd.f32 %v2290, %v4984
        %v4986 = vpop.f32.mrb[0].mxu0
        %v4987 = vadd.f32 %v2286, %v4986
        %v4988 = vpop.f32.mrb[0].mxu0
        %v4989 = vadd.f32 %v2290, %v4988
        %4990 = vmatprep.mubr.bf16.mxu0 %v1940
        %4991 = vmatmul.mubr.bf16.gmra.mrb[0].mxu0 %v1939
        %v4992 = vpop.f32.mrb[0].mxu0
        %v4993 = vadd.f32 %v2286, %v4992
        %v4994 = vpop.f32.mrb[0].mxu0
        %v4995 = vadd.f32 %v2290, %v4994
        %v4996 = vpop.f32.mrb[0].mxu0
        %v4997 = vadd.f32 %v2286, %v4996
        %v4998 = vpop.f32.mrb[0].mxu0
        %v4999 = vadd.f32 %v2290, %v4998
        %5000 = vmatprep.mubr.bf16.mxu0 %v1942
        %5001 = vmatmul.mubr.bf16.gmra.mrb[0].mxu0 %v1941
        %v5002 = vpop.f32.mrb[0].mxu0
        %v5003 = vadd.f32 %v2286, %v5002
        %v5004 = vpop.f32.mrb[0].mxu0
        %v5005 = vadd.f32 %v2290, %v5004
        %v5006 = vpop.f32.mrb[0].mxu0
        %v5007 = vadd.f32 %v2286, %v5006
        %v5008 = vpop.f32.mrb[0].mxu0
        %v5009 = vadd.f32 %v2290, %v5008
        %5010 = vmatprep.mubr.bf16.mxu0 %v1944
        %5011 = vmatmul.mubr.bf16.gmra.mrb[0].mxu0 %v1943
        %v5012 = vpop.f32.mrb[0].mxu0
        %v5013 = vadd.f32 %v2286, %v5012
        %v5014 = vpop.f32.mrb[0].mxu0
        %v5015 = vadd.f32 %v2290, %v5014
        %v5016 = vpop.f32.mrb[0].mxu0
        %v5017 = vadd.f32 %v2286, %v5016
        %v5018 = vpop.f32.mrb[0].mxu0
        %v5019 = vadd.f32 %v2290, %v5018
        %5020 = vmatprep.mubr.bf16.mxu0 %v1946
        %5021 = vmatmul.mubr.bf16.gmra.mrb[0].mxu0 %v1945
        %v5022 = vpop.f32.mrb[0].mxu0
        %v5023 = vadd.f32 %v2286, %v5022
        %v5024 = vpop.f32.mrb[0].mxu0
        %v5025 = vadd.f32 %v2290, %v5024
        %v5026 = vpop.f32.mrb[0].mxu0
        %v5027 = vadd.f32 %v2286, %v5026
        %v5028 = vpop.f32.mrb[0].mxu0
        %v5029 = vadd.f32 %v2290, %v5028
        %5030 = vmatprep.mubr.bf16.mxu0 %v1948
        %5031 = vmatmul.mubr.bf16.gmra.mrb[0].mxu0 %v1947
        %v5032 = vpop.f32.mrb[0].mxu0
        %v5033 = vadd.f32 %v2286, %v5032
        %v5034 = vpop.f32.mrb[0].mxu0
        %v5035 = vadd.f32 %v2290, %v5034
        %v5036 = vpop.f32.mrb[0].mxu0
        %v5037 = vadd.f32 %v2286, %v5036
        %v5038 = vpop.f32.mrb[0].mxu0
        %v5039 = vadd.f32 %v2290, %v5038
        %5040 = vmatprep.mubr.bf16.mxu0 %v1950
        %5041 = vmatmul.mubr.bf16.gmra.mrb[0].mxu0 %v1949
        %v5042 = vpop.f32.mrb[0].mxu0
        %v5043 = vadd.f32 %v2286, %v5042
        %v5044 = vpop.f32.mrb[0].mxu0
        %v5045 = vadd.f32 %v2290, %v5044
        %v5046 = vpop.f32.mrb[0].mxu0
        %v5047 = vadd.f32 %v2286, %v5046
        %v5048 = vpop.f32.mrb[0].mxu0
        %v5049 = vadd.f32 %v2290, %v5048
        %5050 = vmatprep.mubr.bf16.mxu0 %v1952
        %5051 = vmatmul.mubr.bf16.gmra.mrb[0].mxu0 %v1951
        %v5052 = vpop.f32.mrb[0].mxu0
        %v5053 = vadd.f32 %v2286, %v5052
        %v5054 = vpop.f32.mrb[0].mxu0
        %v5055 = vadd.f32 %v2290, %v5054
        %v5056 = vpop.f32.mrb[0].mxu0
        %v5057 = vadd.f32 %v2286, %v5056
        %v5058 = vpop.f32.mrb[0].mxu0
        %v5059 = vadd.f32 %v2290, %v5058
        %5060 = vmatprep.mubr.bf16.mxu0 %v1954
        %5061 = vmatmul.mubr.bf16.gmra.mrb[0].mxu0 %v1953
        %v5062 = vpop.f32.mrb[0].mxu0
        %v5063 = vadd.f32 %v2286, %v5062
        %v5064 = vpop.f32.mrb[0].mxu0
        %v5065 = vadd.f32 %v2290, %v5064
        %v5066 = vpop.f32.mrb[0].mxu0
        %v5067 = vadd.f32 %v2286, %v5066
        %v5068 = vpop.f32.mrb[0].mxu0
        %v5069 = vadd.f32 %v2290, %v5068
        %5070 = vmatprep.mubr.bf16.mxu0 %v1956
        %5071 = vmatmul.mubr.bf16.gmra.mrb[0].mxu0 %v1955
        %v5072 = vpop.f32.mrb[0].mxu0
        %v5073 = vadd.f32 %v2286, %v5072
        %v5074 = vpop.f32.mrb[0].mxu0
        %v5075 = vadd.f32 %v2290, %v5074
        %v5076 = vpop.f32.mrb[0].mxu0
        %v5077 = vadd.f32 %v2286, %v5076
        %v5078 = vpop.f32.mrb[0].mxu0
        %v5079 = vadd.f32 %v2290, %v5078
        %5080 = vmatprep.mubr.bf16.mxu0 %v1958
        %5081 = vmatmul.mubr.bf16.gmra.mrb[0].mxu0 %v1957
        %v5082 = vpop.f32.mrb[0].mxu0
        %v5083 = vadd.f32 %v2286, %v5082
        %v5084 = vpop.f32.mrb[0].mxu0
        %v5085 = vadd.f32 %v2290, %v5084
        %v5086 = vpop.f32.mrb[0].mxu0
        %v5087 = vadd.f32 %v2286, %v5086
        %v5088 = vpop.f32.mrb[0].mxu0
        %v5089 = vadd.f32 %v2290, %v5088
        %5090 = vmatprep.mubr.bf16.mxu0 %v1960
        %5091 = vmatmul.mubr.bf16.gmra.mrb[0].mxu0 %v1959
        %v5092 = vpop.f32.mrb[0].mxu0
        %v5093 = vadd.f32 %v2286, %v5092
        %v5094 = vpop.f32.mrb[0].mxu0
        %v5095 = vadd.f32 %v2290, %v5094
        %v5096 = vpop.f32.mrb[0].mxu0
        %v5097 = vadd.f32 %v2286, %v5096
        %v5098 = vpop.f32.mrb[0].mxu0
        %v5099 = vadd.f32 %v2290, %v5098
        %5100 = vmatprep.mubr.bf16.mxu0 %v1962
        %5101 = vmatmul.mubr.bf16.gmra.mrb[0].mxu0 %v1961
        %v5102 = vpop.f32.mrb[0].mxu0
        %v5103 = vadd.f32 %v2286, %v5102
        %v5104 = vpop.f32.mrb[0].mxu0
        %v5105 = vadd.f32 %v2290, %v5104
        %v5106 = vpop.f32.mrb[0].mxu0
        %v5107 = vadd.f32 %v2286, %v5106
        %v5108 = vpop.f32.mrb[0].mxu0
        %v5109 = vadd.f32 %v2290, %v5108
        %5110 = vmatprep.mubr.bf16.mxu0 %v1964
        %5111 = vmatmul.mubr.bf16.gmra.mrb[0].mxu0 %v1963
        %v5112 = vpop.f32.mrb[0].mxu0
        %v5113 = vadd.f32 %v2286, %v5112
        %v5114 = vpop.f32.mrb[0].mxu0
        %v5115 = vadd.f32 %v2290, %v5114
        %v5116 = vpop.f32.mrb[0].mxu0
        %v5117 = vadd.f32 %v2286, %v5116
        %v5118 = vpop.f32.mrb[0].mxu0
        %v5119 = vadd.f32 %v2290, %v5118
        %5120 = vmatprep.mubr.bf16.mxu0 %v1966
        %5121 = vmatmul.mubr.bf16.gmra.mrb[0].mxu0 %v1965
        %v5122 = vpop.f32.mrb[0].mxu0
        %v5123 = vadd.f32 %v2286, %v5122
        %v5124 = vpop.f32.mrb[0].mxu0
        %v5125 = vadd.f32 %v2290, %v5124
        %v5126 = vpop.f32.mrb[0].mxu0
        %v5127 = vadd.f32 %v2286, %v5126
        %v5128 = vpop.f32.mrb[0].mxu0
        %v5129 = vadd.f32 %v2290, %v5128
        %5130 = vdwg.mxu0
        %5131 = vst [vmem:[%s342] sm:$0xff] %v3622
        %5132 = vst [vmem:[%s342 + $0x8] sm:$0xff] %v3624
        %5133 = vst [vmem:[%s342 + $0x10] sm:$0xff] %v3815
        %5134 = vst [vmem:[%s342 + $0x18] sm:$0xff] %v3817
        %5135 = vst [vmem:[%s342 + $0x20] sm:$0xff] %v4008
        %5136 = vst [vmem:[%s342 + $0x28] sm:$0xff] %v4010
        %5137 = vst [vmem:[%s342 + $0x30] sm:$0xff] %v4201
        %5138 = vst [vmem:[%s342 + $0x38] sm:$0xff] %v4203
        %5139 = vst [vmem:[%s342 + $0x40] sm:$0xff] %v4394
        %5140 = vst [vmem:[%s342 + $0x48] sm:$0xff] %v4396
        %5141 = vst [vmem:[%s342 + $0x50] sm:$0xff] %v4587
        %5142 = vst [vmem:[%s342 + $0x58] sm:$0xff] %v4589
        %5143 = vst [vmem:[%s342 + $0x60] sm:$0xff] %v4780
        %5144 = vst [vmem:[%s342 + $0x68] sm:$0xff] %v4782
        %5145 = vst [vmem:[%s342 + $0x70] sm:$0xff] %v4973
        %5146 = vst [vmem:[%s342 + $0x78] sm:$0xff] %v4975
        %5147 = vst [vmem:[%s342 + $0x80] sm:$0xff] %v3626
        %5148 = vst [vmem:[%s342 + $0x88] sm:$0xff] %v3628
        %5149 = vst [vmem:[%s342 + $0x90] sm:$0xff] %v3819
        %5150 = vst [vmem:[%s342 + $0x98] sm:$0xff] %v3821
        %5151 = vst [vmem:[%s342 + $0xa0] sm:$0xff] %v4012
        %5152 = vst [vmem:[%s342 + $0xa8] sm:$0xff] %v4014
        %5153 = vst [vmem:[%s342 + $0xb0] sm:$0xff] %v4205
        %5154 = vst [vmem:[%s342 + $0xb8] sm:$0xff] %v4207
        %5155 = vst [vmem:[%s342 + $0xc0] sm:$0xff] %v4398
        %5156 = vst [vmem:[%s342 + $0xc8] sm:$0xff] %v4400
        %5157 = vst [vmem:[%s342 + $0xd0] sm:$0xff] %v4591
        %5158 = vst [vmem:[%s342 + $0xd8] sm:$0xff] %v4593
        %5159 = vst [vmem:[%s342 + $0xe0] sm:$0xff] %v4784
        %5160 = vst [vmem:[%s342 + $0xe8] sm:$0xff] %v4786
        %5161 = vst [vmem:[%s342 + $0xf0] sm:$0xff] %v4977
        %5162 = vst [vmem:[%s342 + $0xf8] sm:$0xff] %v4979
        %5163 = vst [vmem:[%s342 + $0x100] sm:$0xff] %v3632
        %5164 = vst [vmem:[%s342 + $0x108] sm:$0xff] %v3634
        %5165 = vst [vmem:[%s342 + $0x110] sm:$0xff] %v3825
        %5166 = vst [vmem:[%s342 + $0x118] sm:$0xff] %v3827
        %5167 = vst [vmem:[%s342 + $0x120] sm:$0xff] %v4018
        %5168 = vst [vmem:[%s342 + $0x128] sm:$0xff] %v4020
        %5169 = vst [vmem:[%s342 + $0x130] sm:$0xff] %v4211
        %5170 = vst [vmem:[%s342 + $0x138] sm:$0xff] %v4213
        %5171 = vst [vmem:[%s342 + $0x140] sm:$0xff] %v4404
        %5172 = vst [vmem:[%s342 + $0x148] sm:$0xff] %v4406
        %5173 = vst [vmem:[%s342 + $0x150] sm:$0xff] %v4597
        %5174 = vst [vmem:[%s342 + $0x158] sm:$0xff] %v4599
        %5175 = vst [vmem:[%s342 + $0x160] sm:$0xff] %v4790
        %5176 = vst [vmem:[%s342 + $0x168] sm:$0xff] %v4792
        %5177 = vst [vmem:[%s342 + $0x170] sm:$0xff] %v4983
        %5178 = vst [vmem:[%s342 + $0x178] sm:$0xff] %v4985
        %5179 = vst [vmem:[%s342 + $0x180] sm:$0xff] %v3636
        %5180 = vst [vmem:[%s342 + $0x188] sm:$0xff] %v3638
        %5181 = vst [vmem:[%s342 + $0x190] sm:$0xff] %v3829
        %5182 = vst [vmem:[%s342 + $0x198] sm:$0xff] %v3831
        %5183 = vst [vmem:[%s342 + $0x1a0] sm:$0xff] %v4022
        %5184 = vst [vmem:[%s342 + $0x1a8] sm:$0xff] %v4024
        %5185 = vst [vmem:[%s342 + $0x1b0] sm:$0xff] %v4215
        %5186 = vst [vmem:[%s342 + $0x1b8] sm:$0xff] %v4217
        %5187 = vst [vmem:[%s342 + $0x1c0] sm:$0xff] %v4408
        %5188 = vst [vmem:[%s342 + $0x1c8] sm:$0xff] %v4410
        %5189 = vst [vmem:[%s342 + $0x1d0] sm:$0xff] %v4601
        %5190 = vst [vmem:[%s342 + $0x1d8] sm:$0xff] %v4603
        %5191 = vst [vmem:[%s342 + $0x1e0] sm:$0xff] %v4794
        %5192 = vst [vmem:[%s342 + $0x1e8] sm:$0xff] %v4796
        %5193 = vst [vmem:[%s342 + $0x1f0] sm:$0xff] %v4987
        %5194 = vst [vmem:[%s342 + $0x1f8] sm:$0xff] %v4989
        %5195 = vst [vmem:[%s342 + $0x200] sm:$0xff] %v3642
        %5196 = vst [vmem:[%s342 + $0x208] sm:$0xff] %v3644
        %5197 = vst [vmem:[%s342 + $0x210] sm:$0xff] %v3835
        %5198 = vst [vmem:[%s342 + $0x218] sm:$0xff] %v3837
        %5199 = vst [vmem:[%s342 + $0x220] sm:$0xff] %v4028
        %5200 = vst [vmem:[%s342 + $0x228] sm:$0xff] %v4030
        %5201 = vst [vmem:[%s342 + $0x230] sm:$0xff] %v4221
        %5202 = vst [vmem:[%s342 + $0x238] sm:$0xff] %v4223
        %5203 = vst [vmem:[%s342 + $0x240] sm:$0xff] %v4414
        %5204 = vst [vmem:[%s342 + $0x248] sm:$0xff] %v4416
        %5205 = vst [vmem:[%s342 + $0x250] sm:$0xff] %v4607
        %5206 = vst [vmem:[%s342 + $0x258] sm:$0xff] %v4609
        %5207 = vst [vmem:[%s342 + $0x260] sm:$0xff] %v4800
        %5208 = vst [vmem:[%s342 + $0x268] sm:$0xff] %v4802
        %5209 = vst [vmem:[%s342 + $0x270] sm:$0xff] %v4993
        %5210 = vst [vmem:[%s342 + $0x278] sm:$0xff] %v4995
        %5211 = vst [vmem:[%s342 + $0x280] sm:$0xff] %v3646
        %5212 = vst [vmem:[%s342 + $0x288] sm:$0xff] %v3648
        %5213 = vst [vmem:[%s342 + $0x290] sm:$0xff] %v3839
        %5214 = vst [vmem:[%s342 + $0x298] sm:$0xff] %v3841
        %5215 = vst [vmem:[%s342 + $0x2a0] sm:$0xff] %v4032
        %5216 = vst [vmem:[%s342 + $0x2a8] sm:$0xff] %v4034
        %5217 = vst [vmem:[%s342 + $0x2b0] sm:$0xff] %v4225
        %5218 = vst [vmem:[%s342 + $0x2b8] sm:$0xff] %v4227
        %5219 = vst [vmem:[%s342 + $0x2c0] sm:$0xff] %v4418
        %5220 = vst [vmem:[%s342 + $0x2c8] sm:$0xff] %v4420
        %5221 = vst [vmem:[%s342 + $0x2d0] sm:$0xff] %v4611
        %5222 = vst [vmem:[%s342 + $0x2d8] sm:$0xff] %v4613
        %5223 = vst [vmem:[%s342 + $0x2e0] sm:$0xff] %v4804
        %5224 = vst [vmem:[%s342 + $0x2e8] sm:$0xff] %v4806
        %5225 = vst [vmem:[%s342 + $0x2f0] sm:$0xff] %v4997
        %5226 = vst [vmem:[%s342 + $0x2f8] sm:$0xff] %v4999
        %5227 = vst [vmem:[%s342 + $0x300] sm:$0xff] %v3652
        %5228 = vst [vmem:[%s342 + $0x308] sm:$0xff] %v3654
        %5229 = vst [vmem:[%s342 + $0x310] sm:$0xff] %v3845
        %5230 = vst [vmem:[%s342 + $0x318] sm:$0xff] %v3847
        %5231 = vst [vmem:[%s342 + $0x320] sm:$0xff] %v4038
        %5232 = vst [vmem:[%s342 + $0x328] sm:$0xff] %v4040
        %5233 = vst [vmem:[%s342 + $0x330] sm:$0xff] %v4231
        %5234 = vst [vmem:[%s342 + $0x338] sm:$0xff] %v4233
        %5235 = vst [vmem:[%s342 + $0x340] sm:$0xff] %v4424
        %5236 = vst [vmem:[%s342 + $0x348] sm:$0xff] %v4426
        %5237 = vst [vmem:[%s342 + $0x350] sm:$0xff] %v4617
        %5238 = vst [vmem:[%s342 + $0x358] sm:$0xff] %v4619
        %5239 = vst [vmem:[%s342 + $0x360] sm:$0xff] %v4810
        %5240 = vst [vmem:[%s342 + $0x368] sm:$0xff] %v4812
        %5241 = vst [vmem:[%s342 + $0x370] sm:$0xff] %v5003
        %5242 = vst [vmem:[%s342 + $0x378] sm:$0xff] %v5005
        %5243 = vst [vmem:[%s342 + $0x380] sm:$0xff] %v3656
        %5244 = vst [vmem:[%s342 + $0x388] sm:$0xff] %v3658
        %5245 = vst [vmem:[%s342 + $0x390] sm:$0xff] %v3849
        %5246 = vst [vmem:[%s342 + $0x398] sm:$0xff] %v3851
        %5247 = vst [vmem:[%s342 + $0x3a0] sm:$0xff] %v4042
        %5248 = vst [vmem:[%s342 + $0x3a8] sm:$0xff] %v4044
        %5249 = vst [vmem:[%s342 + $0x3b0] sm:$0xff] %v4235
        %5250 = vst [vmem:[%s342 + $0x3b8] sm:$0xff] %v4237
        %5251 = vst [vmem:[%s342 + $0x3c0] sm:$0xff] %v4428
        %5252 = vst [vmem:[%s342 + $0x3c8] sm:$0xff] %v4430
        %5253 = vst [vmem:[%s342 + $0x3d0] sm:$0xff] %v4621
        %5254 = vst [vmem:[%s342 + $0x3d8] sm:$0xff] %v4623
        %5255 = vst [vmem:[%s342 + $0x3e0] sm:$0xff] %v4814
        %5256 = vst [vmem:[%s342 + $0x3e8] sm:$0xff] %v4816
        %5257 = vst [vmem:[%s342 + $0x3f0] sm:$0xff] %v5007
        %5258 = vst [vmem:[%s342 + $0x3f8] sm:$0xff] %v5009
        %5259 = vst [vmem:[%s342 + $0x400] sm:$0xff] %v3662
        %5260 = vst [vmem:[%s342 + $0x408] sm:$0xff] %v3664
        %5261 = vst [vmem:[%s342 + $0x410] sm:$0xff] %v3855
        %5262 = vst [vmem:[%s342 + $0x418] sm:$0xff] %v3857
        %5263 = vst [vmem:[%s342 + $0x420] sm:$0xff] %v4048
        %5264 = vst [vmem:[%s342 + $0x428] sm:$0xff] %v4050
        %5265 = vst [vmem:[%s342 + $0x430] sm:$0xff] %v4241
        %5266 = vst [vmem:[%s342 + $0x438] sm:$0xff] %v4243
        %5267 = vst [vmem:[%s342 + $0x440] sm:$0xff] %v4434
        %5268 = vst [vmem:[%s342 + $0x448] sm:$0xff] %v4436
        %5269 = vst [vmem:[%s342 + $0x450] sm:$0xff] %v4627
        %5270 = vst [vmem:[%s342 + $0x458] sm:$0xff] %v4629
        %5271 = vst [vmem:[%s342 + $0x460] sm:$0xff] %v4820
        %5272 = vst [vmem:[%s342 + $0x468] sm:$0xff] %v4822
        %5273 = vst [vmem:[%s342 + $0x470] sm:$0xff] %v5013
        %5274 = vst [vmem:[%s342 + $0x478] sm:$0xff] %v5015
        %5275 = vst [vmem:[%s342 + $0x480] sm:$0xff] %v3666
        %5276 = vst [vmem:[%s342 + $0x488] sm:$0xff] %v3668
        %5277 = vst [vmem:[%s342 + $0x490] sm:$0xff] %v3859
        %5278 = vst [vmem:[%s342 + $0x498] sm:$0xff] %v3861
        %5279 = vst [vmem:[%s342 + $0x4a0] sm:$0xff] %v4052
        %5280 = vst [vmem:[%s342 + $0x4a8] sm:$0xff] %v4054
        %5281 = vst [vmem:[%s342 + $0x4b0] sm:$0xff] %v4245
        %5282 = vst [vmem:[%s342 + $0x4b8] sm:$0xff] %v4247
        %5283 = vst [vmem:[%s342 + $0x4c0] sm:$0xff] %v4438
        %5284 = vst [vmem:[%s342 + $0x4c8] sm:$0xff] %v4440
        %5285 = vst [vmem:[%s342 + $0x4d0] sm:$0xff] %v4631
        %5286 = vst [vmem:[%s342 + $0x4d8] sm:$0xff] %v4633
        %5287 = vst [vmem:[%s342 + $0x4e0] sm:$0xff] %v4824
        %5288 = vst [vmem:[%s342 + $0x4e8] sm:$0xff] %v4826
        %5289 = vst [vmem:[%s342 + $0x4f0] sm:$0xff] %v5017
        %5290 = vst [vmem:[%s342 + $0x4f8] sm:$0xff] %v5019
        %5291 = vst [vmem:[%s342 + $0x500] sm:$0xff] %v3672
        %5292 = vst [vmem:[%s342 + $0x508] sm:$0xff] %v3674
        %5293 = vst [vmem:[%s342 + $0x510] sm:$0xff] %v3865
        %5294 = vst [vmem:[%s342 + $0x518] sm:$0xff] %v3867
        %5295 = vst [vmem:[%s342 + $0x520] sm:$0xff] %v4058
        %5296 = vst [vmem:[%s342 + $0x528] sm:$0xff] %v4060
        %5297 = vst [vmem:[%s342 + $0x530] sm:$0xff] %v4251
        %5298 = vst [vmem:[%s342 + $0x538] sm:$0xff] %v4253
        %5299 = vst [vmem:[%s342 + $0x540] sm:$0xff] %v4444
        %5300 = vst [vmem:[%s342 + $0x548] sm:$0xff] %v4446
        %5301 = vst [vmem:[%s342 + $0x550] sm:$0xff] %v4637
        %5302 = vst [vmem:[%s342 + $0x558] sm:$0xff] %v4639
        %5303 = vst [vmem:[%s342 + $0x560] sm:$0xff] %v4830
        %5304 = vst [vmem:[%s342 + $0x568] sm:$0xff] %v4832
        %5305 = vst [vmem:[%s342 + $0x570] sm:$0xff] %v5023
        %5306 = vst [vmem:[%s342 + $0x578] sm:$0xff] %v5025
        %5307 = vst [vmem:[%s342 + $0x580] sm:$0xff] %v3676
        %5308 = vst [vmem:[%s342 + $0x588] sm:$0xff] %v3678
        %5309 = vst [vmem:[%s342 + $0x590] sm:$0xff] %v3869
        %5310 = vst [vmem:[%s342 + $0x598] sm:$0xff] %v3871
        %5311 = vst [vmem:[%s342 + $0x5a0] sm:$0xff] %v4062
        %5312 = vst [vmem:[%s342 + $0x5a8] sm:$0xff] %v4064
        %5313 = vst [vmem:[%s342 + $0x5b0] sm:$0xff] %v4255
        %5314 = vst [vmem:[%s342 + $0x5b8] sm:$0xff] %v4257
        %5315 = vst [vmem:[%s342 + $0x5c0] sm:$0xff] %v4448
        %5316 = vst [vmem:[%s342 + $0x5c8] sm:$0xff] %v4450
        %5317 = vst [vmem:[%s342 + $0x5d0] sm:$0xff] %v4641
        %5318 = vst [vmem:[%s342 + $0x5d8] sm:$0xff] %v4643
        %5319 = vst [vmem:[%s342 + $0x5e0] sm:$0xff] %v4834
        %5320 = vst [vmem:[%s342 + $0x5e8] sm:$0xff] %v4836
        %5321 = vst [vmem:[%s342 + $0x5f0] sm:$0xff] %v5027
        %5322 = vst [vmem:[%s342 + $0x5f8] sm:$0xff] %v5029
        %5323 = vst [vmem:[%s342 + $0x600] sm:$0xff] %v3682
        %5324 = vst [vmem:[%s342 + $0x608] sm:$0xff] %v3684
        %5325 = vst [vmem:[%s342 + $0x610] sm:$0xff] %v3875
        %5326 = vst [vmem:[%s342 + $0x618] sm:$0xff] %v3877
        %5327 = vst [vmem:[%s342 + $0x620] sm:$0xff] %v4068
        %5328 = vst [vmem:[%s342 + $0x628] sm:$0xff] %v4070
        %5329 = vst [vmem:[%s342 + $0x630] sm:$0xff] %v4261
        %5330 = vst [vmem:[%s342 + $0x638] sm:$0xff] %v4263
        %5331 = vst [vmem:[%s342 + $0x640] sm:$0xff] %v4454
        %5332 = vst [vmem:[%s342 + $0x648] sm:$0xff] %v4456
        %5333 = vst [vmem:[%s342 + $0x650] sm:$0xff] %v4647
        %5334 = vst [vmem:[%s342 + $0x658] sm:$0xff] %v4649
        %5335 = vst [vmem:[%s342 + $0x660] sm:$0xff] %v4840
        %5336 = vst [vmem:[%s342 + $0x668] sm:$0xff] %v4842
        %5337 = vst [vmem:[%s342 + $0x670] sm:$0xff] %v5033
        %5338 = vst [vmem:[%s342 + $0x678] sm:$0xff] %v5035
        %5339 = vst [vmem:[%s342 + $0x680] sm:$0xff] %v3686
        %5340 = vst [vmem:[%s342 + $0x688] sm:$0xff] %v3688
        %5341 = vst [vmem:[%s342 + $0x690] sm:$0xff] %v3879
        %5342 = vst [vmem:[%s342 + $0x698] sm:$0xff] %v3881
        %5343 = vst [vmem:[%s342 + $0x6a0] sm:$0xff] %v4072
        %5344 = vst [vmem:[%s342 + $0x6a8] sm:$0xff] %v4074
        %5345 = vst [vmem:[%s342 + $0x6b0] sm:$0xff] %v4265
        %5346 = vst [vmem:[%s342 + $0x6b8] sm:$0xff] %v4267
        %5347 = vst [vmem:[%s342 + $0x6c0] sm:$0xff] %v4458
        %5348 = vst [vmem:[%s342 + $0x6c8] sm:$0xff] %v4460
        %5349 = vst [vmem:[%s342 + $0x6d0] sm:$0xff] %v4651
        %5350 = vst [vmem:[%s342 + $0x6d8] sm:$0xff] %v4653
        %5351 = vst [vmem:[%s342 + $0x6e0] sm:$0xff] %v4844
        %5352 = vst [vmem:[%s342 + $0x6e8] sm:$0xff] %v4846
        %5353 = vst [vmem:[%s342 + $0x6f0] sm:$0xff] %v5037
        %5354 = vst [vmem:[%s342 + $0x6f8] sm:$0xff] %v5039
        %5355 = vst [vmem:[%s342 + $0x700] sm:$0xff] %v3692
        %5356 = vst [vmem:[%s342 + $0x708] sm:$0xff] %v3694
        %5357 = vst [vmem:[%s342 + $0x710] sm:$0xff] %v3885
        %5358 = vst [vmem:[%s342 + $0x718] sm:$0xff] %v3887
        %5359 = vst [vmem:[%s342 + $0x720] sm:$0xff] %v4078
        %5360 = vst [vmem:[%s342 + $0x728] sm:$0xff] %v4080
        %5361 = vst [vmem:[%s342 + $0x730] sm:$0xff] %v4271
        %5362 = vst [vmem:[%s342 + $0x738] sm:$0xff] %v4273
        %5363 = vst [vmem:[%s342 + $0x740] sm:$0xff] %v4464
        %5364 = vst [vmem:[%s342 + $0x748] sm:$0xff] %v4466
        %5365 = vst [vmem:[%s342 + $0x750] sm:$0xff] %v4657
        %5366 = vst [vmem:[%s342 + $0x758] sm:$0xff] %v4659
        %5367 = vst [vmem:[%s342 + $0x760] sm:$0xff] %v4850
        %5368 = vst [vmem:[%s342 + $0x768] sm:$0xff] %v4852
        %5369 = vst [vmem:[%s342 + $0x770] sm:$0xff] %v5043
        %5370 = vst [vmem:[%s342 + $0x778] sm:$0xff] %v5045
        %5371 = vst [vmem:[%s342 + $0x780] sm:$0xff] %v3696
        %5372 = vst [vmem:[%s342 + $0x788] sm:$0xff] %v3698
        %5373 = vst [vmem:[%s342 + $0x790] sm:$0xff] %v3889
        %5374 = vst [vmem:[%s342 + $0x798] sm:$0xff] %v3891
        %5375 = vst [vmem:[%s342 + $0x7a0] sm:$0xff] %v4082
        %5376 = vst [vmem:[%s342 + $0x7a8] sm:$0xff] %v4084
        %5377 = vst [vmem:[%s342 + $0x7b0] sm:$0xff] %v4275
        %5378 = vst [vmem:[%s342 + $0x7b8] sm:$0xff] %v4277
        %5379 = vst [vmem:[%s342 + $0x7c0] sm:$0xff] %v4468
        %5380 = vst [vmem:[%s342 + $0x7c8] sm:$0xff] %v4470
        %5381 = vst [vmem:[%s342 + $0x7d0] sm:$0xff] %v4661
        %5382 = vst [vmem:[%s342 + $0x7d8] sm:$0xff] %v4663
        %5383 = vst [vmem:[%s342 + $0x7e0] sm:$0xff] %v4854
        %5384 = vst [vmem:[%s342 + $0x7e8] sm:$0xff] %v4856
        %5385 = vst [vmem:[%s342 + $0x7f0] sm:$0xff] %v5047
        %5386 = vst [vmem:[%s342 + $0x7f8] sm:$0xff] %v5049
        %5387 = vst [vmem:[%s342 + $0x800] sm:$0xff] %v3702
        %5388 = vst [vmem:[%s342 + $0x808] sm:$0xff] %v3704
        %5389 = vst [vmem:[%s342 + $0x810] sm:$0xff] %v3895
        %5390 = vst [vmem:[%s342 + $0x818] sm:$0xff] %v3897
        %5391 = vst [vmem:[%s342 + $0x820] sm:$0xff] %v4088
        %5392 = vst [vmem:[%s342 + $0x828] sm:$0xff] %v4090
        %5393 = vst [vmem:[%s342 + $0x830] sm:$0xff] %v4281
        %5394 = vst [vmem:[%s342 + $0x838] sm:$0xff] %v4283
        %5395 = vst [vmem:[%s342 + $0x840] sm:$0xff] %v4474
        %5396 = vst [vmem:[%s342 + $0x848] sm:$0xff] %v4476
        %5397 = vst [vmem:[%s342 + $0x850] sm:$0xff] %v4667
        %5398 = vst [vmem:[%s342 + $0x858] sm:$0xff] %v4669
        %5399 = vst [vmem:[%s342 + $0x860] sm:$0xff] %v4860
        %5400 = vst [vmem:[%s342 + $0x868] sm:$0xff] %v4862
        %5401 = vst [vmem:[%s342 + $0x870] sm:$0xff] %v5053
        %5402 = vst [vmem:[%s342 + $0x878] sm:$0xff] %v5055
        %5403 = vst [vmem:[%s342 + $0x880] sm:$0xff] %v3706
        %5404 = vst [vmem:[%s342 + $0x888] sm:$0xff] %v3708
        %5405 = vst [vmem:[%s342 + $0x890] sm:$0xff] %v3899
        %5406 = vst [vmem:[%s342 + $0x898] sm:$0xff] %v3901
        %5407 = vst [vmem:[%s342 + $0x8a0] sm:$0xff] %v4092
        %5408 = vst [vmem:[%s342 + $0x8a8] sm:$0xff] %v4094
        %5409 = vst [vmem:[%s342 + $0x8b0] sm:$0xff] %v4285
        %5410 = vst [vmem:[%s342 + $0x8b8] sm:$0xff] %v4287
        %5411 = vst [vmem:[%s342 + $0x8c0] sm:$0xff] %v4478
        %5412 = vst [vmem:[%s342 + $0x8c8] sm:$0xff] %v4480
        %5413 = vst [vmem:[%s342 + $0x8d0] sm:$0xff] %v4671
        %5414 = vst [vmem:[%s342 + $0x8d8] sm:$0xff] %v4673
        %5415 = vst [vmem:[%s342 + $0x8e0] sm:$0xff] %v4864
        %5416 = vst [vmem:[%s342 + $0x8e8] sm:$0xff] %v4866
        %5417 = vst [vmem:[%s342 + $0x8f0] sm:$0xff] %v5057
        %5418 = vst [vmem:[%s342 + $0x8f8] sm:$0xff] %v5059
        %5419 = vst [vmem:[%s342 + $0x900] sm:$0xff] %v3712
        %5420 = vst [vmem:[%s342 + $0x908] sm:$0xff] %v3714
        %5421 = vst [vmem:[%s342 + $0x910] sm:$0xff] %v3905
        %5422 = vst [vmem:[%s342 + $0x918] sm:$0xff] %v3907
        %5423 = vst [vmem:[%s342 + $0x920] sm:$0xff] %v4098
        %5424 = vst [vmem:[%s342 + $0x928] sm:$0xff] %v4100
        %5425 = vst [vmem:[%s342 + $0x930] sm:$0xff] %v4291
        %5426 = vst [vmem:[%s342 + $0x938] sm:$0xff] %v4293
        %5427 = vst [vmem:[%s342 + $0x940] sm:$0xff] %v4484
        %5428 = vst [vmem:[%s342 + $0x948] sm:$0xff] %v4486
        %5429 = vst [vmem:[%s342 + $0x950] sm:$0xff] %v4677
        %5430 = vst [vmem:[%s342 + $0x958] sm:$0xff] %v4679
        %5431 = vst [vmem:[%s342 + $0x960] sm:$0xff] %v4870
        %5432 = vst [vmem:[%s342 + $0x968] sm:$0xff] %v4872
        %5433 = vst [vmem:[%s342 + $0x970] sm:$0xff] %v5063
        %5434 = vst [vmem:[%s342 + $0x978] sm:$0xff] %v5065
        %5435 = vst [vmem:[%s342 + $0x980] sm:$0xff] %v3716
        %5436 = vst [vmem:[%s342 + $0x988] sm:$0xff] %v3718
        %5437 = vst [vmem:[%s342 + $0x990] sm:$0xff] %v3909
        %5438 = vst [vmem:[%s342 + $0x998] sm:$0xff] %v3911
        %5439 = vst [vmem:[%s342 + $0x9a0] sm:$0xff] %v4102
        %5440 = vst [vmem:[%s342 + $0x9a8] sm:$0xff] %v4104
        %5441 = vst [vmem:[%s342 + $0x9b0] sm:$0xff] %v4295
        %5442 = vst [vmem:[%s342 + $0x9b8] sm:$0xff] %v4297
        %5443 = vst [vmem:[%s342 + $0x9c0] sm:$0xff] %v4488
        %5444 = vst [vmem:[%s342 + $0x9c8] sm:$0xff] %v4490
        %5445 = vst [vmem:[%s342 + $0x9d0] sm:$0xff] %v4681
        %5446 = vst [vmem:[%s342 + $0x9d8] sm:$0xff] %v4683
        %5447 = vst [vmem:[%s342 + $0x9e0] sm:$0xff] %v4874
        %5448 = vst [vmem:[%s342 + $0x9e8] sm:$0xff] %v4876
        %5449 = vst [vmem:[%s342 + $0x9f0] sm:$0xff] %v5067
        %5450 = vst [vmem:[%s342 + $0x9f8] sm:$0xff] %v5069
        %5451 = vst [vmem:[%s342 + $0xa00] sm:$0xff] %v3722
        %5452 = vst [vmem:[%s342 + $0xa08] sm:$0xff] %v3724
        %5453 = vst [vmem:[%s342 + $0xa10] sm:$0xff] %v3915
        %5454 = vst [vmem:[%s342 + $0xa18] sm:$0xff] %v3917
        %5455 = vst [vmem:[%s342 + $0xa20] sm:$0xff] %v4108
        %5456 = vst [vmem:[%s342 + $0xa28] sm:$0xff] %v4110
        %5457 = vst [vmem:[%s342 + $0xa30] sm:$0xff] %v4301
        %5458 = vst [vmem:[%s342 + $0xa38] sm:$0xff] %v4303
        %5459 = vst [vmem:[%s342 + $0xa40] sm:$0xff] %v4494
        %5460 = vst [vmem:[%s342 + $0xa48] sm:$0xff] %v4496
        %5461 = vst [vmem:[%s342 + $0xa50] sm:$0xff] %v4687
        %5462 = vst [vmem:[%s342 + $0xa58] sm:$0xff] %v4689
        %5463 = vst [vmem:[%s342 + $0xa60] sm:$0xff] %v4880
        %5464 = vst [vmem:[%s342 + $0xa68] sm:$0xff] %v4882
        %5465 = vst [vmem:[%s342 + $0xa70] sm:$0xff] %v5073
        %5466 = vst [vmem:[%s342 + $0xa78] sm:$0xff] %v5075
        %5467 = vst [vmem:[%s342 + $0xa80] sm:$0xff] %v3726
        %5468 = vst [vmem:[%s342 + $0xa88] sm:$0xff] %v3728
        %5469 = vst [vmem:[%s342 + $0xa90] sm:$0xff] %v3919
        %5470 = vst [vmem:[%s342 + $0xa98] sm:$0xff] %v3921
        %5471 = vst [vmem:[%s342 + $0xaa0] sm:$0xff] %v4112
        %5472 = vst [vmem:[%s342 + $0xaa8] sm:$0xff] %v4114
        %5473 = vst [vmem:[%s342 + $0xab0] sm:$0xff] %v4305
        %5474 = vst [vmem:[%s342 + $0xab8] sm:$0xff] %v4307
        %5475 = vst [vmem:[%s342 + $0xac0] sm:$0xff] %v4498
        %5476 = vst [vmem:[%s342 + $0xac8] sm:$0xff] %v4500
        %5477 = vst [vmem:[%s342 + $0xad0] sm:$0xff] %v4691
        %5478 = vst [vmem:[%s342 + $0xad8] sm:$0xff] %v4693
        %5479 = vst [vmem:[%s342 + $0xae0] sm:$0xff] %v4884
        %5480 = vst [vmem:[%s342 + $0xae8] sm:$0xff] %v4886
        %5481 = vst [vmem:[%s342 + $0xaf0] sm:$0xff] %v5077
        %5482 = vst [vmem:[%s342 + $0xaf8] sm:$0xff] %v5079
        %5483 = vst [vmem:[%s342 + $0xb00] sm:$0xff] %v3732
        %5484 = vst [vmem:[%s342 + $0xb08] sm:$0xff] %v3734
        %5485 = vst [vmem:[%s342 + $0xb10] sm:$0xff] %v3925
        %5486 = vst [vmem:[%s342 + $0xb18] sm:$0xff] %v3927
        %5487 = vst [vmem:[%s342 + $0xb20] sm:$0xff] %v4118
        %5488 = vst [vmem:[%s342 + $0xb28] sm:$0xff] %v4120
        %5489 = vst [vmem:[%s342 + $0xb30] sm:$0xff] %v4311
        %5490 = vst [vmem:[%s342 + $0xb38] sm:$0xff] %v4313
        %5491 = vst [vmem:[%s342 + $0xb40] sm:$0xff] %v4504
        %5492 = vst [vmem:[%s342 + $0xb48] sm:$0xff] %v4506
        %5493 = vst [vmem:[%s342 + $0xb50] sm:$0xff] %v4697
        %5494 = vst [vmem:[%s342 + $0xb58] sm:$0xff] %v4699
        %5495 = vst [vmem:[%s342 + $0xb60] sm:$0xff] %v4890
        %5496 = vst [vmem:[%s342 + $0xb68] sm:$0xff] %v4892
        %5497 = vst [vmem:[%s342 + $0xb70] sm:$0xff] %v5083
        %5498 = vst [vmem:[%s342 + $0xb78] sm:$0xff] %v5085
        %5499 = vst [vmem:[%s342 + $0xb80] sm:$0xff] %v3736
        %5500 = vst [vmem:[%s342 + $0xb88] sm:$0xff] %v3738
        %5501 = vst [vmem:[%s342 + $0xb90] sm:$0xff] %v3929
        %5502 = vst [vmem:[%s342 + $0xb98] sm:$0xff] %v3931
        %5503 = vst [vmem:[%s342 + $0xba0] sm:$0xff] %v4122
        %5504 = vst [vmem:[%s342 + $0xba8] sm:$0xff] %v4124
        %5505 = vst [vmem:[%s342 + $0xbb0] sm:$0xff] %v4315
        %5506 = vst [vmem:[%s342 + $0xbb8] sm:$0xff] %v4317
        %5507 = vst [vmem:[%s342 + $0xbc0] sm:$0xff] %v4508
        %5508 = vst [vmem:[%s342 + $0xbc8] sm:$0xff] %v4510
        %5509 = vst [vmem:[%s342 + $0xbd0] sm:$0xff] %v4701
        %5510 = vst [vmem:[%s342 + $0xbd8] sm:$0xff] %v4703
        %5511 = vst [vmem:[%s342 + $0xbe0] sm:$0xff] %v4894
        %5512 = vst [vmem:[%s342 + $0xbe8] sm:$0xff] %v4896
        %5513 = vst [vmem:[%s342 + $0xbf0] sm:$0xff] %v5087
        %5514 = vst [vmem:[%s342 + $0xbf8] sm:$0xff] %v5089
        %5515 = vst [vmem:[%s342 + $0xc00] sm:$0xff] %v3742
        %5516 = vst [vmem:[%s342 + $0xc08] sm:$0xff] %v3744
        %5517 = vst [vmem:[%s342 + $0xc10] sm:$0xff] %v3935
        %5518 = vst [vmem:[%s342 + $0xc18] sm:$0xff] %v3937
        %5519 = vst [vmem:[%s342 + $0xc20] sm:$0xff] %v4128
        %5520 = vst [vmem:[%s342 + $0xc28] sm:$0xff] %v4130
        %5521 = vst [vmem:[%s342 + $0xc30] sm:$0xff] %v4321
        %5522 = vst [vmem:[%s342 + $0xc38] sm:$0xff] %v4323
        %5523 = vst [vmem:[%s342 + $0xc40] sm:$0xff] %v4514
        %5524 = vst [vmem:[%s342 + $0xc48] sm:$0xff] %v4516
        %5525 = vst [vmem:[%s342 + $0xc50] sm:$0xff] %v4707
        %5526 = vst [vmem:[%s342 + $0xc58] sm:$0xff] %v4709
        %5527 = vst [vmem:[%s342 + $0xc60] sm:$0xff] %v4900
        %5528 = vst [vmem:[%s342 + $0xc68] sm:$0xff] %v4902
        %5529 = vst [vmem:[%s342 + $0xc70] sm:$0xff] %v5093
        %5530 = vst [vmem:[%s342 + $0xc78] sm:$0xff] %v5095
        %5531 = vst [vmem:[%s342 + $0xc80] sm:$0xff] %v3746
        %5532 = vst [vmem:[%s342 + $0xc88] sm:$0xff] %v3748
        %5533 = vst [vmem:[%s342 + $0xc90] sm:$0xff] %v3939
        %5534 = vst [vmem:[%s342 + $0xc98] sm:$0xff] %v3941
        %5535 = vst [vmem:[%s342 + $0xca0] sm:$0xff] %v4132
        %5536 = vst [vmem:[%s342 + $0xca8] sm:$0xff] %v4134
        %5537 = vst [vmem:[%s342 + $0xcb0] sm:$0xff] %v4325
        %5538 = vst [vmem:[%s342 + $0xcb8] sm:$0xff] %v4327
        %5539 = vst [vmem:[%s342 + $0xcc0] sm:$0xff] %v4518
        %5540 = vst [vmem:[%s342 + $0xcc8] sm:$0xff] %v4520
        %5541 = vst [vmem:[%s342 + $0xcd0] sm:$0xff] %v4711
        %5542 = vst [vmem:[%s342 + $0xcd8] sm:$0xff] %v4713
        %5543 = vst [vmem:[%s342 + $0xce0] sm:$0xff] %v4904
        %5544 = vst [vmem:[%s342 + $0xce8] sm:$0xff] %v4906
        %5545 = vst [vmem:[%s342 + $0xcf0] sm:$0xff] %v5097
        %5546 = vst [vmem:[%s342 + $0xcf8] sm:$0xff] %v5099
        %5547 = vst [vmem:[%s342 + $0xd00] sm:$0xff] %v3752
        %5548 = vst [vmem:[%s342 + $0xd08] sm:$0xff] %v3754
        %5549 = vst [vmem:[%s342 + $0xd10] sm:$0xff] %v3945
        %5550 = vst [vmem:[%s342 + $0xd18] sm:$0xff] %v3947
        %5551 = vst [vmem:[%s342 + $0xd20] sm:$0xff] %v4138
        %5552 = vst [vmem:[%s342 + $0xd28] sm:$0xff] %v4140
        %5553 = vst [vmem:[%s342 + $0xd30] sm:$0xff] %v4331
        %5554 = vst [vmem:[%s342 + $0xd38] sm:$0xff] %v4333
        %5555 = vst [vmem:[%s342 + $0xd40] sm:$0xff] %v4524
        %5556 = vst [vmem:[%s342 + $0xd48] sm:$0xff] %v4526
        %5557 = vst [vmem:[%s342 + $0xd50] sm:$0xff] %v4717
        %5558 = vst [vmem:[%s342 + $0xd58] sm:$0xff] %v4719
        %5559 = vst [vmem:[%s342 + $0xd60] sm:$0xff] %v4910
        %5560 = vst [vmem:[%s342 + $0xd68] sm:$0xff] %v4912
        %5561 = vst [vmem:[%s342 + $0xd70] sm:$0xff] %v5103
        %5562 = vst [vmem:[%s342 + $0xd78] sm:$0xff] %v5105
        %5563 = vst [vmem:[%s342 + $0xd80] sm:$0xff] %v3756
        %5564 = vst [vmem:[%s342 + $0xd88] sm:$0xff] %v3758
        %5565 = vst [vmem:[%s342 + $0xd90] sm:$0xff] %v3949
        %5566 = vst [vmem:[%s342 + $0xd98] sm:$0xff] %v3951
        %5567 = vst [vmem:[%s342 + $0xda0] sm:$0xff] %v4142
        %5568 = vst [vmem:[%s342 + $0xda8] sm:$0xff] %v4144
        %5569 = vst [vmem:[%s342 + $0xdb0] sm:$0xff] %v4335
        %5570 = vst [vmem:[%s342 + $0xdb8] sm:$0xff] %v4337
        %5571 = vst [vmem:[%s342 + $0xdc0] sm:$0xff] %v4528
        %5572 = vst [vmem:[%s342 + $0xdc8] sm:$0xff] %v4530
        %5573 = vst [vmem:[%s342 + $0xdd0] sm:$0xff] %v4721
        %5574 = vst [vmem:[%s342 + $0xdd8] sm:$0xff] %v4723
        %5575 = vst [vmem:[%s342 + $0xde0] sm:$0xff] %v4914
        %5576 = vst [vmem:[%s342 + $0xde8] sm:$0xff] %v4916
        %5577 = vst [vmem:[%s342 + $0xdf0] sm:$0xff] %v5107
        %5578 = vst [vmem:[%s342 + $0xdf8] sm:$0xff] %v5109
        %5579 = vst [vmem:[%s342 + $0xe00] sm:$0xff] %v3762
        %5580 = vst [vmem:[%s342 + $0xe08] sm:$0xff] %v3764
        %5581 = vst [vmem:[%s342 + $0xe10] sm:$0xff] %v3955
        %5582 = vst [vmem:[%s342 + $0xe18] sm:$0xff] %v3957
        %5583 = vst [vmem:[%s342 + $0xe20] sm:$0xff] %v4148
        %5584 = vst [vmem:[%s342 + $0xe28] sm:$0xff] %v4150
        %5585 = vst [vmem:[%s342 + $0xe30] sm:$0xff] %v4341
        %5586 = vst [vmem:[%s342 + $0xe38] sm:$0xff] %v4343
        %5587 = vst [vmem:[%s342 + $0xe40] sm:$0xff] %v4534
        %5588 = vst [vmem:[%s342 + $0xe48] sm:$0xff] %v4536
        %5589 = vst [vmem:[%s342 + $0xe50] sm:$0xff] %v4727
        %5590 = vst [vmem:[%s342 + $0xe58] sm:$0xff] %v4729
        %5591 = vst [vmem:[%s342 + $0xe60] sm:$0xff] %v4920
        %5592 = vst [vmem:[%s342 + $0xe68] sm:$0xff] %v4922
        %5593 = vst [vmem:[%s342 + $0xe70] sm:$0xff] %v5113
        %5594 = vst [vmem:[%s342 + $0xe78] sm:$0xff] %v5115
        %5595 = vst [vmem:[%s342 + $0xe80] sm:$0xff] %v3766
        %5596 = vst [vmem:[%s342 + $0xe88] sm:$0xff] %v3768
        %5597 = vst [vmem:[%s342 + $0xe90] sm:$0xff] %v3959
        %5598 = vst [vmem:[%s342 + $0xe98] sm:$0xff] %v3961
        %5599 = vst [vmem:[%s342 + $0xea0] sm:$0xff] %v4152
        %5600 = vst [vmem:[%s342 + $0xea8] sm:$0xff] %v4154
        %5601 = vst [vmem:[%s342 + $0xeb0] sm:$0xff] %v4345
        %5602 = vst [vmem:[%s342 + $0xeb8] sm:$0xff] %v4347
        %5603 = vst [vmem:[%s342 + $0xec0] sm:$0xff] %v4538
        %5604 = vst [vmem:[%s342 + $0xec8] sm:$0xff] %v4540
        %5605 = vst [vmem:[%s342 + $0xed0] sm:$0xff] %v4731
        %5606 = vst [vmem:[%s342 + $0xed8] sm:$0xff] %v4733
        %5607 = vst [vmem:[%s342 + $0xee0] sm:$0xff] %v4924
        %5608 = vst [vmem:[%s342 + $0xee8] sm:$0xff] %v4926
        %5609 = vst [vmem:[%s342 + $0xef0] sm:$0xff] %v5117
        %5610 = vst [vmem:[%s342 + $0xef8] sm:$0xff] %v5119
        %5611 = vst [vmem:[%s342 + $0xf00] sm:$0xff] %v3772
        %5612 = vst [vmem:[%s342 + $0xf08] sm:$0xff] %v3774
        %5613 = vst [vmem:[%s342 + $0xf10] sm:$0xff] %v3965
        %5614 = vst [vmem:[%s342 + $0xf18] sm:$0xff] %v3967
        %5615 = vst [vmem:[%s342 + $0xf20] sm:$0xff] %v4158
        %5616 = vst [vmem:[%s342 + $0xf28] sm:$0xff] %v4160
        %5617 = vst [vmem:[%s342 + $0xf30] sm:$0xff] %v4351
        %5618 = vst [vmem:[%s342 + $0xf38] sm:$0xff] %v4353
        %5619 = vst [vmem:[%s342 + $0xf40] sm:$0xff] %v4544
        %5620 = vst [vmem:[%s342 + $0xf48] sm:$0xff] %v4546
        %5621 = vst [vmem:[%s342 + $0xf50] sm:$0xff] %v4737
        %5622 = vst [vmem:[%s342 + $0xf58] sm:$0xff] %v4739
        %5623 = vst [vmem:[%s342 + $0xf60] sm:$0xff] %v4930
        %5624 = vst [vmem:[%s342 + $0xf68] sm:$0xff] %v4932
        %5625 = vst [vmem:[%s342 + $0xf70] sm:$0xff] %v5123
        %5626 = vst [vmem:[%s342 + $0xf78] sm:$0xff] %v5125
        %5627 = vst [vmem:[%s342 + $0xf80] sm:$0xff] %v3776
        %5628 = vst [vmem:[%s342 + $0xf88] sm:$0xff] %v3778
        %5629 = vst [vmem:[%s342 + $0xf90] sm:$0xff] %v3969
        %5630 = vst [vmem:[%s342 + $0xf98] sm:$0xff] %v3971
        %5631 = vst [vmem:[%s342 + $0xfa0] sm:$0xff] %v4162
        %5632 = vst [vmem:[%s342 + $0xfa8] sm:$0xff] %v4164
        %5633 = vst [vmem:[%s342 + $0xfb0] sm:$0xff] %v4355
        %5634 = vst [vmem:[%s342 + $0xfb8] sm:$0xff] %v4357
        %5635 = vst [vmem:[%s342 + $0xfc0] sm:$0xff] %v4548
        %5636 = vst [vmem:[%s342 + $0xfc8] sm:$0xff] %v4550
        %5637 = vst [vmem:[%s342 + $0xfd0] sm:$0xff] %v4741
        %5638 = vst [vmem:[%s342 + $0xfd8] sm:$0xff] %v4743
        %5639 = vst [vmem:[%s342 + $0xfe0] sm:$0xff] %v4934
        %5640 = vst [vmem:[%s342 + $0xfe8] sm:$0xff] %v4936
        %5641 = vst [vmem:[%s342 + $0xff0] sm:$0xff] %v5127
        %5642 = vst [vmem:[%s342 + $0xff8] sm:$0xff] %v5129
        %s5643 = sand.u32 %s166, 1
        %s5644 = scalar_lea.sflag [#allocation5], %s5643
        %s5645 = sand.u32 %s166, 1
        %s5646 = smul.addr %s5645, 4096
        %s5647 = scalar_lea.vmem [#allocation12], %s5646
        // Predicated region
        $region65: #{tpu_custom_call.1} parent=39 // pred_check
          %p5648 = pneg %p176
        $region66: #{tpu_custom_call.1} parent=39 // pred_check_branch
          %5650 = sbr.rel (%p5648) target = $region68
        $region67: #{tpu_custom_call.1} parent=39 // pred_region
          %s5651 = smul.u32 32, %s28
          %s5652 = smul.u32 16, %s29
          %s5654 = ssub.s32 65536, 65536
          %5655 = vsyncadd %s5644, %s5654
          %s5656 = smul.addr %s5651, 32
          %s5657 = sadd.s32 %s5652, %s5656
          %s5658 = smul.addr %s5657, 128
          %s5659 = scalar_lea.hbm %s5, %s5658
          %s5660 = sshll.u32 %s5647, 4
          %s5661 = int_to_ptr.vmem [resolvable:$true] %s5660
          %5666 = dma.vmem_to_hbm [thread:$0]  %s5661, 65536, %s5659, %s5644, 2048, 4096, 128
        $region68: #{tpu_custom_call.1} parent=39 // pred_fallthru
          _
      $region40: #{tpu_custom_call.1} parent=5 // pred_fallthru
        _
      %p5667 = scmp.le.s32.totalorder 2, %s19
      // Predicated region
      $region69: #{tpu_custom_call.1} parent=5 // pred_check
        %p5668 = pneg %p5667
      $region70: #{tpu_custom_call.1} parent=5 // pred_check_branch
        %5670 = sbr.rel (%p5668) target = $region72
      $region71: #{tpu_custom_call.1} parent=5 // pred_region
        %s5671 = ssub.s32 %s19, 2
        // Predicated region
        $region73: #{tpu_custom_call.1} parent=71 // pred_check
          %p5672 = pneg %p182
        $region74: #{tpu_custom_call.1} parent=71 // pred_check_branch
          %5674 = sbr.rel (%p5672) target = $region76
        $region75: #{tpu_custom_call.1} parent=71 // pred_region
          %s5675 = sand.u32 %s167, 1
          %s5676 = scalar_lea.sflag [#allocation5], %s5675
          %s5677 = sand.u32 %s167, 1
          %s5678 = smul.addr %s5677, 4096
          %s5679 = scalar_lea.vmem [#allocation12], %s5678
          %5680 = dma.done %s5676, 65536
        $region76: #{tpu_custom_call.1} parent=71 // pred_fallthru
          _
      $region72: #{tpu_custom_call.1} parent=5 // pred_fallthru
        _
    $region6: #{tpu_custom_call.1} parent=1 // loop_footer
      %s23 = sadd.s32 1, %s19
    $region7: #{tpu_custom_call.1} parent=1 // loop_footer_branch
      %18 = sbr.rel target = $region3
    $region8: #{tpu_custom_call.1} parent=1 // loop_exit
      _
    %5681 = vsyncpa [#allocation4], 1
    %s5682 = scalar_lea.sflag [#allocation4], 1
    %5683 = vsyncpa %s5682, 1
    %5684 = vsyncpa [#allocation7], 1
    %5685 = vsyncpa [#allocation10], 1
    %s5686 = scalar_lea.sflag [#allocation10], 1
    %5687 = vsyncpa %s5686, 1
    %5688 = vsyncpa [#allocation5], 1
    %s5689 = scalar_lea.sflag [#allocation5], 1
    %5690 = vsyncpa %s5689, 1

</llo_original>
